<compile_context>
chip_gen: v5e
topology: v5e:2x2
jax: 0.10.0
libtpu: 0.0.40
codegen_flags: <defaults>
</compile_context>

<pallas_src>
import functools

import jax
import jax.numpy as jnp
from jax.experimental import pallas as pl
from jax.experimental.pallas import tpu as pltpu

LEAKY_SLOPE = 0.1


def _leaky(x):
    return jnp.where(x > 0, x, LEAKY_SLOPE * x)


def _round_up(a, b):
    return (a + b - 1) // b * b


def _m_tiles(m, tm_max=512):
    """M-tile (rows) and padded M for the flattened 1x1-conv matmuls."""
    if m >= tm_max:
        return _round_up(m, tm_max), tm_max
    mp = _round_up(m, 8)
    return mp, mp


# ---------------------------------------------------------------------------
# Kernel A: fused cv1 + cv2 (two 1x1 convs sharing the same x tile)
# ---------------------------------------------------------------------------
def cv12_kernel(x_ref, w1_ref, s1_ref, b1_ref, w2_ref, s2_ref, b2_ref,
                o1_ref, o2_ref):
    xb = x_ref[...].astype(jnp.bfloat16)
    y1 = jnp.dot(xb, w1_ref[...], preferred_element_type=jnp.float32)
    o1_ref[...] = _leaky(y1 * s1_ref[...] + b1_ref[...]).astype(o1_ref.dtype)
    y2 = jnp.dot(xb, w2_ref[...], preferred_element_type=jnp.float32)
    o2_ref[...] = _leaky(y2 * s2_ref[...] + b2_ref[...]).astype(o2_ref.dtype)


def cv12(x_nhwc, p1, p2):
    n, h, w, cin = x_nhwc.shape
    c_ = p1['w_bf16'].shape[1]
    m = n * h * w
    mp, tm = _m_tiles(m)
    x2 = x_nhwc.reshape(m, cin)
    if mp != m:
        x2 = jnp.pad(x2, ((0, mp - m), (0, 0)))
    y1, y2 = pl.pallas_call(
        cv12_kernel,
        out_shape=(jax.ShapeDtypeStruct((mp, c_), jnp.bfloat16),
                   jax.ShapeDtypeStruct((mp, c_), jnp.bfloat16)),
        grid=(mp // tm,),
        in_specs=[
            pl.BlockSpec((tm, cin), lambda i: (i, 0)),
            pl.BlockSpec((cin, c_), lambda i: (0, 0)),
            pl.BlockSpec((1, c_), lambda i: (0, 0)),
            pl.BlockSpec((1, c_), lambda i: (0, 0)),
            pl.BlockSpec((cin, c_), lambda i: (0, 0)),
            pl.BlockSpec((1, c_), lambda i: (0, 0)),
            pl.BlockSpec((1, c_), lambda i: (0, 0)),
        ],
        out_specs=(pl.BlockSpec((tm, c_), lambda i: (i, 0)),
                   pl.BlockSpec((tm, c_), lambda i: (i, 0))),
        compiler_params=pltpu.CompilerParams(dimension_semantics=("parallel",)),
    )(x2, p1['w_bf16'], p1['scale2d'], p1['bias2d'],
      p2['w_bf16'], p2['scale2d'], p2['bias2d'])
    return y1[:m].reshape(n, h, w, c_), y2[:m].reshape(n, h, w, c_)


# ---------------------------------------------------------------------------
# Kernel B: cv3 as a split-K 1x1 conv (no concatenated activation in HBM)
# ---------------------------------------------------------------------------
def cv3_kernel(y1_ref, y2_ref, wa_ref, wb_ref, s_ref, b_ref, o_ref):
    acc = jnp.dot(y1_ref[...], wa_ref[...], preferred_element_type=jnp.float32)
    acc = acc + jnp.dot(y2_ref[...], wb_ref[...],
                        preferred_element_type=jnp.float32)
    o_ref[...] = _leaky(acc * s_ref[...] + b_ref[...]).astype(o_ref.dtype)


def cv3_splitk(y1, y2, p3):
    n, h, w, c_ = y1.shape
    cout = p3['w_bf16'].shape[1]
    m = n * h * w
    mp, tm = _m_tiles(m)
    a = y1.reshape(m, c_)
    b = y2.reshape(m, c_)
    if mp != m:
        a = jnp.pad(a, ((0, mp - m), (0, 0)))
        b = jnp.pad(b, ((0, mp - m), (0, 0)))
    wa = p3['w_bf16'][:c_]
    wb = p3['w_bf16'][c_:]
    out = pl.pallas_call(
        cv3_kernel,
        out_shape=jax.ShapeDtypeStruct((mp, cout), jnp.float32),
        grid=(mp // tm,),
        in_specs=[
            pl.BlockSpec((tm, c_), lambda i: (i, 0)),
            pl.BlockSpec((tm, c_), lambda i: (i, 0)),
            pl.BlockSpec((c_, cout), lambda i: (0, 0)),
            pl.BlockSpec((c_, cout), lambda i: (0, 0)),
            pl.BlockSpec((1, cout), lambda i: (0, 0)),
            pl.BlockSpec((1, cout), lambda i: (0, 0)),
        ],
        out_specs=pl.BlockSpec((tm, cout), lambda i: (i, 0)),
        compiler_params=pltpu.CompilerParams(dimension_semantics=("parallel",)),
    )(a, b, wa, wb, p3['scale2d'], p3['bias2d'])
    return out[:m].reshape(n, h, w, cout)


# ---------------------------------------------------------------------------
# Kernel C: whole ResidualBlock, row-tiled with a 1-row halo.
#   h = leaky(BN(conv1x1(y2)))  -> computed on tile + halo rows (never in HBM)
#   y = BN(conv3x3(h, pad=1))   -> 3 matmuls (K = 3*C), halo of h outside the
#                                  image masked to zero (= conv2's zero pad)
#   out = leaky(y2 + y)
# ---------------------------------------------------------------------------
def res_block_kernel(top_ref, mid_ref, bot_ref, w1_ref, s1_ref, b1_ref,
                     w2_ref, s2_ref, b2_ref, o_ref, *, H, W, TH):
    c = o_ref.shape[-1]
    r = pl.program_id(1)
    mid = mid_ref[0]                                               # (TH, W, c)
    slab = jnp.concatenate([top_ref[0], mid, bot_ref[0]], axis=0)  # (TH+2, W, c)

    # conv1 (1x1) + BN + LeakyReLU on the tile and its halo rows.
    h1 = jnp.dot(slab.reshape((TH + 2) * W, c), w1_ref[...],
                 preferred_element_type=jnp.float32)
    h1 = _leaky(h1 * s1_ref[...] + b1_ref[...]).reshape(TH + 2, W, c)

    # conv2's zero padding applies to h (not y2): zero any halo row that lies
    # outside the image, and add explicit zero columns left/right.
    grow = jax.lax.broadcasted_iota(jnp.int32, (TH + 2, W, c), 0) + (r * TH - 1)
    h1 = jnp.where((grow >= 0) & (grow < H), h1, 0.0).astype(jnp.bfloat16)
    zcol = jnp.zeros((TH + 2, 1, c), jnp.bfloat16)
    hp = jnp.concatenate([zcol, h1, zcol], axis=1)                 # (TH+2, W+2, c)

    # conv2 (3x3, pad=1, act=False): one (TH*W, 3c) x (3c, c) matmul per ky.
    acc = jnp.zeros((TH * W, c), jnp.float32)
    for ky in range(3):
        rows = hp[ky:ky + TH]                                      # (TH, W+2, c)
        patch = jnp.concatenate(
            [rows[:, 0:W], rows[:, 1:W + 1], rows[:, 2:W + 2]], axis=-1)
        acc = acc + jnp.dot(patch.reshape(TH * W, 3 * c), w2_ref[ky],
                            preferred_element_type=jnp.float32)

    y = acc * s2_ref[...] + b2_ref[...]                            # folded BN
    y = y.reshape(TH, W, c) + mid.astype(jnp.float32)              # residual
    o_ref[0] = _leaky(y).astype(o_ref.dtype)                       # LeakyReLU(0.1)


def residual_block(y2, rbp):
    n, h, w, c = y2.shape
    th = 8 if h % 8 == 0 else h
    nrt = h // th
    zrow = jnp.zeros((n, 1, w, c), y2.dtype)
    if nrt > 1:
        top = jnp.concatenate([zrow, y2[:, th - 1:h - 1:th]], axis=1)  # (n, nrt, w, c)
        bot = jnp.concatenate([y2[:, th:h:th], zrow], axis=1)          # (n, nrt, w, c)
    else:
        top = zrow
        bot = zrow
    kernel = functools.partial(res_block_kernel, H=h, W=w, TH=th)
    p1, p2 = rbp['conv1'], rbp['conv2']
    return pl.pallas_call(
        kernel,
        out_shape=jax.ShapeDtypeStruct((n, h, w, c), jnp.bfloat16),
        grid=(n, nrt),
        in_specs=[
            pl.BlockSpec((1, 1, w, c), lambda b, r: (b, r, 0, 0)),   # top halo row
            pl.BlockSpec((1, th, w, c), lambda b, r: (b, r, 0, 0)),  # tile rows
            pl.BlockSpec((1, 1, w, c), lambda b, r: (b, r, 0, 0)),   # bottom halo row
            pl.BlockSpec((c, c), lambda b, r: (0, 0)),               # conv1 weight
            pl.BlockSpec((1, c), lambda b, r: (0, 0)),
            pl.BlockSpec((1, c), lambda b, r: (0, 0)),
            pl.BlockSpec((3, 3 * c, c), lambda b, r: (0, 0, 0)),     # conv2 weight (ky, 3c, c)
            pl.BlockSpec((1, c), lambda b, r: (0, 0)),
            pl.BlockSpec((1, c), lambda b, r: (0, 0)),
        ],
        out_specs=pl.BlockSpec((1, th, w, c), lambda b, r: (b, r, 0, 0)),
        compiler_params=pltpu.CompilerParams(
            dimension_semantics=("parallel", "parallel")),
    )(top, y2, bot, p1['w_bf16'], p1['scale2d'], p1['bias2d'],
      p2['w_bf16'], p2['scale2d'], p2['bias2d'])


# ---------------------------------------------------------------------------
# CSPStage forward (Pallas).  x_nchw: (N, c1, H, W) float32.
# ---------------------------------------------------------------------------
def csp_stage_pallas(x_nchw, params):
    x = jnp.transpose(x_nchw, (0, 2, 3, 1))          # NCHW -> NHWC
    y1, y2 = cv12(x, params['cv1'], params['cv2'])
    for rb in params['res_blocks']:
        y2 = residual_block(y2, rb)
    out = cv3_splitk(y1, y2, params['cv3'])
    return jnp.transpose(out, (0, 3, 1, 2))          # back to NCHW


# ---------------------------------------------------------------------------
# Pure-JAX f32 reference (XLA conv) used only to validate the Pallas result.
# ---------------------------------------------------------------------------
def _conv_bn_ref(x, w_oihw, scale, bias, act, pad):
    y = jax.lax.conv_general_dilated(
        x, w_oihw, window_strides=(1, 1), padding=[(pad, pad), (pad, pad)],
        dimension_numbers=('NCHW', 'OIHW', 'NCHW'))
    y = y * scale[None, :, None, None] + bias[None, :, None, None]
    return _leaky(y) if act else y


def csp_stage_ref(x, p):
    y1 = _conv_bn_ref(x, p['cv1']['w'], p['cv1']['scale'], p['cv1']['bias'], True, 0)
    y2 = _conv_bn_ref(x, p['cv2']['w'], p['cv2']['scale'], p['cv2']['bias'], True, 0)
    for rb in p['res_blocks']:
        h = _conv_bn_ref(y2, rb['conv1']['w'], rb['conv1']['scale'], rb['conv1']['bias'], True, 0)
        h = _conv_bn_ref(h, rb['conv2']['w'], rb['conv2']['scale'], rb['conv2']['bias'], False, 1)
        y2 = _leaky(y2 + h)
    y = jnp.concatenate([y1, y2], axis=1)
    return _conv_bn_ref(y, p['cv3']['w'], p['cv3']['scale'], p['cv3']['bias'], True, 0)


# ---------------------------------------------------------------------------
# Deterministic synthetic parameters (conv weight + folded eval-mode BN).
# ---------------------------------------------------------------------------
def make_conv_params(key, cin, cout, k):
    kw, kg, kb, km, kv = jax.random.split(key, 5)
    w = jax.random.normal(kw, (cout, cin, k, k), jnp.float32) * (1.0 / (cin * k * k)) ** 0.5
    gamma = 1.0 + 0.1 * jax.random.normal(kg, (cout,), jnp.float32)
    beta = 0.1 * jax.random.normal(kb, (cout,), jnp.float32)
    mean = 0.1 * jax.random.normal(km, (cout,), jnp.float32)
    var = 0.5 + jnp.abs(jax.random.normal(kv, (cout,), jnp.float32))
    eps = 1e-5
    scale = gamma / jnp.sqrt(var + eps)
    bias = beta - mean * scale
    p = {'w': w, 'scale': scale, 'bias': bias,
         'scale2d': scale.reshape(1, cout), 'bias2d': bias.reshape(1, cout)}
    if k == 1:
        p['w_bf16'] = w[:, :, 0, 0].T.astype(jnp.bfloat16)             # (cin, cout)
    else:
        # (cout, cin, ky, kx) -> (ky, kx*cin, cout): dx taps folded into K.
        p['w_bf16'] = (jnp.transpose(w, (2, 3, 1, 0))
                       .reshape(k, k * cin, cout).astype(jnp.bfloat16))
    return p


def make_csp_params(key, c1, n):
    c_ = c1 // 2
    keys = jax.random.split(key, 3 + 2 * n)
    params = {
        'cv1': make_conv_params(keys[0], c1, c_, 1),
        'cv2': make_conv_params(keys[1], c1, c_, 1),
        'cv3': make_conv_params(keys[2], 2 * c_, c1, 1),
        'res_blocks': [],
    }
    for i in range(n):
        params['res_blocks'].append({
            'conv1': make_conv_params(keys[3 + 2 * i], c_, c_, 1),
            'conv2': make_conv_params(keys[4 + 2 * i], c_, c_, 3),
        })
    return params


if __name__ == "__main__":
    key = jax.random.PRNGKey(0)
    c1, n_blocks, N, H, W = 8, 2, 2, 16, 16
    k_x, k_p = jax.random.split(key)
    x = jax.random.normal(k_x, (N, c1, H, W), jnp.float32)
    params = make_csp_params(k_p, c1, n_blocks)

    out = jax.block_until_ready(jax.jit(csp_stage_pallas)(x, params))
    ref = csp_stage_ref(x, params)

    assert out.shape == (N, c1, H, W), out.shape
    # bf16 MXU operands (f32 accumulation/epilogue): mixed abs/rel tolerance.
    tol = 6e-2
    ok = bool(jnp.all(jnp.abs(out - ref) <= tol + tol * jnp.abs(ref)))
    assert ok, f"max abs error {float(jnp.max(jnp.abs(out - ref)))}"
    print("KERNEL_OK")
</pallas_src>

<mosaic_0001>
module attributes {stable_mosaic.version = 11 : i64} {
  func.func @cv12_kernel(%arg0: i32, %arg1: memref<512x8xf32, #tpu.memory_space<vmem>>, %arg2: memref<8x4xbf16, #tpu.memory_space<vmem>>, %arg3: memref<1x4xf32, #tpu.memory_space<vmem>>, %arg4: memref<1x4xf32, #tpu.memory_space<vmem>>, %arg5: memref<8x4xbf16, #tpu.memory_space<vmem>>, %arg6: memref<1x4xf32, #tpu.memory_space<vmem>>, %arg7: memref<1x4xf32, #tpu.memory_space<vmem>>, %arg8: memref<512x4xbf16, #tpu.memory_space<vmem>>, %arg9: memref<512x4xbf16, #tpu.memory_space<vmem>>) attributes {dimension_semantics = [#tpu.dimension_semantics<parallel>], iteration_bounds = array<i64: 1>, scalar_prefetch = 0 : i64, scratch_operands = 0 : i64, tpu.core_type = #tpu.core_type<tc>, window_params = [{transform_indices = @transform_0, window_bounds = array<i64: 512, 8>}, {pipeline_mode = #tpu.pipeline_mode<synchronous>, transform_indices = @transform_1, window_bounds = array<i64: 8, 4>}, {pipeline_mode = #tpu.pipeline_mode<synchronous>, transform_indices = @transform_2, window_bounds = array<i64: 1, 4>}, {pipeline_mode = #tpu.pipeline_mode<synchronous>, transform_indices = @transform_3, window_bounds = array<i64: 1, 4>}, {pipeline_mode = #tpu.pipeline_mode<synchronous>, transform_indices = @transform_4, window_bounds = array<i64: 8, 4>}, {pipeline_mode = #tpu.pipeline_mode<synchronous>, transform_indices = @transform_5, window_bounds = array<i64: 1, 4>}, {pipeline_mode = #tpu.pipeline_mode<synchronous>, transform_indices = @transform_6, window_bounds = array<i64: 1, 4>}, {transform_indices = @transform_7, window_bounds = array<i64: 512, 4>}, {transform_indices = @transform_8, window_bounds = array<i64: 512, 4>}]} {
    %c0 = arith.constant 0 : index
    %c0_0 = arith.constant 0 : index
    %0 = vector.load %arg1[%c0, %c0_0] : memref<512x8xf32, #tpu.memory_space<vmem>>, vector<512x8xf32>
    %1 = arith.truncf %0 : vector<512x8xf32> to vector<512x8xbf16>
    %c0_1 = arith.constant 0 : index
    %c0_2 = arith.constant 0 : index
    %2 = vector.load %arg2[%c0_1, %c0_2] : memref<8x4xbf16, #tpu.memory_space<vmem>>, vector<8x4xbf16>
    %cst = arith.constant dense<0.000000e+00> : vector<512x4xf32>
    %3 = tpu.matmul %1, %2, %cst {dimension_numbers = #tpu.dot_dimension_numbers<[1], [0], [0], [1], [0, 0, 1, 1], [], []>} : vector<512x8xbf16>, vector<8x4xbf16>, vector<512x4xf32> -> vector<512x4xf32>
    %c0_3 = arith.constant 0 : index
    %c0_4 = arith.constant 0 : index
    %4 = vector.load %arg3[%c0_3, %c0_4] : memref<1x4xf32, #tpu.memory_space<vmem>>, vector<1x4xf32>
    %5 = vector.broadcast %4 : vector<1x4xf32> to vector<512x4xf32>
    %6 = arith.mulf %3, %5 : vector<512x4xf32>
    %c0_5 = arith.constant 0 : index
    %c0_6 = arith.constant 0 : index
    %7 = vector.load %arg4[%c0_5, %c0_6] : memref<1x4xf32, #tpu.memory_space<vmem>>, vector<1x4xf32>
    %8 = vector.broadcast %7 : vector<1x4xf32> to vector<512x4xf32>
    %9 = arith.addf %6, %8 : vector<512x4xf32>
    %cst_7 = arith.constant 0.000000e+00 : f32
    %10 = vector.broadcast %cst_7 : f32 to vector<512x4xf32>
    %11 = arith.cmpf ogt, %9, %10 : vector<512x4xf32>
    %cst_8 = arith.constant 1.000000e-01 : f32
    %12 = vector.broadcast %cst_8 : f32 to vector<512x4xf32>
    %13 = arith.mulf %12, %9 : vector<512x4xf32>
    %14 = arith.select %11, %9, %13 : vector<512x4xi1>, vector<512x4xf32>
    %15 = arith.truncf %14 : vector<512x4xf32> to vector<512x4xbf16>
    %c0_9 = arith.constant 0 : index
    %c0_10 = arith.constant 0 : index
    %16 = vector.load %arg8[%c0_9, %c0_10] : memref<512x4xbf16, #tpu.memory_space<vmem>>, vector<512x4xbf16>
    tpu.vector_store %arg8[%c0_9, %c0_10], %15 {strides = array<i32>} : memref<512x4xbf16, #tpu.memory_space<vmem>>, vector<512x4xbf16>,
    %c0_11 = arith.constant 0 : index
    %c0_12 = arith.constant 0 : index
    %17 = vector.load %arg5[%c0_11, %c0_12] : memref<8x4xbf16, #tpu.memory_space<vmem>>, vector<8x4xbf16>
    %cst_13 = arith.constant dense<0.000000e+00> : vector<512x4xf32>
    %18 = tpu.matmul %1, %17, %cst_13 {dimension_numbers = #tpu.dot_dimension_numbers<[1], [0], [0], [1], [0, 0, 1, 1], [], []>} : vector<512x8xbf16>, vector<8x4xbf16>, vector<512x4xf32> -> vector<512x4xf32>
    %c0_14 = arith.constant 0 : index
    %c0_15 = arith.constant 0 : index
    %19 = vector.load %arg6[%c0_14, %c0_15] : memref<1x4xf32, #tpu.memory_space<vmem>>, vector<1x4xf32>
    %20 = vector.broadcast %19 : vector<1x4xf32> to vector<512x4xf32>
    %21 = arith.mulf %18, %20 : vector<512x4xf32>
    %c0_16 = arith.constant 0 : index
    %c0_17 = arith.constant 0 : index
    %22 = vector.load %arg7[%c0_16, %c0_17] : memref<1x4xf32, #tpu.memory_space<vmem>>, vector<1x4xf32>
    %23 = vector.broadcast %22 : vector<1x4xf32> to vector<512x4xf32>
    %24 = arith.addf %21, %23 : vector<512x4xf32>
    %cst_18 = arith.constant 0.000000e+00 : f32
    %25 = vector.broadcast %cst_18 : f32 to vector<512x4xf32>
    %26 = arith.cmpf ogt, %24, %25 : vector<512x4xf32>
    %cst_19 = arith.constant 1.000000e-01 : f32
    %27 = vector.broadcast %cst_19 : f32 to vector<512x4xf32>
    %28 = arith.mulf %27, %24 : vector<512x4xf32>
    %29 = arith.select %26, %24, %28 : vector<512x4xi1>, vector<512x4xf32>
    %30 = arith.truncf %29 : vector<512x4xf32> to vector<512x4xbf16>
    %c0_20 = arith.constant 0 : index
    %c0_21 = arith.constant 0 : index
    %31 = vector.load %arg9[%c0_20, %c0_21] : memref<512x4xbf16, #tpu.memory_space<vmem>>, vector<512x4xbf16>
    tpu.vector_store %arg9[%c0_20, %c0_21], %30 {strides = array<i32>} : memref<512x4xbf16, #tpu.memory_space<vmem>>, vector<512x4xbf16>,
    return
  }
  func.func @transform_0(%arg0: i32) -> (i32, i32) {
    %c0_i32 = arith.constant 0 : i32
    %c0_i32_0 = arith.constant 0 : i32
    return %arg0, %c0_i32 : i32, i32
  }
  func.func @transform_1(%arg0: i32) -> (i32, i32) {
    %c0_i32 = arith.constant 0 : i32
    %c0_i32_0 = arith.constant 0 : i32
    %c0_i32_1 = arith.constant 0 : i32
    return %c0_i32, %c0_i32_0 : i32, i32
  }
  func.func @transform_2(%arg0: i32) -> (i32, i32) {
    %c0_i32 = arith.constant 0 : i32
    %c0_i32_0 = arith.constant 0 : i32
    %c0_i32_1 = arith.constant 0 : i32
    return %c0_i32, %c0_i32_0 : i32, i32
  }
  func.func @transform_3(%arg0: i32) -> (i32, i32) {
    %c0_i32 = arith.constant 0 : i32
    %c0_i32_0 = arith.constant 0 : i32
    %c0_i32_1 = arith.constant 0 : i32
    return %c0_i32, %c0_i32_0 : i32, i32
  }
  func.func @transform_4(%arg0: i32) -> (i32, i32) {
    %c0_i32 = arith.constant 0 : i32
    %c0_i32_0 = arith.constant 0 : i32
    %c0_i32_1 = arith.constant 0 : i32
    return %c0_i32, %c0_i32_0 : i32, i32
  }
  func.func @transform_5(%arg0: i32) -> (i32, i32) {
    %c0_i32 = arith.constant 0 : i32
    %c0_i32_0 = arith.constant 0 : i32
    %c0_i32_1 = arith.constant 0 : i32
    return %c0_i32, %c0_i32_0 : i32, i32
  }
  func.func @transform_6(%arg0: i32) -> (i32, i32) {
    %c0_i32 = arith.constant 0 : i32
    %c0_i32_0 = arith.constant 0 : i32
    %c0_i32_1 = arith.constant 0 : i32
    return %c0_i32, %c0_i32_0 : i32, i32
  }
  func.func @transform_7(%arg0: i32) -> (i32, i32) {
    %c0_i32 = arith.constant 0 : i32
    %c0_i32_0 = arith.constant 0 : i32
    return %arg0, %c0_i32 : i32, i32
  }
  func.func @transform_8(%arg0: i32) -> (i32, i32) {
    %c0_i32 = arith.constant 0 : i32
    %c0_i32_0 = arith.constant 0 : i32
    return %arg0, %c0_i32 : i32, i32
  }
}

module attributes {stable_mosaic.version = 11 : i64} {
  func.func @cv3_kernel(%arg0: i32, %arg1: memref<512x4xbf16, #tpu.memory_space<vmem>>, %arg2: memref<512x4xbf16, #tpu.memory_space<vmem>>, %arg3: memref<4x8xbf16, #tpu.memory_space<vmem>>, %arg4: memref<4x8xbf16, #tpu.memory_space<vmem>>, %arg5: memref<1x8xf32, #tpu.memory_space<vmem>>, %arg6: memref<1x8xf32, #tpu.memory_space<vmem>>, %arg7: memref<512x8xf32, #tpu.memory_space<vmem>>) attributes {dimension_semantics = [#tpu.dimension_semantics<parallel>], iteration_bounds = array<i64: 1>, scalar_prefetch = 0 : i64, scratch_operands = 0 : i64, tpu.core_type = #tpu.core_type<tc>, window_params = [{transform_indices = @transform_0, window_bounds = array<i64: 512, 4>}, {transform_indices = @transform_1, window_bounds = array<i64: 512, 4>}, {pipeline_mode = #tpu.pipeline_mode<synchronous>, transform_indices = @transform_2, window_bounds = array<i64: 4, 8>}, {pipeline_mode = #tpu.pipeline_mode<synchronous>, transform_indices = @transform_3, window_bounds = array<i64: 4, 8>}, {pipeline_mode = #tpu.pipeline_mode<synchronous>, transform_indices = @transform_4, window_bounds = array<i64: 1, 8>}, {pipeline_mode = #tpu.pipeline_mode<synchronous>, transform_indices = @transform_5, window_bounds = array<i64: 1, 8>}, {transform_indices = @transform_6, window_bounds = array<i64: 512, 8>}]} {
    %c0 = arith.constant 0 : index
    %c0_0 = arith.constant 0 : index
    %0 = vector.load %arg1[%c0, %c0_0] : memref<512x4xbf16, #tpu.memory_space<vmem>>, vector<512x4xbf16>
    %c0_1 = arith.constant 0 : index
    %c0_2 = arith.constant 0 : index
    %1 = vector.load %arg3[%c0_1, %c0_2] : memref<4x8xbf16, #tpu.memory_space<vmem>>, vector<4x8xbf16>
    %cst = arith.constant dense<0.000000e+00> : vector<512x8xf32>
    %2 = tpu.matmul %0, %1, %cst {dimension_numbers = #tpu.dot_dimension_numbers<[1], [0], [0], [1], [0, 0, 1, 1], [], []>} : vector<512x4xbf16>, vector<4x8xbf16>, vector<512x8xf32> -> vector<512x8xf32>
    %c0_3 = arith.constant 0 : index
    %c0_4 = arith.constant 0 : index
    %3 = vector.load %arg2[%c0_3, %c0_4] : memref<512x4xbf16, #tpu.memory_space<vmem>>, vector<512x4xbf16>
    %c0_5 = arith.constant 0 : index
    %c0_6 = arith.constant 0 : index
    %4 = vector.load %arg4[%c0_5, %c0_6] : memref<4x8xbf16, #tpu.memory_space<vmem>>, vector<4x8xbf16>
    %cst_7 = arith.constant dense<0.000000e+00> : vector<512x8xf32>
    %5 = tpu.matmul %3, %4, %cst_7 {dimension_numbers = #tpu.dot_dimension_numbers<[1], [0], [0], [1], [0, 0, 1, 1], [], []>} : vector<512x4xbf16>, vector<4x8xbf16>, vector<512x8xf32> -> vector<512x8xf32>
    %6 = arith.addf %2, %5 : vector<512x8xf32>
    %c0_8 = arith.constant 0 : index
    %c0_9 = arith.constant 0 : index
    %7 = vector.load %arg5[%c0_8, %c0_9] : memref<1x8xf32, #tpu.memory_space<vmem>>, vector<1x8xf32>
    %8 = vector.broadcast %7 : vector<1x8xf32> to vector<512x8xf32>
    %9 = arith.mulf %6, %8 : vector<512x8xf32>
    %c0_10 = arith.constant 0 : index
    %c0_11 = arith.constant 0 : index
    %10 = vector.load %arg6[%c0_10, %c0_11] : memref<1x8xf32, #tpu.memory_space<vmem>>, vector<1x8xf32>
    %11 = vector.broadcast %10 : vector<1x8xf32> to vector<512x8xf32>
    %12 = arith.addf %9, %11 : vector<512x8xf32>
    %cst_12 = arith.constant 0.000000e+00 : f32
    %13 = vector.broadcast %cst_12 : f32 to vector<512x8xf32>
    %14 = arith.cmpf ogt, %12, %13 : vector<512x8xf32>
    %cst_13 = arith.constant 1.000000e-01 : f32
    %15 = vector.broadcast %cst_13 : f32 to vector<512x8xf32>
    %16 = arith.mulf %15, %12 : vector<512x8xf32>
    %17 = arith.select %14, %12, %16 : vector<512x8xi1>, vector<512x8xf32>
    %c0_14 = arith.constant 0 : index
    %c0_15 = arith.constant 0 : index
    %18 = vector.load %arg7[%c0_14, %c0_15] : memref<512x8xf32, #tpu.memory_space<vmem>>, vector<512x8xf32>
    tpu.vector_store %arg7[%c0_14, %c0_15], %17 {strides = array<i32>} : memref<512x8xf32, #tpu.memory_space<vmem>>, vector<512x8xf32>,
    return
  }
  func.func @transform_0(%arg0: i32) -> (i32, i32) {
    %c0_i32 = arith.constant 0 : i32
    %c0_i32_0 = arith.constant 0 : i32
    return %arg0, %c0_i32 : i32, i32
  }
  func.func @transform_1(%arg0: i32) -> (i32, i32) {
    %c0_i32 = arith.constant 0 : i32
    %c0_i32_0 = arith.constant 0 : i32
    return %arg0, %c0_i32 : i32, i32
  }
  func.func @transform_2(%arg0: i32) -> (i32, i32) {
    %c0_i32 = arith.constant 0 : i32
    %c0_i32_0 = arith.constant 0 : i32
    %c0_i32_1 = arith.constant 0 : i32
    return %c0_i32, %c0_i32_0 : i32, i32
  }
  func.func @transform_3(%arg0: i32) -> (i32, i32) {
    %c0_i32 = arith.constant 0 : i32
    %c0_i32_0 = arith.constant 0 : i32
    %c0_i32_1 = arith.constant 0 : i32
    return %c0_i32, %c0_i32_0 : i32, i32
  }
  func.func @transform_4(%arg0: i32) -> (i32, i32) {
    %c0_i32 = arith.constant 0 : i32
    %c0_i32_0 = arith.constant 0 : i32
    %c0_i32_1 = arith.constant 0 : i32
    return %c0_i32, %c0_i32_0 : i32, i32
  }
  func.func @transform_5(%arg0: i32) -> (i32, i32) {
    %c0_i32 = arith.constant 0 : i32
    %c0_i32_0 = arith.constant 0 : i32
    %c0_i32_1 = arith.constant 0 : i32
    return %c0_i32, %c0_i32_0 : i32, i32
  }
  func.func @transform_6(%arg0: i32) -> (i32, i32) {
    %c0_i32 = arith.constant 0 : i32
    %c0_i32_0 = arith.constant 0 : i32
    return %arg0, %c0_i32 : i32, i32
  }
}

module attributes {stable_mosaic.version = 11 : i64} {
  func.func @res_block_kernel(%arg0: i32, %arg1: i32, %arg2: memref<1x1x16x4xbf16, #tpu.memory_space<vmem>>, %arg3: memref<1x8x16x4xbf16, #tpu.memory_space<vmem>>, %arg4: memref<1x1x16x4xbf16, #tpu.memory_space<vmem>>, %arg5: memref<4x4xbf16, #tpu.memory_space<vmem>>, %arg6: memref<1x4xf32, #tpu.memory_space<vmem>>, %arg7: memref<1x4xf32, #tpu.memory_space<vmem>>, %arg8: memref<3x12x4xbf16, #tpu.memory_space<vmem>>, %arg9: memref<1x4xf32, #tpu.memory_space<vmem>>, %arg10: memref<1x4xf32, #tpu.memory_space<vmem>>, %arg11: memref<1x8x16x4xbf16, #tpu.memory_space<vmem>>) attributes {dimension_semantics = [#tpu.dimension_semantics<parallel>, #tpu.dimension_semantics<parallel>], iteration_bounds = array<i64: 2, 2>, scalar_prefetch = 0 : i64, scratch_operands = 0 : i64, tpu.core_type = #tpu.core_type<tc>, window_params = [{transform_indices = @transform_0, window_bounds = array<i64: 1, 1, 16, 4>}, {transform_indices = @transform_1, window_bounds = array<i64: 1, 8, 16, 4>}, {transform_indices = @transform_2, window_bounds = array<i64: 1, 1, 16, 4>}, {pipeline_mode = #tpu.pipeline_mode<synchronous>, transform_indices = @transform_3, window_bounds = array<i64: 4, 4>}, {pipeline_mode = #tpu.pipeline_mode<synchronous>, transform_indices = @transform_4, window_bounds = array<i64: 1, 4>}, {pipeline_mode = #tpu.pipeline_mode<synchronous>, transform_indices = @transform_5, window_bounds = array<i64: 1, 4>}, {pipeline_mode = #tpu.pipeline_mode<synchronous>, transform_indices = @transform_6, window_bounds = array<i64: 3, 12, 4>}, {pipeline_mode = #tpu.pipeline_mode<synchronous>, transform_indices = @transform_7, window_bounds = array<i64: 1, 4>}, {pipeline_mode = #tpu.pipeline_mode<synchronous>, transform_indices = @transform_8, window_bounds = array<i64: 1, 4>}, {transform_indices = @transform_9, window_bounds = array<i64: 1, 8, 16, 4>}]} {
    %c0 = arith.constant 0 : index
    %c0_0 = arith.constant 0 : index
    %c0_1 = arith.constant 0 : index
    %c0_2 = arith.constant 0 : index
    %0 = vector.load %arg3[%c0, %c0_0, %c0_1, %c0_2] : memref<1x8x16x4xbf16, #tpu.memory_space<vmem>>, vector<1x8x16x4xbf16>
    %1 = vector.shape_cast %0 : vector<1x8x16x4xbf16> to vector<8x16x4xbf16>
    %c0_3 = arith.constant 0 : index
    %c0_4 = arith.constant 0 : index
    %c0_5 = arith.constant 0 : index
    %c0_6 = arith.constant 0 : index
    %2 = vector.load %arg2[%c0_3, %c0_4, %c0_5, %c0_6] : memref<1x1x16x4xbf16, #tpu.memory_space<vmem>>, vector<1x1x16x4xbf16>
    %3 = vector.shape_cast %2 : vector<1x1x16x4xbf16> to vector<1x16x4xbf16>
    %c0_7 = arith.constant 0 : index
    %c0_8 = arith.constant 0 : index
    %c0_9 = arith.constant 0 : index
    %c0_10 = arith.constant 0 : index
    %4 = vector.load %arg4[%c0_7, %c0_8, %c0_9, %c0_10] : memref<1x1x16x4xbf16, #tpu.memory_space<vmem>>, vector<1x1x16x4xbf16>
    %5 = vector.shape_cast %4 : vector<1x1x16x4xbf16> to vector<1x16x4xbf16>
    %6 = tpu.concatenate %3, %1, %5 in 0 : vector<1x16x4xbf16>, vector<8x16x4xbf16>, vector<1x16x4xbf16> -> vector<10x16x4xbf16>
    %7 = vector.shape_cast %6 : vector<10x16x4xbf16> to vector<160x4xbf16>
    %c0_11 = arith.constant 0 : index
    %c0_12 = arith.constant 0 : index
    %8 = vector.load %arg5[%c0_11, %c0_12] : memref<4x4xbf16, #tpu.memory_space<vmem>>, vector<4x4xbf16>
    %cst = arith.constant dense<0.000000e+00> : vector<160x4xf32>
    %9 = tpu.matmul %7, %8, %cst {dimension_numbers = #tpu.dot_dimension_numbers<[1], [0], [0], [1], [0, 0, 1, 1], [], []>} : vector<160x4xbf16>, vector<4x4xbf16>, vector<160x4xf32> -> vector<160x4xf32>
    %c0_13 = arith.constant 0 : index
    %c0_14 = arith.constant 0 : index
    %10 = vector.load %arg6[%c0_13, %c0_14] : memref<1x4xf32, #tpu.memory_space<vmem>>, vector<1x4xf32>
    %11 = vector.broadcast %10 : vector<1x4xf32> to vector<160x4xf32>
    %12 = arith.mulf %9, %11 : vector<160x4xf32>
    %c0_15 = arith.constant 0 : index
    %c0_16 = arith.constant 0 : index
    %13 = vector.load %arg7[%c0_15, %c0_16] : memref<1x4xf32, #tpu.memory_space<vmem>>, vector<1x4xf32>
    %14 = vector.broadcast %13 : vector<1x4xf32> to vector<160x4xf32>
    %15 = arith.addf %12, %14 : vector<160x4xf32>
    %cst_17 = arith.constant 0.000000e+00 : f32
    %16 = vector.broadcast %cst_17 : f32 to vector<160x4xf32>
    %17 = arith.cmpf ogt, %15, %16 : vector<160x4xf32>
    %cst_18 = arith.constant 1.000000e-01 : f32
    %18 = vector.broadcast %cst_18 : f32 to vector<160x4xf32>
    %19 = arith.mulf %18, %15 : vector<160x4xf32>
    %20 = arith.select %17, %15, %19 : vector<160x4xi1>, vector<160x4xf32>
    %21 = vector.shape_cast %20 : vector<160x4xf32> to vector<10x16x4xf32>
    %22 = tpu.iota {dimensions = array<i32: 0>} : vector<10x16x4xi32>
    %c8_i32 = arith.constant 8 : i32
    %23 = arith.muli %arg1, %c8_i32 : i32
    %c1_i32 = arith.constant 1 : i32
    %24 = arith.subi %23, %c1_i32 : i32
    %25 = vector.broadcast %24 : i32 to vector<10x16x4xi32>
    %26 = arith.addi %22, %25 : vector<10x16x4xi32>
    %c0_i32 = arith.constant 0 : i32
    %27 = vector.broadcast %c0_i32 : i32 to vector<10x16x4xi32>
    %28 = arith.cmpi sge, %26, %27 : vector<10x16x4xi32>
    %c16_i32 = arith.constant 16 : i32
    %29 = vector.broadcast %c16_i32 : i32 to vector<10x16x4xi32>
    %30 = arith.cmpi slt, %26, %29 : vector<10x16x4xi32>
    %31 = arith.andi %28, %30 : vector<10x16x4xi1>
    %cst_19 = arith.constant 0.000000e+00 : f32
    %32 = vector.broadcast %cst_19 : f32 to vector<10x16x4xf32>
    %33 = arith.select %31, %21, %32 : vector<10x16x4xi1>, vector<10x16x4xf32>
    %34 = arith.truncf %33 : vector<10x16x4xf32> to vector<10x16x4xbf16>
    %cst_20 = arith.constant 0.000000e+00 : bf16
    %35 = vector.broadcast %cst_20 : bf16 to vector<10x1x4xbf16>
    %36 = tpu.concatenate %35, %34, %35 in 1 : vector<10x1x4xbf16>, vector<10x16x4xbf16>, vector<10x1x4xbf16> -> vector<10x18x4xbf16>
    %cst_21 = arith.constant 0.000000e+00 : f32
    %37 = vector.broadcast %cst_21 : f32 to vector<128x4xf32>
    %38 = vector.extract_strided_slice %36 {offsets = [0, 0, 0], sizes = [8, 18, 4], strides = [1, 1, 1]} : vector<10x18x4xbf16> to vector<8x18x4xbf16>
    %39 = vector.extract_strided_slice %38 {offsets = [0, 0, 0], sizes = [8, 16, 4], strides = [1, 1, 1]} : vector<8x18x4xbf16> to vector<8x16x4xbf16>
    %40 = vector.extract_strided_slice %38 {offsets = [0, 1, 0], sizes = [8, 16, 4], strides = [1, 1, 1]} : vector<8x18x4xbf16> to vector<8x16x4xbf16>
    %41 = vector.extract_strided_slice %38 {offsets = [0, 2, 0], sizes = [8, 16, 4], strides = [1, 1, 1]} : vector<8x18x4xbf16> to vector<8x16x4xbf16>
    %42 = tpu.concatenate %39, %40, %41 in 2 : vector<8x16x4xbf16>, vector<8x16x4xbf16>, vector<8x16x4xbf16> -> vector<8x16x12xbf16>
    %43 = vector.shape_cast %42 : vector<8x16x12xbf16> to vector<128x12xbf16>
    %c0_22 = arith.constant 0 : index
    %c0_23 = arith.constant 0 : index
    %c0_24 = arith.constant 0 : index
    %44 = vector.load %arg8[%c0_22, %c0_23, %c0_24] : memref<3x12x4xbf16, #tpu.memory_space<vmem>>, vector<1x12x4xbf16>
    %45 = vector.shape_cast %44 : vector<1x12x4xbf16> to vector<12x4xbf16>
    %cst_25 = arith.constant dense<0.000000e+00> : vector<128x4xf32>
    %46 = tpu.matmul %43, %45, %cst_25 {dimension_numbers = #tpu.dot_dimension_numbers<[1], [0], [0], [1], [0, 0, 1, 1], [], []>} : vector<128x12xbf16>, vector<12x4xbf16>, vector<128x4xf32> -> vector<128x4xf32>
    %47 = arith.addf %37, %46 : vector<128x4xf32>
    %48 = vector.extract_strided_slice %36 {offsets = [1, 0, 0], sizes = [8, 18, 4], strides = [1, 1, 1]} : vector<10x18x4xbf16> to vector<8x18x4xbf16>
    %49 = vector.extract_strided_slice %48 {offsets = [0, 0, 0], sizes = [8, 16, 4], strides = [1, 1, 1]} : vector<8x18x4xbf16> to vector<8x16x4xbf16>
    %50 = vector.extract_strided_slice %48 {offsets = [0, 1, 0], sizes = [8, 16, 4], strides = [1, 1, 1]} : vector<8x18x4xbf16> to vector<8x16x4xbf16>
    %51 = vector.extract_strided_slice %48 {offsets = [0, 2, 0], sizes = [8, 16, 4], strides = [1, 1, 1]} : vector<8x18x4xbf16> to vector<8x16x4xbf16>
    %52 = tpu.concatenate %49, %50, %51 in 2 : vector<8x16x4xbf16>, vector<8x16x4xbf16>, vector<8x16x4xbf16> -> vector<8x16x12xbf16>
    %53 = vector.shape_cast %52 : vector<8x16x12xbf16> to vector<128x12xbf16>
    %c1 = arith.constant 1 : index
    %c0_26 = arith.constant 0 : index
    %c0_27 = arith.constant 0 : index
    %54 = vector.load %arg8[%c1, %c0_26, %c0_27] : memref<3x12x4xbf16, #tpu.memory_space<vmem>>, vector<1x12x4xbf16>
    %55 = vector.shape_cast %54 : vector<1x12x4xbf16> to vector<12x4xbf16>
    %cst_28 = arith.constant dense<0.000000e+00> : vector<128x4xf32>
    %56 = tpu.matmul %53, %55, %cst_28 {dimension_numbers = #tpu.dot_dimension_numbers<[1], [0], [0], [1], [0, 0, 1, 1], [], []>} : vector<128x12xbf16>, vector<12x4xbf16>, vector<128x4xf32> -> vector<128x4xf32>
    %57 = arith.addf %47, %56 : vector<128x4xf32>
    %58 = vector.extract_strided_slice %36 {offsets = [2, 0, 0], sizes = [8, 18, 4], strides = [1, 1, 1]} : vector<10x18x4xbf16> to vector<8x18x4xbf16>
    %59 = vector.extract_strided_slice %58 {offsets = [0, 0, 0], sizes = [8, 16, 4], strides = [1, 1, 1]} : vector<8x18x4xbf16> to vector<8x16x4xbf16>
    %60 = vector.extract_strided_slice %58 {offsets = [0, 1, 0], sizes = [8, 16, 4], strides = [1, 1, 1]} : vector<8x18x4xbf16> to vector<8x16x4xbf16>
    %61 = vector.extract_strided_slice %58 {offsets = [0, 2, 0], sizes = [8, 16, 4], strides = [1, 1, 1]} : vector<8x18x4xbf16> to vector<8x16x4xbf16>
    %62 = tpu.concatenate %59, %60, %61 in 2 : vector<8x16x4xbf16>, vector<8x16x4xbf16>, vector<8x16x4xbf16> -> vector<8x16x12xbf16>
    %63 = vector.shape_cast %62 : vector<8x16x12xbf16> to vector<128x12xbf16>
    %c2 = arith.constant 2 : index
    %c0_29 = arith.constant 0 : index
    %c0_30 = arith.constant 0 : index
    %64 = vector.load %arg8[%c2, %c0_29, %c0_30] : memref<3x12x4xbf16, #tpu.memory_space<vmem>>, vector<1x12x4xbf16>
    %65 = vector.shape_cast %64 : vector<1x12x4xbf16> to vector<12x4xbf16>
    %cst_31 = arith.constant dense<0.000000e+00> : vector<128x4xf32>
    %66 = tpu.matmul %63, %65, %cst_31 {dimension_numbers = #tpu.dot_dimension_numbers<[1], [0], [0], [1], [0, 0, 1, 1], [], []>} : vector<128x12xbf16>, vector<12x4xbf16>, vector<128x4xf32> -> vector<128x4xf32>
    %67 = arith.addf %57, %66 : vector<128x4xf32>
    %c0_32 = arith.constant 0 : index
    %c0_33 = arith.constant 0 : index
    %68 = vector.load %arg9[%c0_32, %c0_33] : memref<1x4xf32, #tpu.memory_space<vmem>>, vector<1x4xf32>
    %69 = vector.broadcast %68 : vector<1x4xf32> to vector<128x4xf32>
    %70 = arith.mulf %67, %69 : vector<128x4xf32>
    %c0_34 = arith.constant 0 : index
    %c0_35 = arith.constant 0 : index
    %71 = vector.load %arg10[%c0_34, %c0_35] : memref<1x4xf32, #tpu.memory_space<vmem>>, vector<1x4xf32>
    %72 = vector.broadcast %71 : vector<1x4xf32> to vector<128x4xf32>
    %73 = arith.addf %70, %72 : vector<128x4xf32>
    %74 = vector.shape_cast %73 : vector<128x4xf32> to vector<8x16x4xf32>
    %75 = arith.extf %1 : vector<8x16x4xbf16> to vector<8x16x4xf32>
    %76 = arith.addf %74, %75 : vector<8x16x4xf32>
    %cst_36 = arith.constant 0.000000e+00 : f32
    %77 = vector.broadcast %cst_36 : f32 to vector<8x16x4xf32>
    %78 = arith.cmpf ogt, %76, %77 : vector<8x16x4xf32>
    %cst_37 = arith.constant 1.000000e-01 : f32
    %79 = vector.broadcast %cst_37 : f32 to vector<8x16x4xf32>
    %80 = arith.mulf %79, %76 : vector<8x16x4xf32>
    %81 = arith.select %78, %76, %80 : vector<8x16x4xi1>, vector<8x16x4xf32>
    %82 = arith.truncf %81 : vector<8x16x4xf32> to vector<8x16x4xbf16>
    %c0_38 = arith.constant 0 : index
    %c0_39 = arith.constant 0 : index
    %c0_40 = arith.constant 0 : index
    %c0_41 = arith.constant 0 : index
    %83 = vector.load %arg11[%c0_38, %c0_39, %c0_40, %c0_41] : memref<1x8x16x4xbf16, #tpu.memory_space<vmem>>, vector<1x8x16x4xbf16>
    %84 = vector.shape_cast %83 : vector<1x8x16x4xbf16> to vector<8x16x4xbf16>
    %85 = vector.shape_cast %82 : vector<8x16x4xbf16> to vector<1x8x16x4xbf16>
    tpu.vector_store %arg11[%c0_38, %c0_39, %c0_40, %c0_41], %85 {strides = array<i32>} : memref<1x8x16x4xbf16, #tpu.memory_space<vmem>>, vector<1x8x16x4xbf16>,
    return
  }
  func.func @transform_0(%arg0: i32, %arg1: i32) -> (i32, i32, i32, i32) {
    %c0_i32 = arith.constant 0 : i32
    %c0_i32_0 = arith.constant 0 : i32
    %c0_i32_1 = arith.constant 0 : i32
    return %arg0, %arg1, %c0_i32, %c0_i32_0 : i32, i32, i32, i32
  }
  func.func @transform_1(%arg0: i32, %arg1: i32) -> (i32, i32, i32, i32) {
    %c0_i32 = arith.constant 0 : i32
    %c0_i32_0 = arith.constant 0 : i32
    %c0_i32_1 = arith.constant 0 : i32
    return %arg0, %arg1, %c0_i32, %c0_i32_0 : i32, i32, i32, i32
  }
  func.func @transform_2(%arg0: i32, %arg1: i32) -> (i32, i32, i32, i32) {
    %c0_i32 = arith.constant 0 : i32
    %c0_i32_0 = arith.constant 0 : i32
    %c0_i32_1 = arith.constant 0 : i32
    return %arg0, %arg1, %c0_i32, %c0_i32_0 : i32, i32, i32, i32
  }
  func.func @transform_3(%arg0: i32, %arg1: i32) -> (i32, i32) {
    %c0_i32 = arith.constant 0 : i32
    %c0_i32_0 = arith.constant 0 : i32
    %c0_i32_1 = arith.constant 0 : i32
    return %c0_i32, %c0_i32_0 : i32, i32
  }
  func.func @transform_4(%arg0: i32, %arg1: i32) -> (i32, i32) {
    %c0_i32 = arith.constant 0 : i32
    %c0_i32_0 = arith.constant 0 : i32
    %c0_i32_1 = arith.constant 0 : i32
    return %c0_i32, %c0_i32_0 : i32, i32
  }
  func.func @transform_5(%arg0: i32, %arg1: i32) -> (i32, i32) {
    %c0_i32 = arith.constant 0 : i32
    %c0_i32_0 = arith.constant 0 : i32
    %c0_i32_1 = arith.constant 0 : i32
    return %c0_i32, %c0_i32_0 : i32, i32
  }
  func.func @transform_6(%arg0: i32, %arg1: i32) -> (i32, i32, i32) {
    %c0_i32 = arith.constant 0 : i32
    %c0_i32_0 = arith.constant 0 : i32
    %c0_i32_1 = arith.constant 0 : i32
    %c0_i32_2 = arith.constant 0 : i32
    return %c0_i32, %c0_i32_0, %c0_i32_1 : i32, i32, i32
  }
  func.func @transform_7(%arg0: i32, %arg1: i32) -> (i32, i32) {
    %c0_i32 = arith.constant 0 : i32
    %c0_i32_0 = arith.constant 0 : i32
    %c0_i32_1 = arith.constant 0 : i32
    return %c0_i32, %c0_i32_0 : i32, i32
  }
  func.func @transform_8(%arg0: i32, %arg1: i32) -> (i32, i32) {
    %c0_i32 = arith.constant 0 : i32
    %c0_i32_0 = arith.constant 0 : i32
    %c0_i32_1 = arith.constant 0 : i32
    return %c0_i32, %c0_i32_0 : i32, i32
  }
  func.func @transform_9(%arg0: i32, %arg1: i32) -> (i32, i32, i32, i32) {
    %c0_i32 = arith.constant 0 : i32
    %c0_i32_0 = arith.constant 0 : i32
    %c0_i32_1 = arith.constant 0 : i32
    return %arg0, %arg1, %c0_i32, %c0_i32_0 : i32, i32, i32, i32
  }
}

</mosaic_0001>

<llo_original>
// kernel: csp_stage_pallas.5
$region0: #{csp_stage_pallas.5}
  #allocation0 [shape = 'u32[]', space=smem, size = 0x4, offset = 0x4, fixed_abs, tag = 'smem constant byte address 0x4 - core index']
  #allocation1 [shape = 'u32[72,128]{1,0:T(1,128)}', space=vmem, size = 0x9000, scoped, tag = 'internal scratch']
  %s0 = inlined_call_operand.vmem [shape: bf16[2,2,16,4], index: 0, kind: input, shape index: {}]
  %s1 = inlined_call_operand.vmem [shape: bf16[2,16,16,4], index: 1, kind: input, shape index: {}]
  %s2 = inlined_call_operand.vmem [shape: bf16[2,2,16,4], index: 2, kind: input, shape index: {}]
  %s3 = inlined_call_operand.vmem [shape: bf16[4,4], index: 3, kind: input, shape index: {}]
  %s4 = inlined_call_operand.vmem [shape: f32[1,4], index: 4, kind: input, shape index: {}]
  %s5 = inlined_call_operand.vmem [shape: f32[1,4], index: 5, kind: input, shape index: {}]
  %s6 = inlined_call_operand.vmem [shape: bf16[3,12,4], index: 6, kind: input, shape index: {}]
  %s7 = inlined_call_operand.vmem [shape: f32[1,4], index: 7, kind: input, shape index: {}]
  %s8 = inlined_call_operand.vmem [shape: f32[1,4], index: 8, kind: input, shape index: {}]
  %s9 = inlined_call_operand.vmem [shape: bf16[2,16,16,4], index: 9, kind: output, shape index: {}]
  %s10 = sld [smem:[#allocation0]]
  $region69: #{csp_stage_pallas.5} parent=0
    _
  %s12 = ssub.s32 1, %s10
  %s13 = scalar_select 0, %s12, %s10
  loop: start=0, step=1, limit=6
  $region2: #{csp_stage_pallas.5} parent=0 // loop_pre_header
    _
  $region3: #{csp_stage_pallas.5} parent=0 // loop_header
    %s15 = sphi 0, %s19
    %p16 = scmp.ge.s32.totalorder %s15, 6
    %s22 = sphi 0, %s34
    %s23 = sphi 0, %s30
    %s24 = sphi 0, %s22
    %s25 = sphi 0, %s23
    %s26 = sphi 0, %s24
    %s27 = sphi 0, %s25
    %s39 = sphi 0, %s41
    %s42 = sphi 0, %s39
    %s43 = sphi 0, %s42
    %s59 = sphi 0, %s43
    %s67 = sphi 0, %s69
    %s70 = sphi 0, %s67
    %s71 = sphi 0, %s70
    %s87 = sphi 0, %s71
    %s95 = sphi 0, %s97
    %s98 = sphi 0, %s95
    %s99 = sphi 0, %s98
    %s115 = sphi 0, %s99
    %s119 = sphi 0, %s119
    %s121 = sphi 0, %s119
    %s122 = sphi 0, %s121
    %s136 = sphi 0, %s122
    %s140 = sphi 0, %s140
    %s142 = sphi 0, %s140
    %s143 = sphi 0, %s142
    %s157 = sphi 0, %s143
    %s161 = sphi 0, %s161
    %s163 = sphi 0, %s161
    %s164 = sphi 0, %s163
    %s178 = sphi 0, %s164
    %s182 = sphi 0, %s182
    %s184 = sphi 0, %s182
    %s185 = sphi 0, %s184
    %s199 = sphi 0, %s185
    %s203 = sphi 0, %s203
    %s205 = sphi 0, %s203
    %s206 = sphi 0, %s205
    %s220 = sphi 0, %s206
    %s224 = sphi 0, %s224
    %s226 = sphi 0, %s224
    %s227 = sphi 0, %s226
    %s241 = sphi 0, %s227
    %s249 = sphi 0, %s251
    %s252 = sphi 0, %s249
    %s253 = sphi 0, %s252
    %s269 = sphi 0, %s253
  $region4: #{csp_stage_pallas.5} parent=0 // loop_header_branch
    %18 = sbr.rel (%p16) target = $region8
  $region5: #{csp_stage_pallas.5} parent=0 // loop_body
    %s20 = ssub.s32 %s15, 1
    %s21 = ssub.s32 %s15, 2
    %s28 = sadd.s32 1, %s23
    %p29 = scmp.ge.s32.totalorder %s28, 2
    %s30 = scalar_select %p29, 0, %s28
    %s31 = sadd.s32 1, %s22
    %s32 = scalar_select %p29, %s31, %s22
    %p33 = scmp.ge.s32.totalorder %s32, 2
    %s34 = scalar_select %p33, 0, %s32
    %s35 = ssub.s32 %s22, %s34
    %s36 = ssub.s32 %s23, %s30
    %s37 = sor.u32 %s35, %s36
    %p38 = scmp.eq.s32.totalorder %s37, 0
    %s40 = sadd.s32 %s39, 1
    %s41 = scalar_select %p38, %s39, %s40
    %p44 = pneg %p38
    %p45 = scmp.eq.s32.totalorder %s15, 3
    %p46 = por %p44, %p45
    %p47 = scmp.ne.s32.totalorder %s39, %s42
    %p48 = scmp.eq.s32.totalorder %s15, 0
    %p49 = por %p47, %p48
    %p50 = scmp.ne.s32.totalorder %s39, %s42
    %p51 = scmp.eq.s32.totalorder %s20, 3
    %p52 = por %p50, %p51
    %p53 = scmp.ne.s32.totalorder %s42, %s43
    %p54 = scmp.eq.s32.totalorder %s20, 0
    %p55 = por %p53, %p54
    %p56 = scmp.ne.s32.totalorder %s42, %s43
    %p57 = scmp.eq.s32.totalorder %s21, 3
    %p58 = por %p56, %p57
    %p60 = scmp.ne.s32.totalorder %s43, %s59
    %p61 = scmp.eq.s32.totalorder %s21, 0
    %p62 = por %p60, %p61
    %s63 = ssub.s32 %s22, %s34
    %s64 = ssub.s32 %s23, %s30
    %s65 = sor.u32 %s63, %s64
    %p66 = scmp.eq.s32.totalorder %s65, 0
    %s68 = sadd.s32 %s67, 1
    %s69 = scalar_select %p66, %s67, %s68
    %p72 = pneg %p66
    %p73 = scmp.eq.s32.totalorder %s15, 3
    %p74 = por %p72, %p73
    %p75 = scmp.ne.s32.totalorder %s67, %s70
    %p76 = scmp.eq.s32.totalorder %s15, 0
    %p77 = por %p75, %p76
    %p78 = scmp.ne.s32.totalorder %s67, %s70
    %p79 = scmp.eq.s32.totalorder %s20, 3
    %p80 = por %p78, %p79
    %p81 = scmp.ne.s32.totalorder %s70, %s71
    %p82 = scmp.eq.s32.totalorder %s20, 0
    %p83 = por %p81, %p82
    %p84 = scmp.ne.s32.totalorder %s70, %s71
    %p85 = scmp.eq.s32.totalorder %s21, 3
    %p86 = por %p84, %p85
    %p88 = scmp.ne.s32.totalorder %s71, %s87
    %p89 = scmp.eq.s32.totalorder %s21, 0
    %p90 = por %p88, %p89
    %s91 = ssub.s32 %s22, %s34
    %s92 = ssub.s32 %s23, %s30
    %s93 = sor.u32 %s91, %s92
    %p94 = scmp.eq.s32.totalorder %s93, 0
    %s96 = sadd.s32 %s95, 1
    %s97 = scalar_select %p94, %s95, %s96
    %p100 = pneg %p94
    %p101 = scmp.eq.s32.totalorder %s15, 3
    %p102 = por %p100, %p101
    %p103 = scmp.ne.s32.totalorder %s95, %s98
    %p104 = scmp.eq.s32.totalorder %s15, 0
    %p105 = por %p103, %p104
    %p106 = scmp.ne.s32.totalorder %s95, %s98
    %p107 = scmp.eq.s32.totalorder %s20, 3
    %p108 = por %p106, %p107
    %p109 = scmp.ne.s32.totalorder %s98, %s99
    %p110 = scmp.eq.s32.totalorder %s20, 0
    %p111 = por %p109, %p110
    %p112 = scmp.ne.s32.totalorder %s98, %s99
    %p113 = scmp.eq.s32.totalorder %s21, 3
    %p114 = por %p112, %p113
    %p116 = scmp.ne.s32.totalorder %s99, %s115
    %p117 = scmp.eq.s32.totalorder %s21, 0
    %p118 = por %p116, %p117
    %s120 = sadd.s32 %s119, 1
    %p123 = scmp.eq.s32.totalorder %s15, 3
    %p124 = scmp.ne.s32.totalorder %s119, %s121
    %p125 = scmp.eq.s32.totalorder %s15, 0
    %p126 = por %p124, %p125
    %p127 = scmp.ne.s32.totalorder %s119, %s121
    %p128 = scmp.eq.s32.totalorder %s20, 3
    %p129 = por %p127, %p128
    %p130 = scmp.ne.s32.totalorder %s121, %s122
    %p131 = scmp.eq.s32.totalorder %s20, 0
    %p132 = por %p130, %p131
    %p133 = scmp.ne.s32.totalorder %s121, %s122
    %p134 = scmp.eq.s32.totalorder %s21, 3
    %p135 = por %p133, %p134
    %p137 = scmp.ne.s32.totalorder %s122, %s136
    %p138 = scmp.eq.s32.totalorder %s21, 0
    %p139 = por %p137, %p138
    %s141 = sadd.s32 %s140, 1
    %p144 = scmp.eq.s32.totalorder %s15, 3
    %p145 = scmp.ne.s32.totalorder %s140, %s142
    %p146 = scmp.eq.s32.totalorder %s15, 0
    %p147 = por %p145, %p146
    %p148 = scmp.ne.s32.totalorder %s140, %s142
    %p149 = scmp.eq.s32.totalorder %s20, 3
    %p150 = por %p148, %p149
    %p151 = scmp.ne.s32.totalorder %s142, %s143
    %p152 = scmp.eq.s32.totalorder %s20, 0
    %p153 = por %p151, %p152
    %p154 = scmp.ne.s32.totalorder %s142, %s143
    %p155 = scmp.eq.s32.totalorder %s21, 3
    %p156 = por %p154, %p155
    %p158 = scmp.ne.s32.totalorder %s143, %s157
    %p159 = scmp.eq.s32.totalorder %s21, 0
    %p160 = por %p158, %p159
    %s162 = sadd.s32 %s161, 1
    %p165 = scmp.eq.s32.totalorder %s15, 3
    %p166 = scmp.ne.s32.totalorder %s161, %s163
    %p167 = scmp.eq.s32.totalorder %s15, 0
    %p168 = por %p166, %p167
    %p169 = scmp.ne.s32.totalorder %s161, %s163
    %p170 = scmp.eq.s32.totalorder %s20, 3
    %p171 = por %p169, %p170
    %p172 = scmp.ne.s32.totalorder %s163, %s164
    %p173 = scmp.eq.s32.totalorder %s20, 0
    %p174 = por %p172, %p173
    %p175 = scmp.ne.s32.totalorder %s163, %s164
    %p176 = scmp.eq.s32.totalorder %s21, 3
    %p177 = por %p175, %p176
    %p179 = scmp.ne.s32.totalorder %s164, %s178
    %p180 = scmp.eq.s32.totalorder %s21, 0
    %p181 = por %p179, %p180
    %s183 = sadd.s32 %s182, 1
    %p186 = scmp.eq.s32.totalorder %s15, 3
    %p187 = scmp.ne.s32.totalorder %s182, %s184
    %p188 = scmp.eq.s32.totalorder %s15, 0
    %p189 = por %p187, %p188
    %p190 = scmp.ne.s32.totalorder %s182, %s184
    %p191 = scmp.eq.s32.totalorder %s20, 3
    %p192 = por %p190, %p191
    %p193 = scmp.ne.s32.totalorder %s184, %s185
    %p194 = scmp.eq.s32.totalorder %s20, 0
    %p195 = por %p193, %p194
    %p196 = scmp.ne.s32.totalorder %s184, %s185
    %p197 = scmp.eq.s32.totalorder %s21, 3
    %p198 = por %p196, %p197
    %p200 = scmp.ne.s32.totalorder %s185, %s199
    %p201 = scmp.eq.s32.totalorder %s21, 0
    %p202 = por %p200, %p201
    %s204 = sadd.s32 %s203, 1
    %p207 = scmp.eq.s32.totalorder %s15, 3
    %p208 = scmp.ne.s32.totalorder %s203, %s205
    %p209 = scmp.eq.s32.totalorder %s15, 0
    %p210 = por %p208, %p209
    %p211 = scmp.ne.s32.totalorder %s203, %s205
    %p212 = scmp.eq.s32.totalorder %s20, 3
    %p213 = por %p211, %p212
    %p214 = scmp.ne.s32.totalorder %s205, %s206
    %p215 = scmp.eq.s32.totalorder %s20, 0
    %p216 = por %p214, %p215
    %p217 = scmp.ne.s32.totalorder %s205, %s206
    %p218 = scmp.eq.s32.totalorder %s21, 3
    %p219 = por %p217, %p218
    %p221 = scmp.ne.s32.totalorder %s206, %s220
    %p222 = scmp.eq.s32.totalorder %s21, 0
    %p223 = por %p221, %p222
    %s225 = sadd.s32 %s224, 1
    %p228 = scmp.eq.s32.totalorder %s15, 3
    %p229 = scmp.ne.s32.totalorder %s224, %s226
    %p230 = scmp.eq.s32.totalorder %s15, 0
    %p231 = por %p229, %p230
    %p232 = scmp.ne.s32.totalorder %s224, %s226
    %p233 = scmp.eq.s32.totalorder %s20, 3
    %p234 = por %p232, %p233
    %p235 = scmp.ne.s32.totalorder %s226, %s227
    %p236 = scmp.eq.s32.totalorder %s20, 0
    %p237 = por %p235, %p236
    %p238 = scmp.ne.s32.totalorder %s226, %s227
    %p239 = scmp.eq.s32.totalorder %s21, 3
    %p240 = por %p238, %p239
    %p242 = scmp.ne.s32.totalorder %s227, %s241
    %p243 = scmp.eq.s32.totalorder %s21, 0
    %p244 = por %p242, %p243
    %s245 = ssub.s32 %s22, %s34
    %s246 = ssub.s32 %s23, %s30
    %s247 = sor.u32 %s245, %s246
    %p248 = scmp.eq.s32.totalorder %s247, 0
    %s250 = sadd.s32 %s249, 1
    %s251 = scalar_select %p248, %s249, %s250
    %p254 = pneg %p248
    %p255 = scmp.eq.s32.totalorder %s15, 3
    %p256 = por %p254, %p255
    %p257 = scmp.ne.s32.totalorder %s249, %s252
    %p258 = scmp.eq.s32.totalorder %s15, 0
    %p259 = por %p257, %p258
    %p260 = scmp.ne.s32.totalorder %s249, %s252
    %p261 = scmp.eq.s32.totalorder %s20, 3
    %p262 = por %p260, %p261
    %p263 = scmp.ne.s32.totalorder %s252, %s253
    %p264 = scmp.eq.s32.totalorder %s20, 0
    %p265 = por %p263, %p264
    %p266 = scmp.ne.s32.totalorder %s252, %s253
    %p267 = scmp.eq.s32.totalorder %s21, 3
    %p268 = por %p266, %p267
    %p270 = scmp.ne.s32.totalorder %s253, %s269
    %p271 = scmp.eq.s32.totalorder %s21, 0
    %p272 = por %p270, %p271
    %p273 = scmp.le.s32.totalorder 1, %s15
    %p274 = scmp.lt.s32.totalorder %s15, 5
    %p275 = pnand %p273, %p274
    %p276 = pneg %p275
    // Predicated region
    $region9: #{csp_stage_pallas.5} parent=5 // pred_check
      _
    $region10: #{csp_stage_pallas.5} parent=5 // pred_check_branch
      %278 = sbr.rel (%p275) target = $region12
    $region11: #{csp_stage_pallas.5} parent=5 // pred_region
      %s279 = ssub.s32 %s15, 1
      // Predicated region
      $region13: #{csp_stage_pallas.5} parent=11 // pred_check
        %p280 = pneg %p132
      $region14: #{csp_stage_pallas.5} parent=11 // pred_check_branch
        %282 = sbr.rel (%p280) target = $region16
      $region15: #{csp_stage_pallas.5} parent=11 // pred_region
        _
      $region16: #{csp_stage_pallas.5} parent=11 // pred_fallthru
        _
      // Predicated region
      $region17: #{csp_stage_pallas.5} parent=11 // pred_check
        %p283 = pneg %p153
      $region18: #{csp_stage_pallas.5} parent=11 // pred_check_branch
        %285 = sbr.rel (%p283) target = $region20
      $region19: #{csp_stage_pallas.5} parent=11 // pred_region
        _
      $region20: #{csp_stage_pallas.5} parent=11 // pred_fallthru
        _
      // Predicated region
      $region21: #{csp_stage_pallas.5} parent=11 // pred_check
        %p286 = pneg %p174
      $region22: #{csp_stage_pallas.5} parent=11 // pred_check_branch
        %288 = sbr.rel (%p286) target = $region24
      $region23: #{csp_stage_pallas.5} parent=11 // pred_region
        _
      $region24: #{csp_stage_pallas.5} parent=11 // pred_fallthru
        _
      // Predicated region
      $region25: #{csp_stage_pallas.5} parent=11 // pred_check
        %p289 = pneg %p195
      $region26: #{csp_stage_pallas.5} parent=11 // pred_check_branch
        %291 = sbr.rel (%p289) target = $region28
      $region27: #{csp_stage_pallas.5} parent=11 // pred_region
        _
      $region28: #{csp_stage_pallas.5} parent=11 // pred_fallthru
        _
      // Predicated region
      $region29: #{csp_stage_pallas.5} parent=11 // pred_check
        %p292 = pneg %p216
      $region30: #{csp_stage_pallas.5} parent=11 // pred_check_branch
        %294 = sbr.rel (%p292) target = $region32
      $region31: #{csp_stage_pallas.5} parent=11 // pred_region
        _
      $region32: #{csp_stage_pallas.5} parent=11 // pred_fallthru
        _
      // Predicated region
      $region33: #{csp_stage_pallas.5} parent=11 // pred_check
        %p295 = pneg %p237
      $region34: #{csp_stage_pallas.5} parent=11 // pred_check_branch
        %297 = sbr.rel (%p295) target = $region36
      $region35: #{csp_stage_pallas.5} parent=11 // pred_region
        _
      $region36: #{csp_stage_pallas.5} parent=11 // pred_fallthru
        _
    $region12: #{csp_stage_pallas.5} parent=5 // pred_fallthru
      _
    %p298 = scmp.lt.s32.totalorder %s15, 4
    // Predicated region
    $region37: #{csp_stage_pallas.5} parent=5 // pred_check
      %p299 = pneg %p298
    $region38: #{csp_stage_pallas.5} parent=5 // pred_check_branch
      %301 = sbr.rel (%p299) target = $region40
    $region39: #{csp_stage_pallas.5} parent=5 // pred_region
      // Predicated region
      $region41: #{csp_stage_pallas.5} parent=39 // pred_check
        %p302 = pneg %p49
      $region42: #{csp_stage_pallas.5} parent=39 // pred_check_branch
        %304 = sbr.rel (%p302) target = $region44
      $region43: #{csp_stage_pallas.5} parent=39 // pred_region
        %p305 = scmp.lt.s32.totalorder %s22, 1
        %s306 = scalar_select %p305, %s22, 1
        %p307 = scmp.lt.s32.totalorder %s23, 1
        %s308 = scalar_select %p307, %s23, 1
        %s309 = smul.addr %s308, 2
        %s310 = smul.addr %s306, 4
        %s311 = sadd.s32 %s309, %s310
        %s312 = smul.addr %s311, 4
        %s313 = scalar_lea.vmem %s0, %s312
      $region44: #{csp_stage_pallas.5} parent=39 // pred_fallthru
        _
      // Predicated region
      $region45: #{csp_stage_pallas.5} parent=39 // pred_check
        %p314 = pneg %p77
      $region46: #{csp_stage_pallas.5} parent=39 // pred_check_branch
        %316 = sbr.rel (%p314) target = $region48
      $region47: #{csp_stage_pallas.5} parent=39 // pred_region
        %s317 = smul.u32 8, %s23
        %p318 = scmp.lt.s32.totalorder %s22, 1
        %s319 = scalar_select %p318, %s22, 1
        %p320 = scmp.lt.s32.totalorder %s317, 15
        %s321 = scalar_select %p320, %s317, 15
        %s322 = smul.addr %s321, 2
        %s323 = smul.addr %s319, 32
        %s324 = sadd.s32 %s322, %s323
        %s325 = smul.addr %s324, 4
        %s326 = scalar_lea.vmem %s1, %s325
        %s327 = smul.u32 8, %s23
      $region48: #{csp_stage_pallas.5} parent=39 // pred_fallthru
        _
      // Predicated region
      $region49: #{csp_stage_pallas.5} parent=39 // pred_check
        %p328 = pneg %p105
      $region50: #{csp_stage_pallas.5} parent=39 // pred_check_branch
        %330 = sbr.rel (%p328) target = $region52
      $region51: #{csp_stage_pallas.5} parent=39 // pred_region
        %p331 = scmp.lt.s32.totalorder %s22, 1
        %s332 = scalar_select %p331, %s22, 1
        %p333 = scmp.lt.s32.totalorder %s23, 1
        %s334 = scalar_select %p333, %s23, 1
        %s335 = smul.addr %s334, 2
        %s336 = smul.addr %s332, 4
        %s337 = sadd.s32 %s335, %s336
        %s338 = smul.addr %s337, 4
        %s339 = scalar_lea.vmem %s2, %s338
      $region52: #{csp_stage_pallas.5} parent=39 // pred_fallthru
        _
    $region40: #{csp_stage_pallas.5} parent=5 // pred_fallthru
      _
    %p340 = scmp.le.s32.totalorder 1, %s15
    %p341 = scmp.lt.s32.totalorder %s15, 5
    %p342 = pnand %p340, %p341
    %p343 = pneg %p342
    // Predicated region
    $region53: #{csp_stage_pallas.5} parent=5 // pred_check
      _
    $region54: #{csp_stage_pallas.5} parent=5 // pred_check_branch
      %345 = sbr.rel (%p342) target = $region56
    $region55: #{csp_stage_pallas.5} parent=5 // pred_region
      %s346 = ssub.s32 %s15, 1
      %p347 = scmp.lt.s32.totalorder %s24, 1
      %s348 = scalar_select %p347, %s24, 1
      %p349 = scmp.lt.s32.totalorder %s25, 1
      %s350 = scalar_select %p349, %s25, 1
      %s351 = smul.addr %s350, 2
      %s352 = smul.addr %s348, 4
      %s353 = sadd.s32 %s351, %s352
      %s354 = smul.addr %s353, 4
      %s355 = scalar_lea.vmem %s0, %s354
      %p356 = pneg %p55
      %p357 = pneg %p52
      %s358 = smul.u32 8, %s25
      %p359 = scmp.lt.s32.totalorder %s24, 1
      %s360 = scalar_select %p359, %s24, 1
      %p361 = scmp.lt.s32.totalorder %s358, 15
      %s362 = scalar_select %p361, %s358, 15
      %s363 = smul.addr %s362, 2
      %s364 = smul.addr %s360, 32
      %s365 = sadd.s32 %s363, %s364
      %s366 = smul.addr %s365, 4
      %s367 = scalar_lea.vmem %s1, %s366
      %p368 = pneg %p83
      %p369 = pneg %p80
      %p370 = scmp.lt.s32.totalorder %s24, 1
      %s371 = scalar_select %p370, %s24, 1
      %p372 = scmp.lt.s32.totalorder %s25, 1
      %s373 = scalar_select %p372, %s25, 1
      %s374 = smul.addr %s373, 2
      %s375 = smul.addr %s371, 4
      %s376 = sadd.s32 %s374, %s375
      %s377 = smul.addr %s376, 4
      %s378 = scalar_lea.vmem %s2, %s377
      %p379 = pneg %p111
      %p380 = pneg %p108
      %p381 = pneg %p132
      %p382 = pneg %p129
      %p383 = pneg %p153
      %p384 = pneg %p150
      %p385 = pneg %p174
      %p386 = pneg %p171
      %p387 = pneg %p195
      %p388 = pneg %p192
      %p389 = pneg %p216
      %p390 = pneg %p213
      %p391 = pneg %p237
      %p392 = pneg %p234
      %p393 = pneg %p265
      %p394 = pneg %p262
      %s395 = smul.u32 8, %s25
      %p396 = scmp.lt.s32.totalorder %s24, 1
      %s397 = scalar_select %p396, %s24, 1
      %p398 = scmp.lt.s32.totalorder %s395, 15
      %s399 = scalar_select %p398, %s395, 15
      %s400 = smul.addr %s399, 2
      %s401 = smul.addr %s397, 32
      %s402 = sadd.s32 %s400, %s401
      %s403 = smul.addr %s402, 4
      %s404 = scalar_lea.vmem %s9, %s403
      %p405 = scmp.lt.s32.totalorder %s24, 1
      %s406 = scalar_select %p405, %s24, 1
      %p407 = scmp.lt.s32.totalorder %s25, 1
      %s408 = scalar_select %p407, %s25, 1
      %s409 = smul.addr %s408, 2
      %s410 = smul.addr %s406, 4
      %s411 = sadd.s32 %s409, %s410
      %s412 = smul.addr %s411, 4
      %s413 = scalar_lea.vmem %s0, %s412
      %s414 = smul.u32 8, %s25
      %p415 = scmp.lt.s32.totalorder %s24, 1
      %s416 = scalar_select %p415, %s24, 1
      %p417 = scmp.lt.s32.totalorder %s414, 15
      %s418 = scalar_select %p417, %s414, 15
      %s419 = smul.addr %s418, 2
      %s420 = smul.addr %s416, 32
      %s421 = sadd.s32 %s419, %s420
      %s422 = smul.addr %s421, 4
      %s423 = scalar_lea.vmem %s1, %s422
      %s424 = smul.u32 8, %s25
      %p425 = scmp.lt.s32.totalorder %s24, 1
      %s426 = scalar_select %p425, %s24, 1
      %p427 = scmp.lt.s32.totalorder %s25, 1
      %s428 = scalar_select %p427, %s25, 1
      %s429 = smul.addr %s428, 2
      %s430 = smul.addr %s426, 4
      %s431 = sadd.s32 %s429, %s430
      %s432 = smul.addr %s431, 4
      %s433 = scalar_lea.vmem %s2, %s432
      %s434 = smul.u32 8, %s25
      %p435 = scmp.lt.s32.totalorder %s24, 1
      %s436 = scalar_select %p435, %s24, 1
      %p437 = scmp.lt.s32.totalorder %s434, 15
      %s438 = scalar_select %p437, %s434, 15
      %s439 = smul.addr %s438, 2
      %s440 = smul.addr %s436, 32
      %s441 = sadd.s32 %s439, %s440
      %s442 = smul.addr %s441, 4
      %s443 = scalar_lea.vmem %s9, %s442
      %s444 = smul.u32 8, %s25
      %v446 = vld [vmem:[%s423] sm:$0xf]
      %v447 = vld [vmem:[%s423 + $0x4] sm:$0xf]
      %v448 = vld [vmem:[%s423 + $0x8] sm:$0xf]
      %v449 = vld [vmem:[%s423 + $0xc] sm:$0xf]
      %v450 = vld [vmem:[%s423 + $0x10] sm:$0xf]
      %v451 = vld [vmem:[%s423 + $0x14] sm:$0xf]
      %v452 = vld [vmem:[%s423 + $0x18] sm:$0xf]
      %v453 = vld [vmem:[%s423 + $0x1c] sm:$0xf]
      %v454 = vld [vmem:[%s423 + $0x20] sm:$0xf]
      %v455 = vld [vmem:[%s423 + $0x24] sm:$0xf]
      %v456 = vld [vmem:[%s423 + $0x28] sm:$0xf]
      %v457 = vld [vmem:[%s423 + $0x2c] sm:$0xf]
      %v458 = vld [vmem:[%s423 + $0x30] sm:$0xf]
      %v459 = vld [vmem:[%s423 + $0x34] sm:$0xf]
      %v460 = vld [vmem:[%s423 + $0x38] sm:$0xf]
      %v461 = vld [vmem:[%s423 + $0x3c] sm:$0xf]
      %v462 = vld [vmem:[%s413] sm:$0xf]
      %v463 = vld [vmem:[%s413 + $0x4] sm:$0xf]
      %v464 = vld [vmem:[%s433] sm:$0xf]
      %v465 = vld [vmem:[%s433 + $0x4] sm:$0xf]
      %v466 = vld [vmem:[%s3] sm:$0x3]
      %v487 = vunpack.c.l.b16 %v462
      %v488 = vunpack.c.l.b16 %v463
      %v489 = vunpack.c.l.b16 %v446
      %v490 = vunpack.c.l.b16 %v447
      %v491 = vunpack.c.l.b16 %v448
      %v492 = vunpack.c.l.b16 %v449
      %v493 = vunpack.c.l.b16 %v450
      %v494 = vunpack.c.l.b16 %v451
      %v495 = vunpack.c.l.b16 %v452
      %v496 = vunpack.c.l.b16 %v453
      %v497 = vunpack.c.l.b16 %v454
      %v498 = vunpack.c.l.b16 %v455
      %v499 = vunpack.c.l.b16 %v456
      %v500 = vunpack.c.l.b16 %v457
      %v501 = vunpack.c.l.b16 %v458
      %v502 = vunpack.c.l.b16 %v459
      %v503 = vunpack.c.l.b16 %v460
      %v504 = vunpack.c.l.b16 %v461
      %v505 = vunpack.c.l.b16 %v464
      %v506 = vunpack.c.l.b16 %v465
      %v507 = vpack.c.b16 %v488, %v487
      %v508 = vpack.c.b16 %v490, %v489
      %v509 = vpack.c.b16 %v492, %v491
      %v510 = vpack.c.b16 %v494, %v493
      %v511 = vpack.c.b16 %v496, %v495
      %v512 = vpack.c.b16 %v498, %v497
      %v513 = vpack.c.b16 %v500, %v499
      %v514 = vpack.c.b16 %v502, %v501
      %v515 = vpack.c.b16 %v504, %v503
      %v516 = vpack.c.b16 %v506, %v505
      %vm517 = vcmask 31744
      %v519 = vsel %vm517, %v507, 0
      %v522 = vsel %vm517, %v508, 0
      %v525 = vsel %vm517, %v509, 0
      %v528 = vsel %vm517, %v510, 0
      %v531 = vsel %vm517, %v511, 0
      %v534 = vsel %vm517, %v512, 0
      %v537 = vsel %vm517, %v513, 0
      %v540 = vsel %vm517, %v514, 0
      %v543 = vsel %vm517, %v515, 0
      %v546 = vsel %vm517, %v516, 0
      %vm548 = vcmask 1041408
      %v550 = vsel %vm548, %v466, 0
      %552 = vmatpush.bf16.msra.mxu0 0
      %553 = vmatpush.bf16.msra.mxu0 0
      %554 = vmatpush.bf16.msra.mxu0 0
      %555 = vmatpush.bf16.msra.mxu0 0
      %556 = vmatpush.bf16.msra.mxu0 0
      %557 = vmatpush.bf16.msra.mxu0 0
      %558 = vmatpush.bf16.msra.mxu0 0
      %559 = vmatpush.bf16.msra.mxu0 %v550
      %560 = vmatmul.bf16.gmra.mxu0 %v519
      %v561 = vpop.f32.mrf.mxu0
      %v562 = vadd.f32 0.0, %v561
      %v563 = vpop.f32.mrf.mxu0
      %v564 = vadd.f32 0.0, %v563
      %565 = vmatmul.bf16.gmra.mxu0 %v522
      %v566 = vpop.f32.mrf.mxu0
      %v567 = vadd.f32 0.0, %v566
      %v568 = vpop.f32.mrf.mxu0
      %v569 = vadd.f32 0.0, %v568
      %570 = vmatmul.bf16.gmra.mxu0 %v525
      %v571 = vpop.f32.mrf.mxu0
      %v572 = vadd.f32 0.0, %v571
      %v573 = vpop.f32.mrf.mxu0
      %v574 = vadd.f32 0.0, %v573
      %575 = vmatmul.bf16.gmra.mxu0 %v528
      %v576 = vpop.f32.mrf.mxu0
      %v577 = vadd.f32 0.0, %v576
      %v578 = vpop.f32.mrf.mxu0
      %v579 = vadd.f32 0.0, %v578
      %580 = vmatmul.bf16.gmra.mxu0 %v531
      %v581 = vpop.f32.mrf.mxu0
      %v582 = vadd.f32 0.0, %v581
      %v583 = vpop.f32.mrf.mxu0
      %v584 = vadd.f32 0.0, %v583
      %585 = vmatmul.bf16.gmra.mxu0 %v534
      %v586 = vpop.f32.mrf.mxu0
      %v587 = vadd.f32 0.0, %v586
      %v588 = vpop.f32.mrf.mxu0
      %v589 = vadd.f32 0.0, %v588
      %590 = vmatmul.bf16.gmra.mxu0 %v537
      %v591 = vpop.f32.mrf.mxu0
      %v592 = vadd.f32 0.0, %v591
      %v593 = vpop.f32.mrf.mxu0
      %v594 = vadd.f32 0.0, %v593
      %595 = vmatmul.bf16.gmra.mxu0 %v540
      %v596 = vpop.f32.mrf.mxu0
      %v597 = vadd.f32 0.0, %v596
      %v598 = vpop.f32.mrf.mxu0
      %v599 = vadd.f32 0.0, %v598
      %600 = vmatmul.bf16.gmra.mxu0 %v543
      %v601 = vpop.f32.mrf.mxu0
      %v602 = vadd.f32 0.0, %v601
      %v603 = vpop.f32.mrf.mxu0
      %v604 = vadd.f32 0.0, %v603
      %605 = vmatmul.bf16.gmra.mxu0 %v546
      %v606 = vpop.f32.mrf.mxu0
      %v607 = vadd.f32 0.0, %v606
      %v608 = vpop.f32.mrf.mxu0
      %v609 = vadd.f32 0.0, %v608
      %610 = vdwg.mxu0
      %v611 = vld [vmem:[%s4] sm:$0x1]
      %v613 = vperm.slane %v611, 0
      %v615 = vmul.f32 %v562, %v613
      %v616 = vmul.f32 %v564, %v613
      %v617 = vmul.f32 %v567, %v613
      %v618 = vmul.f32 %v569, %v613
      %v619 = vmul.f32 %v572, %v613
      %v620 = vmul.f32 %v574, %v613
      %v621 = vmul.f32 %v577, %v613
      %v622 = vmul.f32 %v579, %v613
      %v623 = vmul.f32 %v582, %v613
      %v624 = vmul.f32 %v584, %v613
      %v625 = vmul.f32 %v587, %v613
      %v626 = vmul.f32 %v589, %v613
      %v627 = vmul.f32 %v592, %v613
      %v628 = vmul.f32 %v594, %v613
      %v629 = vmul.f32 %v597, %v613
      %v630 = vmul.f32 %v599, %v613
      %v631 = vmul.f32 %v602, %v613
      %v632 = vmul.f32 %v604, %v613
      %v633 = vmul.f32 %v607, %v613
      %v634 = vmul.f32 %v609, %v613
      %v635 = vld [vmem:[%s5] sm:$0x1]
      %v637 = vperm.slane %v635, 0
      %v639 = vadd.f32 %v615, %v637
      %v640 = vadd.f32 %v616, %v637
      %v641 = vadd.f32 %v617, %v637
      %v642 = vadd.f32 %v618, %v637
      %v643 = vadd.f32 %v619, %v637
      %v644 = vadd.f32 %v620, %v637
      %v645 = vadd.f32 %v621, %v637
      %v646 = vadd.f32 %v622, %v637
      %v647 = vadd.f32 %v623, %v637
      %v648 = vadd.f32 %v624, %v637
      %v649 = vadd.f32 %v625, %v637
      %v650 = vadd.f32 %v626, %v637
      %v651 = vadd.f32 %v627, %v637
      %v652 = vadd.f32 %v628, %v637
      %v653 = vadd.f32 %v629, %v637
      %v654 = vadd.f32 %v630, %v637
      %v655 = vadd.f32 %v631, %v637
      %v656 = vadd.f32 %v632, %v637
      %v657 = vadd.f32 %v633, %v637
      %v658 = vadd.f32 %v634, %v637
      %vm659 = vcmp.gt.f32.partialorder %v639, 0.0
      %vm660 = vcmp.gt.f32.partialorder %v640, 0.0
      %vm661 = vcmp.gt.f32.partialorder %v641, 0.0
      %vm662 = vcmp.gt.f32.partialorder %v642, 0.0
      %vm663 = vcmp.gt.f32.partialorder %v643, 0.0
      %vm664 = vcmp.gt.f32.partialorder %v644, 0.0
      %vm665 = vcmp.gt.f32.partialorder %v645, 0.0
      %vm666 = vcmp.gt.f32.partialorder %v646, 0.0
      %vm667 = vcmp.gt.f32.partialorder %v647, 0.0
      %vm668 = vcmp.gt.f32.partialorder %v648, 0.0
      %vm669 = vcmp.gt.f32.partialorder %v649, 0.0
      %vm670 = vcmp.gt.f32.partialorder %v650, 0.0
      %vm671 = vcmp.gt.f32.partialorder %v651, 0.0
      %vm672 = vcmp.gt.f32.partialorder %v652, 0.0
      %vm673 = vcmp.gt.f32.partialorder %v653, 0.0
      %vm674 = vcmp.gt.f32.partialorder %v654, 0.0
      %vm675 = vcmp.gt.f32.partialorder %v655, 0.0
      %vm676 = vcmp.gt.f32.partialorder %v656, 0.0
      %vm677 = vcmp.gt.f32.partialorder %v657, 0.0
      %vm678 = vcmp.gt.f32.partialorder %v658, 0.0
      %v679 = vmul.f32 %v639, 0.1
      %v680 = vmul.f32 %v640, 0.1
      %v681 = vmul.f32 %v641, 0.1
      %v682 = vmul.f32 %v642, 0.1
      %v683 = vmul.f32 %v643, 0.1
      %v684 = vmul.f32 %v644, 0.1
      %v685 = vmul.f32 %v645, 0.1
      %v686 = vmul.f32 %v646, 0.1
      %v687 = vmul.f32 %v647, 0.1
      %v688 = vmul.f32 %v648, 0.1
      %v689 = vmul.f32 %v649, 0.1
      %v690 = vmul.f32 %v650, 0.1
      %v691 = vmul.f32 %v651, 0.1
      %v692 = vmul.f32 %v652, 0.1
      %v693 = vmul.f32 %v653, 0.1
      %v694 = vmul.f32 %v654, 0.1
      %v695 = vmul.f32 %v655, 0.1
      %v696 = vmul.f32 %v656, 0.1
      %v697 = vmul.f32 %v657, 0.1
      %v698 = vmul.f32 %v658, 0.1
      %v699 = vsel %vm659, %v639, %v679
      %v700 = vsel %vm660, %v640, %v680
      %v701 = vsel %vm661, %v641, %v681
      %v702 = vsel %vm662, %v642, %v682
      %v703 = vsel %vm663, %v643, %v683
      %v704 = vsel %vm664, %v644, %v684
      %v705 = vsel %vm665, %v645, %v685
      %v706 = vsel %vm666, %v646, %v686
      %v707 = vsel %vm667, %v647, %v687
      %v708 = vsel %vm668, %v648, %v688
      %v709 = vsel %vm669, %v649, %v689
      %v710 = vsel %vm670, %v650, %v690
      %v711 = vsel %vm671, %v651, %v691
      %v712 = vsel %vm672, %v652, %v692
      %v713 = vsel %vm673, %v653, %v693
      %v714 = vsel %vm674, %v654, %v694
      %v715 = vsel %vm675, %v655, %v695
      %v716 = vsel %vm676, %v656, %v696
      %v717 = vsel %vm677, %v657, %v697
      %v718 = vsel %vm678, %v658, %v698
      %s719 = smul.u32 %s25, 8
      %s720 = ssub.s32 %s719, 1
      %v721 = vstv %s720
      %v722 = vadd.s32 %v721, 1
      %v723 = vadd.s32 %v721, 2
      %v724 = vadd.s32 %v721, 3
      %v725 = vadd.s32 %v721, 4
      %v726 = vadd.s32 %v721, 5
      %v727 = vadd.s32 %v721, 6
      %v728 = vadd.s32 %v721, 7
      %v729 = vadd.s32 %v721, 8
      %v730 = vadd.s32 %v721, 9
      %vm731 = vcmp.ge.s32.totalorder %v721, 0
      %vm732 = vcmp.ge.s32.totalorder %v722, 0
      %vm733 = vcmp.ge.s32.totalorder %v723, 0
      %vm734 = vcmp.ge.s32.totalorder %v724, 0
      %vm735 = vcmp.ge.s32.totalorder %v725, 0
      %vm736 = vcmp.ge.s32.totalorder %v726, 0
      %vm737 = vcmp.ge.s32.totalorder %v727, 0
      %vm738 = vcmp.ge.s32.totalorder %v728, 0
      %vm739 = vcmp.ge.s32.totalorder %v729, 0
      %vm740 = vcmp.ge.s32.totalorder %v730, 0
      %vm741 = vcmp.lt.s32.totalorder %v721, 16
      %vm742 = vcmp.lt.s32.totalorder %v722, 16
      %vm743 = vcmp.lt.s32.totalorder %v723, 16
      %vm744 = vcmp.lt.s32.totalorder %v724, 16
      %vm745 = vcmp.lt.s32.totalorder %v725, 16
      %vm746 = vcmp.lt.s32.totalorder %v726, 16
      %vm747 = vcmp.lt.s32.totalorder %v727, 16
      %vm748 = vcmp.lt.s32.totalorder %v728, 16
      %vm749 = vcmp.lt.s32.totalorder %v729, 16
      %vm750 = vcmp.lt.s32.totalorder %v730, 16
      %vm751 = vmand %vm731, %vm741
      %vm752 = vmand %vm732, %vm742
      %vm753 = vmand %vm733, %vm743
      %vm754 = vmand %vm734, %vm744
      %vm755 = vmand %vm735, %vm745
      %vm756 = vmand %vm736, %vm746
      %vm757 = vmand %vm737, %vm747
      %vm758 = vmand %vm738, %vm748
      %vm759 = vmand %vm739, %vm749
      %vm760 = vmand %vm740, %vm750
      %v761 = vsel %vm751, %v699, 0.0
      %v762 = vsel %vm751, %v700, 0.0
      %v763 = vsel %vm752, %v701, 0.0
      %v764 = vsel %vm752, %v702, 0.0
      %v765 = vsel %vm753, %v703, 0.0
      %v766 = vsel %vm753, %v704, 0.0
      %v767 = vsel %vm754, %v705, 0.0
      %v768 = vsel %vm754, %v706, 0.0
      %v769 = vsel %vm755, %v707, 0.0
      %v770 = vsel %vm755, %v708, 0.0
      %v771 = vsel %vm756, %v709, 0.0
      %v772 = vsel %vm756, %v710, 0.0
      %v773 = vsel %vm757, %v711, 0.0
      %v774 = vsel %vm757, %v712, 0.0
      %v775 = vsel %vm758, %v713, 0.0
      %v776 = vsel %vm758, %v714, 0.0
      %v777 = vsel %vm759, %v715, 0.0
      %v778 = vsel %vm759, %v716, 0.0
      %v779 = vsel %vm760, %v717, 0.0
      %v780 = vsel %vm760, %v718, 0.0
      %v781 = vpack.c.bf16 %v761, %v761
      %v782 = vpack.c.bf16 %v762, %v762
      %v783 = vpack.c.bf16 %v763, %v763
      %v784 = vpack.c.bf16 %v764, %v764
      %v785 = vpack.c.bf16 %v765, %v765
      %v786 = vpack.c.bf16 %v766, %v766
      %v787 = vpack.c.bf16 %v767, %v767
      %v788 = vpack.c.bf16 %v768, %v768
      %v789 = vpack.c.bf16 %v769, %v769
      %v790 = vpack.c.bf16 %v770, %v770
      %v791 = vpack.c.bf16 %v771, %v771
      %v792 = vpack.c.bf16 %v772, %v772
      %v793 = vpack.c.bf16 %v773, %v773
      %v794 = vpack.c.bf16 %v774, %v774
      %v795 = vpack.c.bf16 %v775, %v775
      %v796 = vpack.c.bf16 %v776, %v776
      %v797 = vpack.c.bf16 %v777, %v777
      %v798 = vpack.c.bf16 %v778, %v778
      %v799 = vpack.c.bf16 %v779, %v779
      %v800 = vpack.c.bf16 %v780, %v780
      %v821 = vunpack.c.l.b16 %v781
      %v822 = vunpack.c.l.b16 %v782
      %v823 = vunpack.c.l.b16 %v783
      %v824 = vunpack.c.l.b16 %v784
      %v825 = vunpack.c.l.b16 %v785
      %v826 = vunpack.c.l.b16 %v786
      %v827 = vunpack.c.l.b16 %v787
      %v828 = vunpack.c.l.b16 %v788
      %v829 = vunpack.c.l.b16 %v789
      %v830 = vunpack.c.l.b16 %v790
      %v831 = vunpack.c.l.b16 %v791
      %v832 = vunpack.c.l.b16 %v792
      %v833 = vunpack.c.l.b16 %v793
      %v834 = vunpack.c.l.b16 %v794
      %v835 = vunpack.c.l.b16 %v795
      %v836 = vunpack.c.l.b16 %v796
      %v837 = vunpack.c.l.b16 %v797
      %v838 = vunpack.c.l.b16 %v798
      %v839 = vunpack.c.l.b16 %v799
      %v840 = vunpack.c.l.b16 %v800
      %v841 = vpack.c.b16 %v822, %v821
      %v842 = vpack.c.b16 %v824, %v823
      %v843 = vpack.c.b16 %v826, %v825
      %v844 = vpack.c.b16 %v828, %v827
      %v845 = vpack.c.b16 %v830, %v829
      %v846 = vpack.c.b16 %v832, %v831
      %v847 = vpack.c.b16 %v834, %v833
      %v848 = vpack.c.b16 %v836, %v835
      %v849 = vpack.c.b16 %v838, %v837
      %v850 = vpack.c.b16 %v840, %v839
      %v852 = vshrl.u32 %v841, 16
      %v854 = vrot.slane %v852, 7
      %v855 = vshll.u32 %v841, 16
      %v857 = vor.u32 %v854, %v855
      %v859 = vshrl.u32 %v842, 16
      %v861 = vrot.slane %v859, 7
      %v862 = vshll.u32 %v842, 16
      %v864 = vor.u32 %v861, %v862
      %v866 = vshrl.u32 %v843, 16
      %v868 = vrot.slane %v866, 7
      %v869 = vshll.u32 %v843, 16
      %v871 = vor.u32 %v868, %v869
      %v873 = vshrl.u32 %v844, 16
      %v875 = vrot.slane %v873, 7
      %v876 = vshll.u32 %v844, 16
      %v878 = vor.u32 %v875, %v876
      %v880 = vshrl.u32 %v845, 16
      %v882 = vrot.slane %v880, 7
      %v883 = vshll.u32 %v845, 16
      %v885 = vor.u32 %v882, %v883
      %v887 = vshrl.u32 %v846, 16
      %v889 = vrot.slane %v887, 7
      %v890 = vshll.u32 %v846, 16
      %v892 = vor.u32 %v889, %v890
      %v894 = vshrl.u32 %v847, 16
      %v896 = vrot.slane %v894, 7
      %v897 = vshll.u32 %v847, 16
      %v899 = vor.u32 %v896, %v897
      %v901 = vshrl.u32 %v848, 16
      %v903 = vrot.slane %v901, 7
      %v904 = vshll.u32 %v848, 16
      %v906 = vor.u32 %v903, %v904
      %v908 = vshrl.u32 %v849, 16
      %v910 = vrot.slane %v908, 7
      %v911 = vshll.u32 %v849, 16
      %v913 = vor.u32 %v910, %v911
      %v915 = vshrl.u32 %v850, 16
      %v917 = vrot.slane %v915, 7
      %v918 = vshll.u32 %v850, 16
      %v920 = vor.u32 %v917, %v918
      %vm941 = vcmask 1040384
      %vm942 = vsmask.f32 256
      %vm943 = vmand %vm941, %vm942
      %v944 = vsel %vm943, 0, %v857
      %v945 = vsel %vm943, 0, %v864
      %v946 = vsel %vm943, 0, %v871
      %v947 = vsel %vm943, 0, %v878
      %v948 = vsel %vm943, 0, %v885
      %v949 = vsel %vm943, 0, %v892
      %v950 = vsel %vm943, 0, %v899
      %v951 = vsel %vm943, 0, %v906
      %v952 = vsel %vm943, 0, %v913
      %v953 = vsel %vm943, 0, %v920
      %v954 = vsel %vm943, %v854, 0
      %v955 = vsel %vm943, %v861, 0
      %v956 = vsel %vm943, %v868, 0
      %v957 = vsel %vm943, %v875, 0
      %v958 = vsel %vm943, %v882, 0
      %v959 = vsel %vm943, %v889, 0
      %v960 = vsel %vm943, %v896, 0
      %v961 = vsel %vm943, %v903, 0
      %v962 = vsel %vm943, %v910, 0
      %v963 = vsel %vm943, %v917, 0
      %vm964 = vsmask.f32 7424
      %v966 = vshrl.u32 %v944, 16
      %v968 = vshll.u32 %v944, 16
      %v970 = vrot.slane %v968, 1
      %v971 = vor.u32 %v966, %v970
      %v973 = vshll.u32 %v954, 16
      %v975 = vrot.slane %v973, 1
      %v976 = vsel %vm964, %v971, %v975
      %v978 = vshrl.u32 %v945, 16
      %v980 = vshll.u32 %v945, 16
      %v982 = vrot.slane %v980, 1
      %v983 = vor.u32 %v978, %v982
      %v985 = vshll.u32 %v955, 16
      %v987 = vrot.slane %v985, 1
      %v988 = vsel %vm964, %v983, %v987
      %v990 = vshrl.u32 %v946, 16
      %v992 = vshll.u32 %v946, 16
      %v994 = vrot.slane %v992, 1
      %v995 = vor.u32 %v990, %v994
      %v997 = vshll.u32 %v956, 16
      %v999 = vrot.slane %v997, 1
      %v1000 = vsel %vm964, %v995, %v999
      %v1002 = vshrl.u32 %v947, 16
      %v1004 = vshll.u32 %v947, 16
      %v1006 = vrot.slane %v1004, 1
      %v1007 = vor.u32 %v1002, %v1006
      %v1009 = vshll.u32 %v957, 16
      %v1011 = vrot.slane %v1009, 1
      %v1012 = vsel %vm964, %v1007, %v1011
      %v1014 = vshrl.u32 %v948, 16
      %v1016 = vshll.u32 %v948, 16
      %v1018 = vrot.slane %v1016, 1
      %v1019 = vor.u32 %v1014, %v1018
      %v1021 = vshll.u32 %v958, 16
      %v1023 = vrot.slane %v1021, 1
      %v1024 = vsel %vm964, %v1019, %v1023
      %v1026 = vshrl.u32 %v949, 16
      %v1028 = vshll.u32 %v949, 16
      %v1030 = vrot.slane %v1028, 1
      %v1031 = vor.u32 %v1026, %v1030
      %v1033 = vshll.u32 %v959, 16
      %v1035 = vrot.slane %v1033, 1
      %v1036 = vsel %vm964, %v1031, %v1035
      %v1038 = vshrl.u32 %v950, 16
      %v1040 = vshll.u32 %v950, 16
      %v1042 = vrot.slane %v1040, 1
      %v1043 = vor.u32 %v1038, %v1042
      %v1045 = vshll.u32 %v960, 16
      %v1047 = vrot.slane %v1045, 1
      %v1048 = vsel %vm964, %v1043, %v1047
      %v1050 = vshrl.u32 %v951, 16
      %v1052 = vshll.u32 %v951, 16
      %v1054 = vrot.slane %v1052, 1
      %v1055 = vor.u32 %v1050, %v1054
      %v1057 = vshll.u32 %v961, 16
      %v1059 = vrot.slane %v1057, 1
      %v1060 = vsel %vm964, %v1055, %v1059
      %1061 = vrot.lane.b32.xlu0 %v976, 4
      %v1062 = vpop.permute.xlu0 %1061
      %1063 = vrot.lane.b32.xlu0 %v988, 4
      %v1064 = vpop.permute.xlu0 %1063
      %1065 = vrot.lane.b32.xlu0 %v1000, 4
      %v1066 = vpop.permute.xlu0 %1065
      %1067 = vrot.lane.b32.xlu0 %v1012, 4
      %v1068 = vpop.permute.xlu0 %1067
      %1069 = vrot.lane.b32.xlu0 %v1024, 4
      %v1070 = vpop.permute.xlu0 %1069
      %1071 = vrot.lane.b32.xlu0 %v1036, 4
      %v1072 = vpop.permute.xlu0 %1071
      %1073 = vrot.lane.b32.xlu0 %v1048, 4
      %v1074 = vpop.permute.xlu0 %1073
      %1075 = vrot.lane.b32.xlu0 %v1060, 4
      %v1076 = vpop.permute.xlu0 %1075
      %vm1093 = vcmask 1046528
      %v1094 = vrot.slane %v944, 1
      %v1095 = vrot.slane %v954, 1
      %v1096 = vsel %vm1093, %v1094, %v1095
      %v1097 = vrot.slane %v945, 1
      %v1098 = vrot.slane %v955, 1
      %v1099 = vsel %vm1093, %v1097, %v1098
      %v1100 = vrot.slane %v946, 1
      %v1101 = vrot.slane %v956, 1
      %v1102 = vsel %vm1093, %v1100, %v1101
      %v1103 = vrot.slane %v947, 1
      %v1104 = vrot.slane %v957, 1
      %v1105 = vsel %vm1093, %v1103, %v1104
      %v1106 = vrot.slane %v948, 1
      %v1107 = vrot.slane %v958, 1
      %v1108 = vsel %vm1093, %v1106, %v1107
      %v1109 = vrot.slane %v949, 1
      %v1110 = vrot.slane %v959, 1
      %v1111 = vsel %vm1093, %v1109, %v1110
      %v1112 = vrot.slane %v950, 1
      %v1113 = vrot.slane %v960, 1
      %v1114 = vsel %vm1093, %v1112, %v1113
      %v1115 = vrot.slane %v951, 1
      %v1116 = vrot.slane %v961, 1
      %v1117 = vsel %vm1093, %v1115, %v1116
      %1118 = vrot.lane.b32.xlu0 %v1096, 8
      %v1119 = vpop.permute.xlu0 %1118
      %1120 = vrot.lane.b32.xlu0 %v1099, 8
      %v1121 = vpop.permute.xlu0 %1120
      %1122 = vrot.lane.b32.xlu0 %v1102, 8
      %v1123 = vpop.permute.xlu0 %1122
      %1124 = vrot.lane.b32.xlu0 %v1105, 8
      %v1125 = vpop.permute.xlu0 %1124
      %1126 = vrot.lane.b32.xlu0 %v1108, 8
      %v1127 = vpop.permute.xlu0 %1126
      %1128 = vrot.lane.b32.xlu0 %v1111, 8
      %v1129 = vpop.permute.xlu0 %1128
      %1130 = vrot.lane.b32.xlu0 %v1114, 8
      %v1131 = vpop.permute.xlu0 %1130
      %1132 = vrot.lane.b32.xlu0 %v1117, 8
      %v1133 = vpop.permute.xlu0 %1132
      %v1135 = vsel %vm517, %v944, %v1062
      %v1137 = vsel %vm517, %v945, %v1064
      %v1139 = vsel %vm517, %v946, %v1066
      %v1141 = vsel %vm517, %v947, %v1068
      %v1143 = vsel %vm517, %v948, %v1070
      %v1145 = vsel %vm517, %v949, %v1072
      %v1147 = vsel %vm517, %v950, %v1074
      %v1149 = vsel %vm517, %v951, %v1076
      %vm1150 = vcmask 64512
      %v1152 = vsel %vm1150, %v1135, %v1119
      %v1154 = vsel %vm1150, %v1137, %v1121
      %v1156 = vsel %vm1150, %v1139, %v1123
      %v1158 = vsel %vm1150, %v1141, %v1125
      %v1160 = vsel %vm1150, %v1143, %v1127
      %v1162 = vsel %vm1150, %v1145, %v1129
      %v1164 = vsel %vm1150, %v1147, %v1131
      %v1166 = vsel %vm1150, %v1149, %v1133
      %v1167 = vld [vmem:[%s6] sm:$0xf]
      %v1168 = vld [vmem:[%s6 + $0x4] sm:$0x3]
      %v1170 = vshrl.u32 %v952, 16
      %v1172 = vshll.u32 %v952, 16
      %v1174 = vrot.slane %v1172, 1
      %v1175 = vor.u32 %v1170, %v1174
      %v1177 = vshll.u32 %v962, 16
      %v1179 = vrot.slane %v1177, 1
      %v1180 = vsel %vm964, %v1175, %v1179
      %1181 = vrot.lane.b32.xlu0 %v1180, 4
      %v1182 = vpop.permute.xlu0 %1181
      %v1185 = vrot.slane %v952, 1
      %v1186 = vrot.slane %v962, 1
      %v1187 = vsel %vm1093, %v1185, %v1186
      %1188 = vrot.lane.b32.xlu0 %v1187, 8
      %v1189 = vpop.permute.xlu0 %1188
      %v1191 = vsel %vm517, %v952, %v1182
      %v1193 = vsel %vm1150, %v1191, %v1189
      %s1194 = scalar_lea.vmem %s6, 8
      %v1195 = vld [vmem:[%s1194] sm:$0xf]
      %v1196 = vld [vmem:[%s1194 + $0x4] sm:$0x3]
      %v1199 = vunpack.c.l.b16 %v1195
      %v1200 = vunpack.c.l.b16 %v1196
      %v1201 = vpack.c.b16 %v1200, %v1199
      %vm1202 = vcmask 97280
      %v1203 = vsel %vm1202, %v1154, 0
      %v1205 = vsel %vm1202, %v1156, 0
      %v1207 = vsel %vm1202, %v1158, 0
      %v1209 = vsel %vm1202, %v1160, 0
      %v1211 = vsel %vm1202, %v1162, 0
      %v1213 = vsel %vm1202, %v1164, 0
      %v1215 = vsel %vm1202, %v1166, 0
      %v1217 = vsel %vm1202, %v1193, 0
      %vm1219 = vcmask 1045504
      %v1221 = vsel %vm1219, %v1201, 0
      %1223 = vmatpush.bf16.msra.mxu0 0
      %1224 = vmatpush.bf16.msra.mxu0 0
      %1225 = vmatpush.bf16.msra.mxu0 0
      %1226 = vmatpush.bf16.msra.mxu0 0
      %1227 = vmatpush.bf16.msra.mxu0 0
      %1228 = vmatpush.bf16.msra.mxu0 0
      %1229 = vmatpush.bf16.msra.mxu0 0
      %1230 = vmatpush.bf16.msra.mxu0 %v1221
      %1231 = vmatmul.bf16.gmra.mxu0 %v1203
      %v1232 = vpop.f32.mrf.mxu0
      %v1233 = vadd.f32 0.0, %v1232
      %v1234 = vpop.f32.mrf.mxu0
      %v1235 = vadd.f32 0.0, %v1234
      %1236 = vmatmul.bf16.gmra.mxu0 %v1205
      %v1237 = vpop.f32.mrf.mxu0
      %v1238 = vadd.f32 0.0, %v1237
      %v1239 = vpop.f32.mrf.mxu0
      %v1240 = vadd.f32 0.0, %v1239
      %1241 = vmatmul.bf16.gmra.mxu0 %v1207
      %v1242 = vpop.f32.mrf.mxu0
      %v1243 = vadd.f32 0.0, %v1242
      %v1244 = vpop.f32.mrf.mxu0
      %v1245 = vadd.f32 0.0, %v1244
      %1246 = vmatmul.bf16.gmra.mxu0 %v1209
      %v1247 = vpop.f32.mrf.mxu0
      %v1248 = vadd.f32 0.0, %v1247
      %v1249 = vpop.f32.mrf.mxu0
      %v1250 = vadd.f32 0.0, %v1249
      %1251 = vmatmul.bf16.gmra.mxu0 %v1211
      %v1252 = vpop.f32.mrf.mxu0
      %v1253 = vadd.f32 0.0, %v1252
      %v1254 = vpop.f32.mrf.mxu0
      %v1255 = vadd.f32 0.0, %v1254
      %1256 = vmatmul.bf16.gmra.mxu0 %v1213
      %v1257 = vpop.f32.mrf.mxu0
      %v1258 = vadd.f32 0.0, %v1257
      %v1259 = vpop.f32.mrf.mxu0
      %v1260 = vadd.f32 0.0, %v1259
      %1261 = vmatmul.bf16.gmra.mxu0 %v1215
      %v1262 = vpop.f32.mrf.mxu0
      %v1263 = vadd.f32 0.0, %v1262
      %v1264 = vpop.f32.mrf.mxu0
      %v1265 = vadd.f32 0.0, %v1264
      %1266 = vmatmul.bf16.gmra.mxu0 %v1217
      %v1267 = vpop.f32.mrf.mxu0
      %v1268 = vadd.f32 0.0, %v1267
      %v1269 = vpop.f32.mrf.mxu0
      %v1270 = vadd.f32 0.0, %v1269
      %1271 = vdwg.mxu0
      %v1274 = vunpack.c.l.b16 %v1167
      %v1275 = vunpack.c.l.b16 %v1168
      %v1276 = vpack.c.b16 %v1275, %v1274
      %v1277 = vsel %vm1202, %v1152, 0
      %v1280 = vsel %vm1219, %v1276, 0
      %1282 = vmatpush.bf16.msra.mxu0 0
      %1283 = vmatpush.bf16.msra.mxu0 0
      %1284 = vmatpush.bf16.msra.mxu0 0
      %1285 = vmatpush.bf16.msra.mxu0 0
      %1286 = vmatpush.bf16.msra.mxu0 0
      %1287 = vmatpush.bf16.msra.mxu0 0
      %1288 = vmatpush.bf16.msra.mxu0 0
      %1289 = vmatpush.bf16.msra.mxu0 %v1280
      %1290 = vmatmul.bf16.gmra.mxu0 %v1277
      %v1291 = vpop.f32.mrf.mxu0
      %v1292 = vadd.f32 %v1233, %v1291
      %v1293 = vpop.f32.mrf.mxu0
      %v1294 = vadd.f32 %v1235, %v1293
      %1295 = vmatmul.bf16.gmra.mxu0 %v1203
      %v1296 = vpop.f32.mrf.mxu0
      %v1297 = vadd.f32 %v1238, %v1296
      %v1298 = vpop.f32.mrf.mxu0
      %v1299 = vadd.f32 %v1240, %v1298
      %1300 = vmatmul.bf16.gmra.mxu0 %v1205
      %v1301 = vpop.f32.mrf.mxu0
      %v1302 = vadd.f32 %v1243, %v1301
      %v1303 = vpop.f32.mrf.mxu0
      %v1304 = vadd.f32 %v1245, %v1303
      %1305 = vmatmul.bf16.gmra.mxu0 %v1207
      %v1306 = vpop.f32.mrf.mxu0
      %v1307 = vadd.f32 %v1248, %v1306
      %v1308 = vpop.f32.mrf.mxu0
      %v1309 = vadd.f32 %v1250, %v1308
      %1310 = vmatmul.bf16.gmra.mxu0 %v1209
      %v1311 = vpop.f32.mrf.mxu0
      %v1312 = vadd.f32 %v1253, %v1311
      %v1313 = vpop.f32.mrf.mxu0
      %v1314 = vadd.f32 %v1255, %v1313
      %1315 = vmatmul.bf16.gmra.mxu0 %v1211
      %v1316 = vpop.f32.mrf.mxu0
      %v1317 = vadd.f32 %v1258, %v1316
      %v1318 = vpop.f32.mrf.mxu0
      %v1319 = vadd.f32 %v1260, %v1318
      %1320 = vmatmul.bf16.gmra.mxu0 %v1213
      %v1321 = vpop.f32.mrf.mxu0
      %v1322 = vadd.f32 %v1263, %v1321
      %v1323 = vpop.f32.mrf.mxu0
      %v1324 = vadd.f32 %v1265, %v1323
      %1325 = vmatmul.bf16.gmra.mxu0 %v1215
      %v1326 = vpop.f32.mrf.mxu0
      %v1327 = vadd.f32 %v1268, %v1326
      %v1328 = vpop.f32.mrf.mxu0
      %v1329 = vadd.f32 %v1270, %v1328
      %1330 = vdwg.mxu0
      %v1332 = vshrl.u32 %v953, 16
      %v1334 = vshll.u32 %v953, 16
      %v1336 = vrot.slane %v1334, 1
      %v1337 = vor.u32 %v1332, %v1336
      %v1339 = vshll.u32 %v963, 16
      %v1341 = vrot.slane %v1339, 1
      %v1342 = vsel %vm964, %v1337, %v1341
      %1343 = vrot.lane.b32.xlu0 %v1342, 4
      %v1344 = vpop.permute.xlu0 %1343
      %v1347 = vrot.slane %v953, 1
      %v1348 = vrot.slane %v963, 1
      %v1349 = vsel %vm1093, %v1347, %v1348
      %1350 = vrot.lane.b32.xlu0 %v1349, 8
      %v1351 = vpop.permute.xlu0 %1350
      %v1353 = vsel %vm517, %v953, %v1344
      %v1355 = vsel %vm1150, %v1353, %v1351
      %s1356 = scalar_lea.vmem %s6, 16
      %v1357 = vld [vmem:[%s1356] sm:$0xf]
      %v1358 = vld [vmem:[%s1356 + $0x4] sm:$0x3]
      %v1361 = vunpack.c.l.b16 %v1357
      %v1362 = vunpack.c.l.b16 %v1358
      %v1363 = vpack.c.b16 %v1362, %v1361
      %v1364 = vsel %vm1202, %v1355, 0
      %v1367 = vsel %vm1219, %v1363, 0
      %1369 = vmatpush.bf16.msra.mxu0 0
      %1370 = vmatpush.bf16.msra.mxu0 0
      %1371 = vmatpush.bf16.msra.mxu0 0
      %1372 = vmatpush.bf16.msra.mxu0 0
      %1373 = vmatpush.bf16.msra.mxu0 0
      %1374 = vmatpush.bf16.msra.mxu0 0
      %1375 = vmatpush.bf16.msra.mxu0 0
      %1376 = vmatpush.bf16.msra.mxu0 %v1367
      %1377 = vmatmul.bf16.gmra.mxu0 %v1205
      %v1378 = vpop.f32.mrf.mxu0
      %v1379 = vadd.f32 0.0, %v1378
      %v1380 = vpop.f32.mrf.mxu0
      %v1381 = vadd.f32 0.0, %v1380
      %1382 = vmatmul.bf16.gmra.mxu0 %v1207
      %v1383 = vpop.f32.mrf.mxu0
      %v1384 = vadd.f32 0.0, %v1383
      %v1385 = vpop.f32.mrf.mxu0
      %v1386 = vadd.f32 0.0, %v1385
      %1387 = vmatmul.bf16.gmra.mxu0 %v1209
      %v1388 = vpop.f32.mrf.mxu0
      %v1389 = vadd.f32 0.0, %v1388
      %v1390 = vpop.f32.mrf.mxu0
      %v1391 = vadd.f32 0.0, %v1390
      %1392 = vmatmul.bf16.gmra.mxu0 %v1211
      %v1393 = vpop.f32.mrf.mxu0
      %v1394 = vadd.f32 0.0, %v1393
      %v1395 = vpop.f32.mrf.mxu0
      %v1396 = vadd.f32 0.0, %v1395
      %1397 = vmatmul.bf16.gmra.mxu0 %v1213
      %v1398 = vpop.f32.mrf.mxu0
      %v1399 = vadd.f32 0.0, %v1398
      %v1400 = vpop.f32.mrf.mxu0
      %v1401 = vadd.f32 0.0, %v1400
      %1402 = vmatmul.bf16.gmra.mxu0 %v1215
      %v1403 = vpop.f32.mrf.mxu0
      %v1404 = vadd.f32 0.0, %v1403
      %v1405 = vpop.f32.mrf.mxu0
      %v1406 = vadd.f32 0.0, %v1405
      %1407 = vmatmul.bf16.gmra.mxu0 %v1217
      %v1408 = vpop.f32.mrf.mxu0
      %v1409 = vadd.f32 0.0, %v1408
      %v1410 = vpop.f32.mrf.mxu0
      %v1411 = vadd.f32 0.0, %v1410
      %1412 = vmatmul.bf16.gmra.mxu0 %v1364
      %v1413 = vpop.f32.mrf.mxu0
      %v1414 = vadd.f32 0.0, %v1413
      %v1415 = vpop.f32.mrf.mxu0
      %v1416 = vadd.f32 0.0, %v1415
      %1417 = vdwg.mxu0
      %v1418 = vadd.f32 %v1292, %v1379
      %v1419 = vadd.f32 %v1294, %v1381
      %v1420 = vadd.f32 %v1297, %v1384
      %v1421 = vadd.f32 %v1299, %v1386
      %v1422 = vadd.f32 %v1302, %v1389
      %v1423 = vadd.f32 %v1304, %v1391
      %v1424 = vadd.f32 %v1307, %v1394
      %v1425 = vadd.f32 %v1309, %v1396
      %v1426 = vadd.f32 %v1312, %v1399
      %v1427 = vadd.f32 %v1314, %v1401
      %v1428 = vadd.f32 %v1317, %v1404
      %v1429 = vadd.f32 %v1319, %v1406
      %v1430 = vadd.f32 %v1322, %v1409
      %v1431 = vadd.f32 %v1324, %v1411
      %v1432 = vadd.f32 %v1327, %v1414
      %v1433 = vadd.f32 %v1329, %v1416
      %v1434 = vld [vmem:[%s7] sm:$0x1]
      %v1436 = vperm.slane %v1434, 0
      %v1438 = vmul.f32 %v1418, %v1436
      %v1439 = vmul.f32 %v1419, %v1436
      %v1440 = vmul.f32 %v1420, %v1436
      %v1441 = vmul.f32 %v1421, %v1436
      %v1442 = vmul.f32 %v1422, %v1436
      %v1443 = vmul.f32 %v1423, %v1436
      %v1444 = vmul.f32 %v1424, %v1436
      %v1445 = vmul.f32 %v1425, %v1436
      %v1446 = vmul.f32 %v1426, %v1436
      %v1447 = vmul.f32 %v1427, %v1436
      %v1448 = vmul.f32 %v1428, %v1436
      %v1449 = vmul.f32 %v1429, %v1436
      %v1450 = vmul.f32 %v1430, %v1436
      %v1451 = vmul.f32 %v1431, %v1436
      %v1452 = vmul.f32 %v1432, %v1436
      %v1453 = vmul.f32 %v1433, %v1436
      %v1454 = vld [vmem:[%s8] sm:$0x1]
      %v1456 = vperm.slane %v1454, 0
      %v1458 = vadd.f32 %v1438, %v1456
      %v1459 = vadd.f32 %v1439, %v1456
      %v1460 = vadd.f32 %v1440, %v1456
      %v1461 = vadd.f32 %v1441, %v1456
      %v1462 = vadd.f32 %v1442, %v1456
      %v1463 = vadd.f32 %v1443, %v1456
      %v1464 = vadd.f32 %v1444, %v1456
      %v1465 = vadd.f32 %v1445, %v1456
      %v1466 = vadd.f32 %v1446, %v1456
      %v1467 = vadd.f32 %v1447, %v1456
      %v1468 = vadd.f32 %v1448, %v1456
      %v1469 = vadd.f32 %v1449, %v1456
      %v1470 = vadd.f32 %v1450, %v1456
      %v1471 = vadd.f32 %v1451, %v1456
      %v1472 = vadd.f32 %v1452, %v1456
      %v1473 = vadd.f32 %v1453, %v1456
      %v1474 = vunpack.c.l.bf16 %v446
      %v1475 = vunpack.c.l.bf16 %v447
      %v1476 = vunpack.c.l.bf16 %v448
      %v1477 = vunpack.c.l.bf16 %v449
      %v1478 = vunpack.c.l.bf16 %v450
      %v1479 = vunpack.c.l.bf16 %v451
      %v1480 = vunpack.c.l.bf16 %v452
      %v1481 = vunpack.c.l.bf16 %v453
      %v1482 = vunpack.c.l.bf16 %v454
      %v1483 = vunpack.c.l.bf16 %v455
      %v1484 = vunpack.c.l.bf16 %v456
      %v1485 = vunpack.c.l.bf16 %v457
      %v1486 = vunpack.c.l.bf16 %v458
      %v1487 = vunpack.c.l.bf16 %v459
      %v1488 = vunpack.c.l.bf16 %v460
      %v1489 = vunpack.c.l.bf16 %v461
      %v1490 = vadd.f32 %v1458, %v1474
      %v1491 = vadd.f32 %v1459, %v1475
      %v1492 = vadd.f32 %v1460, %v1476
      %v1493 = vadd.f32 %v1461, %v1477
      %v1494 = vadd.f32 %v1462, %v1478
      %v1495 = vadd.f32 %v1463, %v1479
      %v1496 = vadd.f32 %v1464, %v1480
      %v1497 = vadd.f32 %v1465, %v1481
      %v1498 = vadd.f32 %v1466, %v1482
      %v1499 = vadd.f32 %v1467, %v1483
      %v1500 = vadd.f32 %v1468, %v1484
      %v1501 = vadd.f32 %v1469, %v1485
      %v1502 = vadd.f32 %v1470, %v1486
      %v1503 = vadd.f32 %v1471, %v1487
      %v1504 = vadd.f32 %v1472, %v1488
      %v1505 = vadd.f32 %v1473, %v1489
      %vm1506 = vcmp.gt.f32.partialorder %v1490, 0.0
      %vm1507 = vcmp.gt.f32.partialorder %v1491, 0.0
      %vm1508 = vcmp.gt.f32.partialorder %v1492, 0.0
      %vm1509 = vcmp.gt.f32.partialorder %v1493, 0.0
      %vm1510 = vcmp.gt.f32.partialorder %v1494, 0.0
      %vm1511 = vcmp.gt.f32.partialorder %v1495, 0.0
      %vm1512 = vcmp.gt.f32.partialorder %v1496, 0.0
      %vm1513 = vcmp.gt.f32.partialorder %v1497, 0.0
      %vm1514 = vcmp.gt.f32.partialorder %v1498, 0.0
      %vm1515 = vcmp.gt.f32.partialorder %v1499, 0.0
      %vm1516 = vcmp.gt.f32.partialorder %v1500, 0.0
      %vm1517 = vcmp.gt.f32.partialorder %v1501, 0.0
      %vm1518 = vcmp.gt.f32.partialorder %v1502, 0.0
      %vm1519 = vcmp.gt.f32.partialorder %v1503, 0.0
      %vm1520 = vcmp.gt.f32.partialorder %v1504, 0.0
      %vm1521 = vcmp.gt.f32.partialorder %v1505, 0.0
      %v1522 = vmul.f32 %v1490, 0.1
      %v1523 = vmul.f32 %v1491, 0.1
      %v1524 = vmul.f32 %v1492, 0.1
      %v1525 = vmul.f32 %v1493, 0.1
      %v1526 = vmul.f32 %v1494, 0.1
      %v1527 = vmul.f32 %v1495, 0.1
      %v1528 = vmul.f32 %v1496, 0.1
      %v1529 = vmul.f32 %v1497, 0.1
      %v1530 = vmul.f32 %v1498, 0.1
      %v1531 = vmul.f32 %v1499, 0.1
      %v1532 = vmul.f32 %v1500, 0.1
      %v1533 = vmul.f32 %v1501, 0.1
      %v1534 = vmul.f32 %v1502, 0.1
      %v1535 = vmul.f32 %v1503, 0.1
      %v1536 = vmul.f32 %v1504, 0.1
      %v1537 = vmul.f32 %v1505, 0.1
      %v1538 = vsel %vm1506, %v1490, %v1522
      %v1539 = vsel %vm1507, %v1491, %v1523
      %v1540 = vsel %vm1508, %v1492, %v1524
      %v1541 = vsel %vm1509, %v1493, %v1525
      %v1542 = vsel %vm1510, %v1494, %v1526
      %v1543 = vsel %vm1511, %v1495, %v1527
      %v1544 = vsel %vm1512, %v1496, %v1528
      %v1545 = vsel %vm1513, %v1497, %v1529
      %v1546 = vsel %vm1514, %v1498, %v1530
      %v1547 = vsel %vm1515, %v1499, %v1531
      %v1548 = vsel %vm1516, %v1500, %v1532
      %v1549 = vsel %vm1517, %v1501, %v1533
      %v1550 = vsel %vm1518, %v1502, %v1534
      %v1551 = vsel %vm1519, %v1503, %v1535
      %v1552 = vsel %vm1520, %v1504, %v1536
      %v1553 = vsel %vm1521, %v1505, %v1537
      %v1554 = vpack.c.bf16 %v1538, %v1538
      %v1555 = vpack.c.bf16 %v1539, %v1539
      %v1556 = vpack.c.bf16 %v1540, %v1540
      %v1557 = vpack.c.bf16 %v1541, %v1541
      %v1558 = vpack.c.bf16 %v1542, %v1542
      %v1559 = vpack.c.bf16 %v1543, %v1543
      %v1560 = vpack.c.bf16 %v1544, %v1544
      %v1561 = vpack.c.bf16 %v1545, %v1545
      %v1562 = vpack.c.bf16 %v1546, %v1546
      %v1563 = vpack.c.bf16 %v1547, %v1547
      %v1564 = vpack.c.bf16 %v1548, %v1548
      %v1565 = vpack.c.bf16 %v1549, %v1549
      %v1566 = vpack.c.bf16 %v1550, %v1550
      %v1567 = vpack.c.bf16 %v1551, %v1551
      %v1568 = vpack.c.bf16 %v1552, %v1552
      %v1569 = vpack.c.bf16 %v1553, %v1553
      %vm1570 = vcmask 27648
      %1571 = vst.msk [vmem:[%s443] sm:$0xf] %vm1570, %v1554
      %1572 = vst.msk [vmem:[%s443 + $0x4] sm:$0xf] %vm1570, %v1555
      %1573 = vst.msk [vmem:[%s443 + $0x8] sm:$0xf] %vm1570, %v1556
      %1574 = vst.msk [vmem:[%s443 + $0xc] sm:$0xf] %vm1570, %v1557
      %1575 = vst.msk [vmem:[%s443 + $0x10] sm:$0xf] %vm1570, %v1558
      %1576 = vst.msk [vmem:[%s443 + $0x14] sm:$0xf] %vm1570, %v1559
      %1577 = vst.msk [vmem:[%s443 + $0x18] sm:$0xf] %vm1570, %v1560
      %1578 = vst.msk [vmem:[%s443 + $0x1c] sm:$0xf] %vm1570, %v1561
      %1579 = vst.msk [vmem:[%s443 + $0x20] sm:$0xf] %vm1570, %v1562
      %1580 = vst.msk [vmem:[%s443 + $0x24] sm:$0xf] %vm1570, %v1563
      %1581 = vst.msk [vmem:[%s443 + $0x28] sm:$0xf] %vm1570, %v1564
      %1582 = vst.msk [vmem:[%s443 + $0x2c] sm:$0xf] %vm1570, %v1565
      %1583 = vst.msk [vmem:[%s443 + $0x30] sm:$0xf] %vm1570, %v1566
      %1584 = vst.msk [vmem:[%s443 + $0x34] sm:$0xf] %vm1570, %v1567
      %1585 = vst.msk [vmem:[%s443 + $0x38] sm:$0xf] %vm1570, %v1568
      %1586 = vst.msk [vmem:[%s443 + $0x3c] sm:$0xf] %vm1570, %v1569
      %s1587 = smul.u32 8, %s25
      %p1588 = scmp.lt.s32.totalorder %s24, 1
      %s1589 = scalar_select %p1588, %s24, 1
      %p1590 = scmp.lt.s32.totalorder %s1587, 15
      %s1591 = scalar_select %p1590, %s1587, 15
      %s1592 = smul.addr %s1591, 2
      %s1593 = smul.addr %s1589, 32
      %s1594 = sadd.s32 %s1592, %s1593
      %s1595 = smul.addr %s1594, 4
      %s1596 = scalar_lea.vmem %s9, %s1595
      // Predicated region
      $region57: #{csp_stage_pallas.5} parent=55 // pred_check
        %p1597 = pneg %p262
      $region58: #{csp_stage_pallas.5} parent=55 // pred_check_branch
        %1599 = sbr.rel (%p1597) target = $region60
      $region59: #{csp_stage_pallas.5} parent=55 // pred_region
        %s1600 = smul.u32 8, %s25
      $region60: #{csp_stage_pallas.5} parent=55 // pred_fallthru
        _
    $region56: #{csp_stage_pallas.5} parent=5 // pred_fallthru
      _
    %p1601 = scmp.le.s32.totalorder 2, %s15
    // Predicated region
    $region61: #{csp_stage_pallas.5} parent=5 // pred_check
      %p1602 = pneg %p1601
    $region62: #{csp_stage_pallas.5} parent=5 // pred_check_branch
      %1604 = sbr.rel (%p1602) target = $region64
    $region63: #{csp_stage_pallas.5} parent=5 // pred_region
      %s1605 = ssub.s32 %s15, 2
      // Predicated region
      $region65: #{csp_stage_pallas.5} parent=63 // pred_check
        %p1606 = pneg %p268
      $region66: #{csp_stage_pallas.5} parent=63 // pred_check_branch
        %1608 = sbr.rel (%p1606) target = $region68
      $region67: #{csp_stage_pallas.5} parent=63 // pred_region
        %s1609 = smul.u32 8, %s27
        %p1610 = scmp.lt.s32.totalorder %s26, 1
        %s1611 = scalar_select %p1610, %s26, 1
        %p1612 = scmp.lt.s32.totalorder %s1609, 15
        %s1613 = scalar_select %p1612, %s1609, 15
        %s1614 = smul.addr %s1613, 2
        %s1615 = smul.addr %s1611, 32
        %s1616 = sadd.s32 %s1614, %s1615
        %s1617 = smul.addr %s1616, 4
        %s1618 = scalar_lea.vmem %s9, %s1617
      $region68: #{csp_stage_pallas.5} parent=63 // pred_fallthru
        _
    $region64: #{csp_stage_pallas.5} parent=5 // pred_fallthru
      _
  $region6: #{csp_stage_pallas.5} parent=0 // loop_footer
    %s19 = sadd.s32 1, %s15
  $region7: #{csp_stage_pallas.5} parent=0 // loop_footer_branch
    %14 = sbr.rel target = $region3
  $region8: #{csp_stage_pallas.5} parent=0 // loop_exit
    _

// kernel: csp_stage_pallas.4
$region0: #{csp_stage_pallas.4}
  #allocation0 [shape = 'u32[]', space=smem, size = 0x4, offset = 0x4, fixed_abs, tag = 'smem constant byte address 0x4 - core index']
  #allocation1 [shape = 'u32[72,128]{1,0:T(1,128)}', space=vmem, size = 0x9000, scoped, tag = 'internal scratch']
  %s0 = inlined_call_operand.vmem [shape: f32[512,8], index: 0, kind: input, shape index: {}]
  %s1 = inlined_call_operand.vmem [shape: bf16[8,4], index: 1, kind: input, shape index: {}]
  %s2 = inlined_call_operand.vmem [shape: f32[1,4], index: 2, kind: input, shape index: {}]
  %s3 = inlined_call_operand.vmem [shape: f32[1,4], index: 3, kind: input, shape index: {}]
  %s4 = inlined_call_operand.vmem [shape: bf16[8,4], index: 4, kind: input, shape index: {}]
  %s5 = inlined_call_operand.vmem [shape: f32[1,4], index: 5, kind: input, shape index: {}]
  %s6 = inlined_call_operand.vmem [shape: f32[1,4], index: 6, kind: input, shape index: {}]
  %s7 = inlined_call_operand.vmem [shape: bf16[512,4], index: 7, kind: output, shape index: {0}]
  %s8 = inlined_call_operand.vmem [shape: bf16[512,4], index: 8, kind: output, shape index: {1}]
  %9 = xla_tuple %s7, %s8
  %s10 = sld [smem:[#allocation0]]
  $region46: #{csp_stage_pallas.4} parent=0
    _
  %s12 = ssub.s32 1, %s10
  %s13 = scalar_select 0, %s12, %s10
  // Predicated region
  $region2: #{csp_stage_pallas.4} parent=0 // pred_check
    _
  $region3: #{csp_stage_pallas.4} parent=0 // pred_check_branch
    %15 = sbr.rel (0) target = $region5
  $region4: #{csp_stage_pallas.4} parent=0 // pred_region
    _
  $region5: #{csp_stage_pallas.4} parent=0 // pred_fallthru
    _
  // Predicated region
  $region6: #{csp_stage_pallas.4} parent=0 // pred_check
    _
  $region7: #{csp_stage_pallas.4} parent=0 // pred_check_branch
    %17 = sbr.rel (0) target = $region9
  $region8: #{csp_stage_pallas.4} parent=0 // pred_region
    _
  $region9: #{csp_stage_pallas.4} parent=0 // pred_fallthru
    _
  // Predicated region
  $region10: #{csp_stage_pallas.4} parent=0 // pred_check
    _
  $region11: #{csp_stage_pallas.4} parent=0 // pred_check_branch
    %19 = sbr.rel (0) target = $region13
  $region12: #{csp_stage_pallas.4} parent=0 // pred_region
    _
  $region13: #{csp_stage_pallas.4} parent=0 // pred_fallthru
    _
  // Predicated region
  $region14: #{csp_stage_pallas.4} parent=0 // pred_check
    _
  $region15: #{csp_stage_pallas.4} parent=0 // pred_check_branch
    %21 = sbr.rel (0) target = $region17
  $region16: #{csp_stage_pallas.4} parent=0 // pred_region
    _
  $region17: #{csp_stage_pallas.4} parent=0 // pred_fallthru
    _
  // Predicated region
  $region18: #{csp_stage_pallas.4} parent=0 // pred_check
    _
  $region19: #{csp_stage_pallas.4} parent=0 // pred_check_branch
    %23 = sbr.rel (0) target = $region21
  $region20: #{csp_stage_pallas.4} parent=0 // pred_region
    _
  $region21: #{csp_stage_pallas.4} parent=0 // pred_fallthru
    _
  // Predicated region
  $region22: #{csp_stage_pallas.4} parent=0 // pred_check
    _
  $region23: #{csp_stage_pallas.4} parent=0 // pred_check_branch
    %25 = sbr.rel (0) target = $region25
  $region24: #{csp_stage_pallas.4} parent=0 // pred_region
    _
  $region25: #{csp_stage_pallas.4} parent=0 // pred_fallthru
    _
  // Predicated region
  $region26: #{csp_stage_pallas.4} parent=0 // pred_check
    _
  $region27: #{csp_stage_pallas.4} parent=0 // pred_check_branch
    %27 = sbr.rel (0) target = $region29
  $region28: #{csp_stage_pallas.4} parent=0 // pred_region
    _
  $region29: #{csp_stage_pallas.4} parent=0 // pred_fallthru
    _
  %v29 = vld [vmem:[%s0] sm:$0xff]
  %v30 = vld [vmem:[%s0 + $0x8] sm:$0xff]
  %v31 = vld [vmem:[%s0 + $0x10] sm:$0xff]
  %v32 = vld [vmem:[%s0 + $0x18] sm:$0xff]
  %v33 = vld [vmem:[%s0 + $0x20] sm:$0xff]
  %v34 = vld [vmem:[%s0 + $0x28] sm:$0xff]
  %v35 = vld [vmem:[%s0 + $0x30] sm:$0xff]
  %v36 = vld [vmem:[%s0 + $0x38] sm:$0xff]
  %v37 = vld [vmem:[%s0 + $0x40] sm:$0xff]
  %v38 = vld [vmem:[%s0 + $0x48] sm:$0xff]
  %v39 = vld [vmem:[%s0 + $0x50] sm:$0xff]
  %v40 = vld [vmem:[%s0 + $0x58] sm:$0xff]
  %v41 = vld [vmem:[%s0 + $0x60] sm:$0xff]
  %v42 = vld [vmem:[%s0 + $0x68] sm:$0xff]
  %v43 = vld [vmem:[%s0 + $0x70] sm:$0xff]
  %v44 = vld [vmem:[%s0 + $0x78] sm:$0xff]
  %v45 = vld [vmem:[%s0 + $0x80] sm:$0xff]
  %v46 = vld [vmem:[%s0 + $0x88] sm:$0xff]
  %v47 = vld [vmem:[%s0 + $0x90] sm:$0xff]
  %v48 = vld [vmem:[%s0 + $0x98] sm:$0xff]
  %v49 = vld [vmem:[%s0 + $0xa0] sm:$0xff]
  %v50 = vld [vmem:[%s0 + $0xa8] sm:$0xff]
  %v51 = vld [vmem:[%s0 + $0xb0] sm:$0xff]
  %v52 = vld [vmem:[%s0 + $0xb8] sm:$0xff]
  %v53 = vld [vmem:[%s0 + $0xc0] sm:$0xff]
  %v54 = vld [vmem:[%s0 + $0xc8] sm:$0xff]
  %v55 = vld [vmem:[%s0 + $0xd0] sm:$0xff]
  %v56 = vld [vmem:[%s0 + $0xd8] sm:$0xff]
  %v57 = vld [vmem:[%s0 + $0xe0] sm:$0xff]
  %v58 = vld [vmem:[%s0 + $0xe8] sm:$0xff]
  %v59 = vld [vmem:[%s0 + $0xf0] sm:$0xff]
  %v60 = vld [vmem:[%s0 + $0xf8] sm:$0xff]
  %v61 = vld [vmem:[%s0 + $0x100] sm:$0xff]
  %v62 = vld [vmem:[%s0 + $0x108] sm:$0xff]
  %v63 = vld [vmem:[%s0 + $0x110] sm:$0xff]
  %v64 = vld [vmem:[%s0 + $0x118] sm:$0xff]
  %v65 = vld [vmem:[%s0 + $0x120] sm:$0xff]
  %v66 = vld [vmem:[%s0 + $0x128] sm:$0xff]
  %v67 = vld [vmem:[%s0 + $0x130] sm:$0xff]
  %v68 = vld [vmem:[%s0 + $0x138] sm:$0xff]
  %v69 = vld [vmem:[%s0 + $0x140] sm:$0xff]
  %v70 = vld [vmem:[%s0 + $0x148] sm:$0xff]
  %v71 = vld [vmem:[%s0 + $0x150] sm:$0xff]
  %v72 = vld [vmem:[%s0 + $0x158] sm:$0xff]
  %v73 = vld [vmem:[%s0 + $0x160] sm:$0xff]
  %v74 = vld [vmem:[%s0 + $0x168] sm:$0xff]
  %v75 = vld [vmem:[%s0 + $0x170] sm:$0xff]
  %v76 = vld [vmem:[%s0 + $0x178] sm:$0xff]
  %v77 = vld [vmem:[%s0 + $0x180] sm:$0xff]
  %v78 = vld [vmem:[%s0 + $0x188] sm:$0xff]
  %v79 = vld [vmem:[%s0 + $0x190] sm:$0xff]
  %v80 = vld [vmem:[%s0 + $0x198] sm:$0xff]
  %v81 = vld [vmem:[%s0 + $0x1a0] sm:$0xff]
  %v82 = vld [vmem:[%s0 + $0x1a8] sm:$0xff]
  %v83 = vld [vmem:[%s0 + $0x1b0] sm:$0xff]
  %v84 = vld [vmem:[%s0 + $0x1b8] sm:$0xff]
  %v85 = vld [vmem:[%s0 + $0x1c0] sm:$0xff]
  %v86 = vld [vmem:[%s0 + $0x1c8] sm:$0xff]
  %v87 = vld [vmem:[%s0 + $0x1d0] sm:$0xff]
  %v88 = vld [vmem:[%s0 + $0x1d8] sm:$0xff]
  %v89 = vld [vmem:[%s0 + $0x1e0] sm:$0xff]
  %v90 = vld [vmem:[%s0 + $0x1e8] sm:$0xff]
  %v91 = vld [vmem:[%s0 + $0x1f0] sm:$0xff]
  %v92 = vld [vmem:[%s0 + $0x1f8] sm:$0xff]
  %v93 = vpack.c.bf16 %v30, %v29
  %v94 = vpack.c.bf16 %v32, %v31
  %v95 = vpack.c.bf16 %v34, %v33
  %v96 = vpack.c.bf16 %v36, %v35
  %v97 = vpack.c.bf16 %v38, %v37
  %v98 = vpack.c.bf16 %v40, %v39
  %v99 = vpack.c.bf16 %v42, %v41
  %v100 = vpack.c.bf16 %v44, %v43
  %v101 = vpack.c.bf16 %v46, %v45
  %v102 = vpack.c.bf16 %v48, %v47
  %v103 = vpack.c.bf16 %v50, %v49
  %v104 = vpack.c.bf16 %v52, %v51
  %v105 = vpack.c.bf16 %v54, %v53
  %v106 = vpack.c.bf16 %v56, %v55
  %v107 = vpack.c.bf16 %v58, %v57
  %v108 = vpack.c.bf16 %v60, %v59
  %v109 = vpack.c.bf16 %v62, %v61
  %v110 = vpack.c.bf16 %v64, %v63
  %v111 = vpack.c.bf16 %v66, %v65
  %v112 = vpack.c.bf16 %v68, %v67
  %v113 = vpack.c.bf16 %v70, %v69
  %v114 = vpack.c.bf16 %v72, %v71
  %v115 = vpack.c.bf16 %v74, %v73
  %v116 = vpack.c.bf16 %v76, %v75
  %v117 = vpack.c.bf16 %v78, %v77
  %v118 = vpack.c.bf16 %v80, %v79
  %v119 = vpack.c.bf16 %v82, %v81
  %v120 = vpack.c.bf16 %v84, %v83
  %v121 = vpack.c.bf16 %v86, %v85
  %v122 = vpack.c.bf16 %v88, %v87
  %v123 = vpack.c.bf16 %v90, %v89
  %v124 = vpack.c.bf16 %v92, %v91
  %v125 = vld [vmem:[%s1] sm:$0xf]
  %vm126 = vcmask 64512
  %v128 = vsel %vm126, %v93, 0
  %v131 = vsel %vm126, %v94, 0
  %v134 = vsel %vm126, %v95, 0
  %v137 = vsel %vm126, %v96, 0
  %v140 = vsel %vm126, %v97, 0
  %v143 = vsel %vm126, %v98, 0
  %v146 = vsel %vm126, %v99, 0
  %v149 = vsel %vm126, %v100, 0
  %v152 = vsel %vm126, %v101, 0
  %v155 = vsel %vm126, %v102, 0
  %v158 = vsel %vm126, %v103, 0
  %v161 = vsel %vm126, %v104, 0
  %v164 = vsel %vm126, %v105, 0
  %v167 = vsel %vm126, %v106, 0
  %v170 = vsel %vm126, %v107, 0
  %v173 = vsel %vm126, %v108, 0
  %v176 = vsel %vm126, %v109, 0
  %v179 = vsel %vm126, %v110, 0
  %v182 = vsel %vm126, %v111, 0
  %v185 = vsel %vm126, %v112, 0
  %v188 = vsel %vm126, %v113, 0
  %v191 = vsel %vm126, %v114, 0
  %v194 = vsel %vm126, %v115, 0
  %v197 = vsel %vm126, %v116, 0
  %v200 = vsel %vm126, %v117, 0
  %v203 = vsel %vm126, %v118, 0
  %v206 = vsel %vm126, %v119, 0
  %v209 = vsel %vm126, %v120, 0
  %v212 = vsel %vm126, %v121, 0
  %v215 = vsel %vm126, %v122, 0
  %v218 = vsel %vm126, %v123, 0
  %v221 = vsel %vm126, %v124, 0
  %vm223 = vcmask 1043456
  %v225 = vsel %vm223, %v125, 0
  %227 = vmatpush.bf16.msra.mxu0 0
  %228 = vmatpush.bf16.msra.mxu0 0
  %229 = vmatpush.bf16.msra.mxu0 0
  %230 = vmatpush.bf16.msra.mxu0 0
  %231 = vmatpush.bf16.msra.mxu0 0
  %232 = vmatpush.bf16.msra.mxu0 0
  %233 = vmatpush.bf16.msra.mxu0 0
  %234 = vmatpush.bf16.msra.mxu0 %v225
  %235 = vmatmul.bf16.gmra.mxu0 %v128
  %v236 = vpop.f32.mrf.mxu0
  %v237 = vadd.f32 0.0, %v236
  %v238 = vpop.f32.mrf.mxu0
  %v239 = vadd.f32 0.0, %v238
  %240 = vmatmul.bf16.gmra.mxu0 %v131
  %v241 = vpop.f32.mrf.mxu0
  %v242 = vadd.f32 0.0, %v241
  %v243 = vpop.f32.mrf.mxu0
  %v244 = vadd.f32 0.0, %v243
  %245 = vmatmul.bf16.gmra.mxu0 %v134
  %v246 = vpop.f32.mrf.mxu0
  %v247 = vadd.f32 0.0, %v246
  %v248 = vpop.f32.mrf.mxu0
  %v249 = vadd.f32 0.0, %v248
  %250 = vmatmul.bf16.gmra.mxu0 %v137
  %v251 = vpop.f32.mrf.mxu0
  %v252 = vadd.f32 0.0, %v251
  %v253 = vpop.f32.mrf.mxu0
  %v254 = vadd.f32 0.0, %v253
  %255 = vmatmul.bf16.gmra.mxu0 %v140
  %v256 = vpop.f32.mrf.mxu0
  %v257 = vadd.f32 0.0, %v256
  %v258 = vpop.f32.mrf.mxu0
  %v259 = vadd.f32 0.0, %v258
  %260 = vmatmul.bf16.gmra.mxu0 %v143
  %v261 = vpop.f32.mrf.mxu0
  %v262 = vadd.f32 0.0, %v261
  %v263 = vpop.f32.mrf.mxu0
  %v264 = vadd.f32 0.0, %v263
  %265 = vmatmul.bf16.gmra.mxu0 %v146
  %v266 = vpop.f32.mrf.mxu0
  %v267 = vadd.f32 0.0, %v266
  %v268 = vpop.f32.mrf.mxu0
  %v269 = vadd.f32 0.0, %v268
  %270 = vmatmul.bf16.gmra.mxu0 %v149
  %v271 = vpop.f32.mrf.mxu0
  %v272 = vadd.f32 0.0, %v271
  %v273 = vpop.f32.mrf.mxu0
  %v274 = vadd.f32 0.0, %v273
  %275 = vmatmul.bf16.gmra.mxu0 %v152
  %v276 = vpop.f32.mrf.mxu0
  %v277 = vadd.f32 0.0, %v276
  %v278 = vpop.f32.mrf.mxu0
  %v279 = vadd.f32 0.0, %v278
  %280 = vmatmul.bf16.gmra.mxu0 %v155
  %v281 = vpop.f32.mrf.mxu0
  %v282 = vadd.f32 0.0, %v281
  %v283 = vpop.f32.mrf.mxu0
  %v284 = vadd.f32 0.0, %v283
  %285 = vmatmul.bf16.gmra.mxu0 %v158
  %v286 = vpop.f32.mrf.mxu0
  %v287 = vadd.f32 0.0, %v286
  %v288 = vpop.f32.mrf.mxu0
  %v289 = vadd.f32 0.0, %v288
  %290 = vmatmul.bf16.gmra.mxu0 %v161
  %v291 = vpop.f32.mrf.mxu0
  %v292 = vadd.f32 0.0, %v291
  %v293 = vpop.f32.mrf.mxu0
  %v294 = vadd.f32 0.0, %v293
  %295 = vmatmul.bf16.gmra.mxu0 %v164
  %v296 = vpop.f32.mrf.mxu0
  %v297 = vadd.f32 0.0, %v296
  %v298 = vpop.f32.mrf.mxu0
  %v299 = vadd.f32 0.0, %v298
  %300 = vmatmul.bf16.gmra.mxu0 %v167
  %v301 = vpop.f32.mrf.mxu0
  %v302 = vadd.f32 0.0, %v301
  %v303 = vpop.f32.mrf.mxu0
  %v304 = vadd.f32 0.0, %v303
  %305 = vmatmul.bf16.gmra.mxu0 %v170
  %v306 = vpop.f32.mrf.mxu0
  %v307 = vadd.f32 0.0, %v306
  %v308 = vpop.f32.mrf.mxu0
  %v309 = vadd.f32 0.0, %v308
  %310 = vmatmul.bf16.gmra.mxu0 %v173
  %v311 = vpop.f32.mrf.mxu0
  %v312 = vadd.f32 0.0, %v311
  %v313 = vpop.f32.mrf.mxu0
  %v314 = vadd.f32 0.0, %v313
  %315 = vmatmul.bf16.gmra.mxu0 %v176
  %v316 = vpop.f32.mrf.mxu0
  %v317 = vadd.f32 0.0, %v316
  %v318 = vpop.f32.mrf.mxu0
  %v319 = vadd.f32 0.0, %v318
  %320 = vmatmul.bf16.gmra.mxu0 %v179
  %v321 = vpop.f32.mrf.mxu0
  %v322 = vadd.f32 0.0, %v321
  %v323 = vpop.f32.mrf.mxu0
  %v324 = vadd.f32 0.0, %v323
  %325 = vmatmul.bf16.gmra.mxu0 %v182
  %v326 = vpop.f32.mrf.mxu0
  %v327 = vadd.f32 0.0, %v326
  %v328 = vpop.f32.mrf.mxu0
  %v329 = vadd.f32 0.0, %v328
  %330 = vmatmul.bf16.gmra.mxu0 %v185
  %v331 = vpop.f32.mrf.mxu0
  %v332 = vadd.f32 0.0, %v331
  %v333 = vpop.f32.mrf.mxu0
  %v334 = vadd.f32 0.0, %v333
  %335 = vmatmul.bf16.gmra.mxu0 %v188
  %v336 = vpop.f32.mrf.mxu0
  %v337 = vadd.f32 0.0, %v336
  %v338 = vpop.f32.mrf.mxu0
  %v339 = vadd.f32 0.0, %v338
  %340 = vmatmul.bf16.gmra.mxu0 %v191
  %v341 = vpop.f32.mrf.mxu0
  %v342 = vadd.f32 0.0, %v341
  %v343 = vpop.f32.mrf.mxu0
  %v344 = vadd.f32 0.0, %v343
  %345 = vmatmul.bf16.gmra.mxu0 %v194
  %v346 = vpop.f32.mrf.mxu0
  %v347 = vadd.f32 0.0, %v346
  %v348 = vpop.f32.mrf.mxu0
  %v349 = vadd.f32 0.0, %v348
  %350 = vmatmul.bf16.gmra.mxu0 %v197
  %v351 = vpop.f32.mrf.mxu0
  %v352 = vadd.f32 0.0, %v351
  %v353 = vpop.f32.mrf.mxu0
  %v354 = vadd.f32 0.0, %v353
  %355 = vmatmul.bf16.gmra.mxu0 %v200
  %v356 = vpop.f32.mrf.mxu0
  %v357 = vadd.f32 0.0, %v356
  %v358 = vpop.f32.mrf.mxu0
  %v359 = vadd.f32 0.0, %v358
  %360 = vmatmul.bf16.gmra.mxu0 %v203
  %v361 = vpop.f32.mrf.mxu0
  %v362 = vadd.f32 0.0, %v361
  %v363 = vpop.f32.mrf.mxu0
  %v364 = vadd.f32 0.0, %v363
  %365 = vmatmul.bf16.gmra.mxu0 %v206
  %v366 = vpop.f32.mrf.mxu0
  %v367 = vadd.f32 0.0, %v366
  %v368 = vpop.f32.mrf.mxu0
  %v369 = vadd.f32 0.0, %v368
  %370 = vmatmul.bf16.gmra.mxu0 %v209
  %v371 = vpop.f32.mrf.mxu0
  %v372 = vadd.f32 0.0, %v371
  %v373 = vpop.f32.mrf.mxu0
  %v374 = vadd.f32 0.0, %v373
  %375 = vmatmul.bf16.gmra.mxu0 %v212
  %v376 = vpop.f32.mrf.mxu0
  %v377 = vadd.f32 0.0, %v376
  %v378 = vpop.f32.mrf.mxu0
  %v379 = vadd.f32 0.0, %v378
  %380 = vmatmul.bf16.gmra.mxu0 %v215
  %v381 = vpop.f32.mrf.mxu0
  %v382 = vadd.f32 0.0, %v381
  %v383 = vpop.f32.mrf.mxu0
  %v384 = vadd.f32 0.0, %v383
  %385 = vmatmul.bf16.gmra.mxu0 %v218
  %v386 = vpop.f32.mrf.mxu0
  %v387 = vadd.f32 0.0, %v386
  %v388 = vpop.f32.mrf.mxu0
  %v389 = vadd.f32 0.0, %v388
  %390 = vmatmul.bf16.gmra.mxu0 %v221
  %v391 = vpop.f32.mrf.mxu0
  %v392 = vadd.f32 0.0, %v391
  %v393 = vpop.f32.mrf.mxu0
  %v394 = vadd.f32 0.0, %v393
  %395 = vdwg.mxu0
  %v396 = vld [vmem:[%s2] sm:$0x1]
  %v398 = vperm.slane %v396, 0
  %v400 = vmul.f32 %v237, %v398
  %v401 = vmul.f32 %v239, %v398
  %v402 = vmul.f32 %v242, %v398
  %v403 = vmul.f32 %v244, %v398
  %v404 = vmul.f32 %v247, %v398
  %v405 = vmul.f32 %v249, %v398
  %v406 = vmul.f32 %v252, %v398
  %v407 = vmul.f32 %v254, %v398
  %v408 = vmul.f32 %v257, %v398
  %v409 = vmul.f32 %v259, %v398
  %v410 = vmul.f32 %v262, %v398
  %v411 = vmul.f32 %v264, %v398
  %v412 = vmul.f32 %v267, %v398
  %v413 = vmul.f32 %v269, %v398
  %v414 = vmul.f32 %v272, %v398
  %v415 = vmul.f32 %v274, %v398
  %v416 = vmul.f32 %v277, %v398
  %v417 = vmul.f32 %v279, %v398
  %v418 = vmul.f32 %v282, %v398
  %v419 = vmul.f32 %v284, %v398
  %v420 = vmul.f32 %v287, %v398
  %v421 = vmul.f32 %v289, %v398
  %v422 = vmul.f32 %v292, %v398
  %v423 = vmul.f32 %v294, %v398
  %v424 = vmul.f32 %v297, %v398
  %v425 = vmul.f32 %v299, %v398
  %v426 = vmul.f32 %v302, %v398
  %v427 = vmul.f32 %v304, %v398
  %v428 = vmul.f32 %v307, %v398
  %v429 = vmul.f32 %v309, %v398
  %v430 = vmul.f32 %v312, %v398
  %v431 = vmul.f32 %v314, %v398
  %v432 = vmul.f32 %v317, %v398
  %v433 = vmul.f32 %v319, %v398
  %v434 = vmul.f32 %v322, %v398
  %v435 = vmul.f32 %v324, %v398
  %v436 = vmul.f32 %v327, %v398
  %v437 = vmul.f32 %v329, %v398
  %v438 = vmul.f32 %v332, %v398
  %v439 = vmul.f32 %v334, %v398
  %v440 = vmul.f32 %v337, %v398
  %v441 = vmul.f32 %v339, %v398
  %v442 = vmul.f32 %v342, %v398
  %v443 = vmul.f32 %v344, %v398
  %v444 = vmul.f32 %v347, %v398
  %v445 = vmul.f32 %v349, %v398
  %v446 = vmul.f32 %v352, %v398
  %v447 = vmul.f32 %v354, %v398
  %v448 = vmul.f32 %v357, %v398
  %v449 = vmul.f32 %v359, %v398
  %v450 = vmul.f32 %v362, %v398
  %v451 = vmul.f32 %v364, %v398
  %v452 = vmul.f32 %v367, %v398
  %v453 = vmul.f32 %v369, %v398
  %v454 = vmul.f32 %v372, %v398
  %v455 = vmul.f32 %v374, %v398
  %v456 = vmul.f32 %v377, %v398
  %v457 = vmul.f32 %v379, %v398
  %v458 = vmul.f32 %v382, %v398
  %v459 = vmul.f32 %v384, %v398
  %v460 = vmul.f32 %v387, %v398
  %v461 = vmul.f32 %v389, %v398
  %v462 = vmul.f32 %v392, %v398
  %v463 = vmul.f32 %v394, %v398
  %v464 = vld [vmem:[%s3] sm:$0x1]
  %v466 = vperm.slane %v464, 0
  %v468 = vadd.f32 %v400, %v466
  %v469 = vadd.f32 %v401, %v466
  %v470 = vadd.f32 %v402, %v466
  %v471 = vadd.f32 %v403, %v466
  %v472 = vadd.f32 %v404, %v466
  %v473 = vadd.f32 %v405, %v466
  %v474 = vadd.f32 %v406, %v466
  %v475 = vadd.f32 %v407, %v466
  %v476 = vadd.f32 %v408, %v466
  %v477 = vadd.f32 %v409, %v466
  %v478 = vadd.f32 %v410, %v466
  %v479 = vadd.f32 %v411, %v466
  %v480 = vadd.f32 %v412, %v466
  %v481 = vadd.f32 %v413, %v466
  %v482 = vadd.f32 %v414, %v466
  %v483 = vadd.f32 %v415, %v466
  %v484 = vadd.f32 %v416, %v466
  %v485 = vadd.f32 %v417, %v466
  %v486 = vadd.f32 %v418, %v466
  %v487 = vadd.f32 %v419, %v466
  %v488 = vadd.f32 %v420, %v466
  %v489 = vadd.f32 %v421, %v466
  %v490 = vadd.f32 %v422, %v466
  %v491 = vadd.f32 %v423, %v466
  %v492 = vadd.f32 %v424, %v466
  %v493 = vadd.f32 %v425, %v466
  %v494 = vadd.f32 %v426, %v466
  %v495 = vadd.f32 %v427, %v466
  %v496 = vadd.f32 %v428, %v466
  %v497 = vadd.f32 %v429, %v466
  %v498 = vadd.f32 %v430, %v466
  %v499 = vadd.f32 %v431, %v466
  %v500 = vadd.f32 %v432, %v466
  %v501 = vadd.f32 %v433, %v466
  %v502 = vadd.f32 %v434, %v466
  %v503 = vadd.f32 %v435, %v466
  %v504 = vadd.f32 %v436, %v466
  %v505 = vadd.f32 %v437, %v466
  %v506 = vadd.f32 %v438, %v466
  %v507 = vadd.f32 %v439, %v466
  %v508 = vadd.f32 %v440, %v466
  %v509 = vadd.f32 %v441, %v466
  %v510 = vadd.f32 %v442, %v466
  %v511 = vadd.f32 %v443, %v466
  %v512 = vadd.f32 %v444, %v466
  %v513 = vadd.f32 %v445, %v466
  %v514 = vadd.f32 %v446, %v466
  %v515 = vadd.f32 %v447, %v466
  %v516 = vadd.f32 %v448, %v466
  %v517 = vadd.f32 %v449, %v466
  %v518 = vadd.f32 %v450, %v466
  %v519 = vadd.f32 %v451, %v466
  %v520 = vadd.f32 %v452, %v466
  %v521 = vadd.f32 %v453, %v466
  %v522 = vadd.f32 %v454, %v466
  %v523 = vadd.f32 %v455, %v466
  %v524 = vadd.f32 %v456, %v466
  %v525 = vadd.f32 %v457, %v466
  %v526 = vadd.f32 %v458, %v466
  %v527 = vadd.f32 %v459, %v466
  %v528 = vadd.f32 %v460, %v466
  %v529 = vadd.f32 %v461, %v466
  %v530 = vadd.f32 %v462, %v466
  %v531 = vadd.f32 %v463, %v466
  %vm532 = vcmp.gt.f32.partialorder %v468, 0.0
  %vm533 = vcmp.gt.f32.partialorder %v469, 0.0
  %vm534 = vcmp.gt.f32.partialorder %v470, 0.0
  %vm535 = vcmp.gt.f32.partialorder %v471, 0.0
  %vm536 = vcmp.gt.f32.partialorder %v472, 0.0
  %vm537 = vcmp.gt.f32.partialorder %v473, 0.0
  %vm538 = vcmp.gt.f32.partialorder %v474, 0.0
  %vm539 = vcmp.gt.f32.partialorder %v475, 0.0
  %vm540 = vcmp.gt.f32.partialorder %v476, 0.0
  %vm541 = vcmp.gt.f32.partialorder %v477, 0.0
  %vm542 = vcmp.gt.f32.partialorder %v478, 0.0
  %vm543 = vcmp.gt.f32.partialorder %v479, 0.0
  %vm544 = vcmp.gt.f32.partialorder %v480, 0.0
  %vm545 = vcmp.gt.f32.partialorder %v481, 0.0
  %vm546 = vcmp.gt.f32.partialorder %v482, 0.0
  %vm547 = vcmp.gt.f32.partialorder %v483, 0.0
  %vm548 = vcmp.gt.f32.partialorder %v484, 0.0
  %vm549 = vcmp.gt.f32.partialorder %v485, 0.0
  %vm550 = vcmp.gt.f32.partialorder %v486, 0.0
  %vm551 = vcmp.gt.f32.partialorder %v487, 0.0
  %vm552 = vcmp.gt.f32.partialorder %v488, 0.0
  %vm553 = vcmp.gt.f32.partialorder %v489, 0.0
  %vm554 = vcmp.gt.f32.partialorder %v490, 0.0
  %vm555 = vcmp.gt.f32.partialorder %v491, 0.0
  %vm556 = vcmp.gt.f32.partialorder %v492, 0.0
  %vm557 = vcmp.gt.f32.partialorder %v493, 0.0
  %vm558 = vcmp.gt.f32.partialorder %v494, 0.0
  %vm559 = vcmp.gt.f32.partialorder %v495, 0.0
  %vm560 = vcmp.gt.f32.partialorder %v496, 0.0
  %vm561 = vcmp.gt.f32.partialorder %v497, 0.0
  %vm562 = vcmp.gt.f32.partialorder %v498, 0.0
  %vm563 = vcmp.gt.f32.partialorder %v499, 0.0
  %vm564 = vcmp.gt.f32.partialorder %v500, 0.0
  %vm565 = vcmp.gt.f32.partialorder %v501, 0.0
  %vm566 = vcmp.gt.f32.partialorder %v502, 0.0
  %vm567 = vcmp.gt.f32.partialorder %v503, 0.0
  %vm568 = vcmp.gt.f32.partialorder %v504, 0.0
  %vm569 = vcmp.gt.f32.partialorder %v505, 0.0
  %vm570 = vcmp.gt.f32.partialorder %v506, 0.0
  %vm571 = vcmp.gt.f32.partialorder %v507, 0.0
  %vm572 = vcmp.gt.f32.partialorder %v508, 0.0
  %vm573 = vcmp.gt.f32.partialorder %v509, 0.0
  %vm574 = vcmp.gt.f32.partialorder %v510, 0.0
  %vm575 = vcmp.gt.f32.partialorder %v511, 0.0
  %vm576 = vcmp.gt.f32.partialorder %v512, 0.0
  %vm577 = vcmp.gt.f32.partialorder %v513, 0.0
  %vm578 = vcmp.gt.f32.partialorder %v514, 0.0
  %vm579 = vcmp.gt.f32.partialorder %v515, 0.0
  %vm580 = vcmp.gt.f32.partialorder %v516, 0.0
  %vm581 = vcmp.gt.f32.partialorder %v517, 0.0
  %vm582 = vcmp.gt.f32.partialorder %v518, 0.0
  %vm583 = vcmp.gt.f32.partialorder %v519, 0.0
  %vm584 = vcmp.gt.f32.partialorder %v520, 0.0
  %vm585 = vcmp.gt.f32.partialorder %v521, 0.0
  %vm586 = vcmp.gt.f32.partialorder %v522, 0.0
  %vm587 = vcmp.gt.f32.partialorder %v523, 0.0
  %vm588 = vcmp.gt.f32.partialorder %v524, 0.0
  %vm589 = vcmp.gt.f32.partialorder %v525, 0.0
  %vm590 = vcmp.gt.f32.partialorder %v526, 0.0
  %vm591 = vcmp.gt.f32.partialorder %v527, 0.0
  %vm592 = vcmp.gt.f32.partialorder %v528, 0.0
  %vm593 = vcmp.gt.f32.partialorder %v529, 0.0
  %vm594 = vcmp.gt.f32.partialorder %v530, 0.0
  %vm595 = vcmp.gt.f32.partialorder %v531, 0.0
  %v596 = vmul.f32 %v468, 0.1
  %v597 = vmul.f32 %v469, 0.1
  %v598 = vmul.f32 %v470, 0.1
  %v599 = vmul.f32 %v471, 0.1
  %v600 = vmul.f32 %v472, 0.1
  %v601 = vmul.f32 %v473, 0.1
  %v602 = vmul.f32 %v474, 0.1
  %v603 = vmul.f32 %v475, 0.1
  %v604 = vmul.f32 %v476, 0.1
  %v605 = vmul.f32 %v477, 0.1
  %v606 = vmul.f32 %v478, 0.1
  %v607 = vmul.f32 %v479, 0.1
  %v608 = vmul.f32 %v480, 0.1
  %v609 = vmul.f32 %v481, 0.1
  %v610 = vmul.f32 %v482, 0.1
  %v611 = vmul.f32 %v483, 0.1
  %v612 = vmul.f32 %v484, 0.1
  %v613 = vmul.f32 %v485, 0.1
  %v614 = vmul.f32 %v486, 0.1
  %v615 = vmul.f32 %v487, 0.1
  %v616 = vmul.f32 %v488, 0.1
  %v617 = vmul.f32 %v489, 0.1
  %v618 = vmul.f32 %v490, 0.1
  %v619 = vmul.f32 %v491, 0.1
  %v620 = vmul.f32 %v492, 0.1
  %v621 = vmul.f32 %v493, 0.1
  %v622 = vmul.f32 %v494, 0.1
  %v623 = vmul.f32 %v495, 0.1
  %v624 = vmul.f32 %v496, 0.1
  %v625 = vmul.f32 %v497, 0.1
  %v626 = vmul.f32 %v498, 0.1
  %v627 = vmul.f32 %v499, 0.1
  %v628 = vmul.f32 %v500, 0.1
  %v629 = vmul.f32 %v501, 0.1
  %v630 = vmul.f32 %v502, 0.1
  %v631 = vmul.f32 %v503, 0.1
  %v632 = vmul.f32 %v504, 0.1
  %v633 = vmul.f32 %v505, 0.1
  %v634 = vmul.f32 %v506, 0.1
  %v635 = vmul.f32 %v507, 0.1
  %v636 = vmul.f32 %v508, 0.1
  %v637 = vmul.f32 %v509, 0.1
  %v638 = vmul.f32 %v510, 0.1
  %v639 = vmul.f32 %v511, 0.1
  %v640 = vmul.f32 %v512, 0.1
  %v641 = vmul.f32 %v513, 0.1
  %v642 = vmul.f32 %v514, 0.1
  %v643 = vmul.f32 %v515, 0.1
  %v644 = vmul.f32 %v516, 0.1
  %v645 = vmul.f32 %v517, 0.1
  %v646 = vmul.f32 %v518, 0.1
  %v647 = vmul.f32 %v519, 0.1
  %v648 = vmul.f32 %v520, 0.1
  %v649 = vmul.f32 %v521, 0.1
  %v650 = vmul.f32 %v522, 0.1
  %v651 = vmul.f32 %v523, 0.1
  %v652 = vmul.f32 %v524, 0.1
  %v653 = vmul.f32 %v525, 0.1
  %v654 = vmul.f32 %v526, 0.1
  %v655 = vmul.f32 %v527, 0.1
  %v656 = vmul.f32 %v528, 0.1
  %v657 = vmul.f32 %v529, 0.1
  %v658 = vmul.f32 %v530, 0.1
  %v659 = vmul.f32 %v531, 0.1
  %v660 = vsel %vm532, %v468, %v596
  %v661 = vsel %vm533, %v469, %v597
  %v662 = vsel %vm534, %v470, %v598
  %v663 = vsel %vm535, %v471, %v599
  %v664 = vsel %vm536, %v472, %v600
  %v665 = vsel %vm537, %v473, %v601
  %v666 = vsel %vm538, %v474, %v602
  %v667 = vsel %vm539, %v475, %v603
  %v668 = vsel %vm540, %v476, %v604
  %v669 = vsel %vm541, %v477, %v605
  %v670 = vsel %vm542, %v478, %v606
  %v671 = vsel %vm543, %v479, %v607
  %v672 = vsel %vm544, %v480, %v608
  %v673 = vsel %vm545, %v481, %v609
  %v674 = vsel %vm546, %v482, %v610
  %v675 = vsel %vm547, %v483, %v611
  %v676 = vsel %vm548, %v484, %v612
  %v677 = vsel %vm549, %v485, %v613
  %v678 = vsel %vm550, %v486, %v614
  %v679 = vsel %vm551, %v487, %v615
  %v680 = vsel %vm552, %v488, %v616
  %v681 = vsel %vm553, %v489, %v617
  %v682 = vsel %vm554, %v490, %v618
  %v683 = vsel %vm555, %v491, %v619
  %v684 = vsel %vm556, %v492, %v620
  %v685 = vsel %vm557, %v493, %v621
  %v686 = vsel %vm558, %v494, %v622
  %v687 = vsel %vm559, %v495, %v623
  %v688 = vsel %vm560, %v496, %v624
  %v689 = vsel %vm561, %v497, %v625
  %v690 = vsel %vm562, %v498, %v626
  %v691 = vsel %vm563, %v499, %v627
  %v692 = vsel %vm564, %v500, %v628
  %v693 = vsel %vm565, %v501, %v629
  %v694 = vsel %vm566, %v502, %v630
  %v695 = vsel %vm567, %v503, %v631
  %v696 = vsel %vm568, %v504, %v632
  %v697 = vsel %vm569, %v505, %v633
  %v698 = vsel %vm570, %v506, %v634
  %v699 = vsel %vm571, %v507, %v635
  %v700 = vsel %vm572, %v508, %v636
  %v701 = vsel %vm573, %v509, %v637
  %v702 = vsel %vm574, %v510, %v638
  %v703 = vsel %vm575, %v511, %v639
  %v704 = vsel %vm576, %v512, %v640
  %v705 = vsel %vm577, %v513, %v641
  %v706 = vsel %vm578, %v514, %v642
  %v707 = vsel %vm579, %v515, %v643
  %v708 = vsel %vm580, %v516, %v644
  %v709 = vsel %vm581, %v517, %v645
  %v710 = vsel %vm582, %v518, %v646
  %v711 = vsel %vm583, %v519, %v647
  %v712 = vsel %vm584, %v520, %v648
  %v713 = vsel %vm585, %v521, %v649
  %v714 = vsel %vm586, %v522, %v650
  %v715 = vsel %vm587, %v523, %v651
  %v716 = vsel %vm588, %v524, %v652
  %v717 = vsel %vm589, %v525, %v653
  %v718 = vsel %vm590, %v526, %v654
  %v719 = vsel %vm591, %v527, %v655
  %v720 = vsel %vm592, %v528, %v656
  %v721 = vsel %vm593, %v529, %v657
  %v722 = vsel %vm594, %v530, %v658
  %v723 = vsel %vm595, %v531, %v659
  %v724 = vpack.c.bf16 %v660, %v660
  %v725 = vpack.c.bf16 %v661, %v661
  %v726 = vpack.c.bf16 %v662, %v662
  %v727 = vpack.c.bf16 %v663, %v663
  %v728 = vpack.c.bf16 %v664, %v664
  %v729 = vpack.c.bf16 %v665, %v665
  %v730 = vpack.c.bf16 %v666, %v666
  %v731 = vpack.c.bf16 %v667, %v667
  %v732 = vpack.c.bf16 %v668, %v668
  %v733 = vpack.c.bf16 %v669, %v669
  %v734 = vpack.c.bf16 %v670, %v670
  %v735 = vpack.c.bf16 %v671, %v671
  %v736 = vpack.c.bf16 %v672, %v672
  %v737 = vpack.c.bf16 %v673, %v673
  %v738 = vpack.c.bf16 %v674, %v674
  %v739 = vpack.c.bf16 %v675, %v675
  %v740 = vpack.c.bf16 %v676, %v676
  %v741 = vpack.c.bf16 %v677, %v677
  %v742 = vpack.c.bf16 %v678, %v678
  %v743 = vpack.c.bf16 %v679, %v679
  %v744 = vpack.c.bf16 %v680, %v680
  %v745 = vpack.c.bf16 %v681, %v681
  %v746 = vpack.c.bf16 %v682, %v682
  %v747 = vpack.c.bf16 %v683, %v683
  %v748 = vpack.c.bf16 %v684, %v684
  %v749 = vpack.c.bf16 %v685, %v685
  %v750 = vpack.c.bf16 %v686, %v686
  %v751 = vpack.c.bf16 %v687, %v687
  %v752 = vpack.c.bf16 %v688, %v688
  %v753 = vpack.c.bf16 %v689, %v689
  %v754 = vpack.c.bf16 %v690, %v690
  %v755 = vpack.c.bf16 %v691, %v691
  %v756 = vpack.c.bf16 %v692, %v692
  %v757 = vpack.c.bf16 %v693, %v693
  %v758 = vpack.c.bf16 %v694, %v694
  %v759 = vpack.c.bf16 %v695, %v695
  %v760 = vpack.c.bf16 %v696, %v696
  %v761 = vpack.c.bf16 %v697, %v697
  %v762 = vpack.c.bf16 %v698, %v698
  %v763 = vpack.c.bf16 %v699, %v699
  %v764 = vpack.c.bf16 %v700, %v700
  %v765 = vpack.c.bf16 %v701, %v701
  %v766 = vpack.c.bf16 %v702, %v702
  %v767 = vpack.c.bf16 %v703, %v703
  %v768 = vpack.c.bf16 %v704, %v704
  %v769 = vpack.c.bf16 %v705, %v705
  %v770 = vpack.c.bf16 %v706, %v706
  %v771 = vpack.c.bf16 %v707, %v707
  %v772 = vpack.c.bf16 %v708, %v708
  %v773 = vpack.c.bf16 %v709, %v709
  %v774 = vpack.c.bf16 %v710, %v710
  %v775 = vpack.c.bf16 %v711, %v711
  %v776 = vpack.c.bf16 %v712, %v712
  %v777 = vpack.c.bf16 %v713, %v713
  %v778 = vpack.c.bf16 %v714, %v714
  %v779 = vpack.c.bf16 %v715, %v715
  %v780 = vpack.c.bf16 %v716, %v716
  %v781 = vpack.c.bf16 %v717, %v717
  %v782 = vpack.c.bf16 %v718, %v718
  %v783 = vpack.c.bf16 %v719, %v719
  %v784 = vpack.c.bf16 %v720, %v720
  %v785 = vpack.c.bf16 %v721, %v721
  %v786 = vpack.c.bf16 %v722, %v722
  %v787 = vpack.c.bf16 %v723, %v723
  %vm788 = vcmask 27648
  %789 = vst.msk [vmem:[%s7] sm:$0xf] %vm788, %v724
  %790 = vst.msk [vmem:[%s7 + $0x4] sm:$0xf] %vm788, %v725
  %791 = vst.msk [vmem:[%s7 + $0x8] sm:$0xf] %vm788, %v726
  %792 = vst.msk [vmem:[%s7 + $0xc] sm:$0xf] %vm788, %v727
  %793 = vst.msk [vmem:[%s7 + $0x10] sm:$0xf] %vm788, %v728
  %794 = vst.msk [vmem:[%s7 + $0x14] sm:$0xf] %vm788, %v729
  %795 = vst.msk [vmem:[%s7 + $0x18] sm:$0xf] %vm788, %v730
  %796 = vst.msk [vmem:[%s7 + $0x1c] sm:$0xf] %vm788, %v731
  %797 = vst.msk [vmem:[%s7 + $0x20] sm:$0xf] %vm788, %v732
  %798 = vst.msk [vmem:[%s7 + $0x24] sm:$0xf] %vm788, %v733
  %799 = vst.msk [vmem:[%s7 + $0x28] sm:$0xf] %vm788, %v734
  %800 = vst.msk [vmem:[%s7 + $0x2c] sm:$0xf] %vm788, %v735
  %801 = vst.msk [vmem:[%s7 + $0x30] sm:$0xf] %vm788, %v736
  %802 = vst.msk [vmem:[%s7 + $0x34] sm:$0xf] %vm788, %v737
  %803 = vst.msk [vmem:[%s7 + $0x38] sm:$0xf] %vm788, %v738
  %804 = vst.msk [vmem:[%s7 + $0x3c] sm:$0xf] %vm788, %v739
  %805 = vst.msk [vmem:[%s7 + $0x40] sm:$0xf] %vm788, %v740
  %806 = vst.msk [vmem:[%s7 + $0x44] sm:$0xf] %vm788, %v741
  %807 = vst.msk [vmem:[%s7 + $0x48] sm:$0xf] %vm788, %v742
  %808 = vst.msk [vmem:[%s7 + $0x4c] sm:$0xf] %vm788, %v743
  %809 = vst.msk [vmem:[%s7 + $0x50] sm:$0xf] %vm788, %v744
  %810 = vst.msk [vmem:[%s7 + $0x54] sm:$0xf] %vm788, %v745
  %811 = vst.msk [vmem:[%s7 + $0x58] sm:$0xf] %vm788, %v746
  %812 = vst.msk [vmem:[%s7 + $0x5c] sm:$0xf] %vm788, %v747
  %813 = vst.msk [vmem:[%s7 + $0x60] sm:$0xf] %vm788, %v748
  %814 = vst.msk [vmem:[%s7 + $0x64] sm:$0xf] %vm788, %v749
  %815 = vst.msk [vmem:[%s7 + $0x68] sm:$0xf] %vm788, %v750
  %816 = vst.msk [vmem:[%s7 + $0x6c] sm:$0xf] %vm788, %v751
  %817 = vst.msk [vmem:[%s7 + $0x70] sm:$0xf] %vm788, %v752
  %818 = vst.msk [vmem:[%s7 + $0x74] sm:$0xf] %vm788, %v753
  %819 = vst.msk [vmem:[%s7 + $0x78] sm:$0xf] %vm788, %v754
  %820 = vst.msk [vmem:[%s7 + $0x7c] sm:$0xf] %vm788, %v755
  %821 = vst.msk [vmem:[%s7 + $0x80] sm:$0xf] %vm788, %v756
  %822 = vst.msk [vmem:[%s7 + $0x84] sm:$0xf] %vm788, %v757
  %823 = vst.msk [vmem:[%s7 + $0x88] sm:$0xf] %vm788, %v758
  %824 = vst.msk [vmem:[%s7 + $0x8c] sm:$0xf] %vm788, %v759
  %825 = vst.msk [vmem:[%s7 + $0x90] sm:$0xf] %vm788, %v760
  %826 = vst.msk [vmem:[%s7 + $0x94] sm:$0xf] %vm788, %v761
  %827 = vst.msk [vmem:[%s7 + $0x98] sm:$0xf] %vm788, %v762
  %828 = vst.msk [vmem:[%s7 + $0x9c] sm:$0xf] %vm788, %v763
  %829 = vst.msk [vmem:[%s7 + $0xa0] sm:$0xf] %vm788, %v764
  %830 = vst.msk [vmem:[%s7 + $0xa4] sm:$0xf] %vm788, %v765
  %831 = vst.msk [vmem:[%s7 + $0xa8] sm:$0xf] %vm788, %v766
  %832 = vst.msk [vmem:[%s7 + $0xac] sm:$0xf] %vm788, %v767
  %833 = vst.msk [vmem:[%s7 + $0xb0] sm:$0xf] %vm788, %v768
  %834 = vst.msk [vmem:[%s7 + $0xb4] sm:$0xf] %vm788, %v769
  %835 = vst.msk [vmem:[%s7 + $0xb8] sm:$0xf] %vm788, %v770
  %836 = vst.msk [vmem:[%s7 + $0xbc] sm:$0xf] %vm788, %v771
  %837 = vst.msk [vmem:[%s7 + $0xc0] sm:$0xf] %vm788, %v772
  %838 = vst.msk [vmem:[%s7 + $0xc4] sm:$0xf] %vm788, %v773
  %839 = vst.msk [vmem:[%s7 + $0xc8] sm:$0xf] %vm788, %v774
  %840 = vst.msk [vmem:[%s7 + $0xcc] sm:$0xf] %vm788, %v775
  %841 = vst.msk [vmem:[%s7 + $0xd0] sm:$0xf] %vm788, %v776
  %842 = vst.msk [vmem:[%s7 + $0xd4] sm:$0xf] %vm788, %v777
  %843 = vst.msk [vmem:[%s7 + $0xd8] sm:$0xf] %vm788, %v778
  %844 = vst.msk [vmem:[%s7 + $0xdc] sm:$0xf] %vm788, %v779
  %845 = vst.msk [vmem:[%s7 + $0xe0] sm:$0xf] %vm788, %v780
  %846 = vst.msk [vmem:[%s7 + $0xe4] sm:$0xf] %vm788, %v781
  %847 = vst.msk [vmem:[%s7 + $0xe8] sm:$0xf] %vm788, %v782
  %848 = vst.msk [vmem:[%s7 + $0xec] sm:$0xf] %vm788, %v783
  %849 = vst.msk [vmem:[%s7 + $0xf0] sm:$0xf] %vm788, %v784
  %850 = vst.msk [vmem:[%s7 + $0xf4] sm:$0xf] %vm788, %v785
  %851 = vst.msk [vmem:[%s7 + $0xf8] sm:$0xf] %vm788, %v786
  %852 = vst.msk [vmem:[%s7 + $0xfc] sm:$0xf] %vm788, %v787
  %v853 = vld [vmem:[%s4] sm:$0xf]
  %v855 = vsel %vm223, %v853, 0
  %857 = vmatpush.bf16.msra.mxu0 0
  %858 = vmatpush.bf16.msra.mxu0 0
  %859 = vmatpush.bf16.msra.mxu0 0
  %860 = vmatpush.bf16.msra.mxu0 0
  %861 = vmatpush.bf16.msra.mxu0 0
  %862 = vmatpush.bf16.msra.mxu0 0
  %863 = vmatpush.bf16.msra.mxu0 0
  %864 = vmatpush.bf16.msra.mxu0 %v855
  %865 = vmatmul.bf16.gmra.mxu0 %v128
  %v866 = vpop.f32.mrf.mxu0
  %v867 = vadd.f32 0.0, %v866
  %v868 = vpop.f32.mrf.mxu0
  %v869 = vadd.f32 0.0, %v868
  %870 = vmatmul.bf16.gmra.mxu0 %v131
  %v871 = vpop.f32.mrf.mxu0
  %v872 = vadd.f32 0.0, %v871
  %v873 = vpop.f32.mrf.mxu0
  %v874 = vadd.f32 0.0, %v873
  %875 = vmatmul.bf16.gmra.mxu0 %v134
  %v876 = vpop.f32.mrf.mxu0
  %v877 = vadd.f32 0.0, %v876
  %v878 = vpop.f32.mrf.mxu0
  %v879 = vadd.f32 0.0, %v878
  %880 = vmatmul.bf16.gmra.mxu0 %v137
  %v881 = vpop.f32.mrf.mxu0
  %v882 = vadd.f32 0.0, %v881
  %v883 = vpop.f32.mrf.mxu0
  %v884 = vadd.f32 0.0, %v883
  %885 = vmatmul.bf16.gmra.mxu0 %v140
  %v886 = vpop.f32.mrf.mxu0
  %v887 = vadd.f32 0.0, %v886
  %v888 = vpop.f32.mrf.mxu0
  %v889 = vadd.f32 0.0, %v888
  %890 = vmatmul.bf16.gmra.mxu0 %v143
  %v891 = vpop.f32.mrf.mxu0
  %v892 = vadd.f32 0.0, %v891
  %v893 = vpop.f32.mrf.mxu0
  %v894 = vadd.f32 0.0, %v893
  %895 = vmatmul.bf16.gmra.mxu0 %v146
  %v896 = vpop.f32.mrf.mxu0
  %v897 = vadd.f32 0.0, %v896
  %v898 = vpop.f32.mrf.mxu0
  %v899 = vadd.f32 0.0, %v898
  %900 = vmatmul.bf16.gmra.mxu0 %v149
  %v901 = vpop.f32.mrf.mxu0
  %v902 = vadd.f32 0.0, %v901
  %v903 = vpop.f32.mrf.mxu0
  %v904 = vadd.f32 0.0, %v903
  %905 = vmatmul.bf16.gmra.mxu0 %v152
  %v906 = vpop.f32.mrf.mxu0
  %v907 = vadd.f32 0.0, %v906
  %v908 = vpop.f32.mrf.mxu0
  %v909 = vadd.f32 0.0, %v908
  %910 = vmatmul.bf16.gmra.mxu0 %v155
  %v911 = vpop.f32.mrf.mxu0
  %v912 = vadd.f32 0.0, %v911
  %v913 = vpop.f32.mrf.mxu0
  %v914 = vadd.f32 0.0, %v913
  %915 = vmatmul.bf16.gmra.mxu0 %v158
  %v916 = vpop.f32.mrf.mxu0
  %v917 = vadd.f32 0.0, %v916
  %v918 = vpop.f32.mrf.mxu0
  %v919 = vadd.f32 0.0, %v918
  %920 = vmatmul.bf16.gmra.mxu0 %v161
  %v921 = vpop.f32.mrf.mxu0
  %v922 = vadd.f32 0.0, %v921
  %v923 = vpop.f32.mrf.mxu0
  %v924 = vadd.f32 0.0, %v923
  %925 = vmatmul.bf16.gmra.mxu0 %v164
  %v926 = vpop.f32.mrf.mxu0
  %v927 = vadd.f32 0.0, %v926
  %v928 = vpop.f32.mrf.mxu0
  %v929 = vadd.f32 0.0, %v928
  %930 = vmatmul.bf16.gmra.mxu0 %v167
  %v931 = vpop.f32.mrf.mxu0
  %v932 = vadd.f32 0.0, %v931
  %v933 = vpop.f32.mrf.mxu0
  %v934 = vadd.f32 0.0, %v933
  %935 = vmatmul.bf16.gmra.mxu0 %v170
  %v936 = vpop.f32.mrf.mxu0
  %v937 = vadd.f32 0.0, %v936
  %v938 = vpop.f32.mrf.mxu0
  %v939 = vadd.f32 0.0, %v938
  %940 = vmatmul.bf16.gmra.mxu0 %v173
  %v941 = vpop.f32.mrf.mxu0
  %v942 = vadd.f32 0.0, %v941
  %v943 = vpop.f32.mrf.mxu0
  %v944 = vadd.f32 0.0, %v943
  %945 = vmatmul.bf16.gmra.mxu0 %v176
  %v946 = vpop.f32.mrf.mxu0
  %v947 = vadd.f32 0.0, %v946
  %v948 = vpop.f32.mrf.mxu0
  %v949 = vadd.f32 0.0, %v948
  %950 = vmatmul.bf16.gmra.mxu0 %v179
  %v951 = vpop.f32.mrf.mxu0
  %v952 = vadd.f32 0.0, %v951
  %v953 = vpop.f32.mrf.mxu0
  %v954 = vadd.f32 0.0, %v953
  %955 = vmatmul.bf16.gmra.mxu0 %v182
  %v956 = vpop.f32.mrf.mxu0
  %v957 = vadd.f32 0.0, %v956
  %v958 = vpop.f32.mrf.mxu0
  %v959 = vadd.f32 0.0, %v958
  %960 = vmatmul.bf16.gmra.mxu0 %v185
  %v961 = vpop.f32.mrf.mxu0
  %v962 = vadd.f32 0.0, %v961
  %v963 = vpop.f32.mrf.mxu0
  %v964 = vadd.f32 0.0, %v963
  %965 = vmatmul.bf16.gmra.mxu0 %v188
  %v966 = vpop.f32.mrf.mxu0
  %v967 = vadd.f32 0.0, %v966
  %v968 = vpop.f32.mrf.mxu0
  %v969 = vadd.f32 0.0, %v968
  %970 = vmatmul.bf16.gmra.mxu0 %v191
  %v971 = vpop.f32.mrf.mxu0
  %v972 = vadd.f32 0.0, %v971
  %v973 = vpop.f32.mrf.mxu0
  %v974 = vadd.f32 0.0, %v973
  %975 = vmatmul.bf16.gmra.mxu0 %v194
  %v976 = vpop.f32.mrf.mxu0
  %v977 = vadd.f32 0.0, %v976
  %v978 = vpop.f32.mrf.mxu0
  %v979 = vadd.f32 0.0, %v978
  %980 = vmatmul.bf16.gmra.mxu0 %v197
  %v981 = vpop.f32.mrf.mxu0
  %v982 = vadd.f32 0.0, %v981
  %v983 = vpop.f32.mrf.mxu0
  %v984 = vadd.f32 0.0, %v983
  %985 = vmatmul.bf16.gmra.mxu0 %v200
  %v986 = vpop.f32.mrf.mxu0
  %v987 = vadd.f32 0.0, %v986
  %v988 = vpop.f32.mrf.mxu0
  %v989 = vadd.f32 0.0, %v988
  %990 = vmatmul.bf16.gmra.mxu0 %v203
  %v991 = vpop.f32.mrf.mxu0
  %v992 = vadd.f32 0.0, %v991
  %v993 = vpop.f32.mrf.mxu0
  %v994 = vadd.f32 0.0, %v993
  %995 = vmatmul.bf16.gmra.mxu0 %v206
  %v996 = vpop.f32.mrf.mxu0
  %v997 = vadd.f32 0.0, %v996
  %v998 = vpop.f32.mrf.mxu0
  %v999 = vadd.f32 0.0, %v998
  %1000 = vmatmul.bf16.gmra.mxu0 %v209
  %v1001 = vpop.f32.mrf.mxu0
  %v1002 = vadd.f32 0.0, %v1001
  %v1003 = vpop.f32.mrf.mxu0
  %v1004 = vadd.f32 0.0, %v1003
  %1005 = vmatmul.bf16.gmra.mxu0 %v212
  %v1006 = vpop.f32.mrf.mxu0
  %v1007 = vadd.f32 0.0, %v1006
  %v1008 = vpop.f32.mrf.mxu0
  %v1009 = vadd.f32 0.0, %v1008
  %1010 = vmatmul.bf16.gmra.mxu0 %v215
  %v1011 = vpop.f32.mrf.mxu0
  %v1012 = vadd.f32 0.0, %v1011
  %v1013 = vpop.f32.mrf.mxu0
  %v1014 = vadd.f32 0.0, %v1013
  %1015 = vmatmul.bf16.gmra.mxu0 %v218
  %v1016 = vpop.f32.mrf.mxu0
  %v1017 = vadd.f32 0.0, %v1016
  %v1018 = vpop.f32.mrf.mxu0
  %v1019 = vadd.f32 0.0, %v1018
  %1020 = vmatmul.bf16.gmra.mxu0 %v221
  %v1021 = vpop.f32.mrf.mxu0
  %v1022 = vadd.f32 0.0, %v1021
  %v1023 = vpop.f32.mrf.mxu0
  %v1024 = vadd.f32 0.0, %v1023
  %1025 = vdwg.mxu0
  %v1026 = vld [vmem:[%s5] sm:$0x1]
  %v1028 = vperm.slane %v1026, 0
  %v1030 = vmul.f32 %v867, %v1028
  %v1031 = vmul.f32 %v869, %v1028
  %v1032 = vmul.f32 %v872, %v1028
  %v1033 = vmul.f32 %v874, %v1028
  %v1034 = vmul.f32 %v877, %v1028
  %v1035 = vmul.f32 %v879, %v1028
  %v1036 = vmul.f32 %v882, %v1028
  %v1037 = vmul.f32 %v884, %v1028
  %v1038 = vmul.f32 %v887, %v1028
  %v1039 = vmul.f32 %v889, %v1028
  %v1040 = vmul.f32 %v892, %v1028
  %v1041 = vmul.f32 %v894, %v1028
  %v1042 = vmul.f32 %v897, %v1028
  %v1043 = vmul.f32 %v899, %v1028
  %v1044 = vmul.f32 %v902, %v1028
  %v1045 = vmul.f32 %v904, %v1028
  %v1046 = vmul.f32 %v907, %v1028
  %v1047 = vmul.f32 %v909, %v1028
  %v1048 = vmul.f32 %v912, %v1028
  %v1049 = vmul.f32 %v914, %v1028
  %v1050 = vmul.f32 %v917, %v1028
  %v1051 = vmul.f32 %v919, %v1028
  %v1052 = vmul.f32 %v922, %v1028
  %v1053 = vmul.f32 %v924, %v1028
  %v1054 = vmul.f32 %v927, %v1028
  %v1055 = vmul.f32 %v929, %v1028
  %v1056 = vmul.f32 %v932, %v1028
  %v1057 = vmul.f32 %v934, %v1028
  %v1058 = vmul.f32 %v937, %v1028
  %v1059 = vmul.f32 %v939, %v1028
  %v1060 = vmul.f32 %v942, %v1028
  %v1061 = vmul.f32 %v944, %v1028
  %v1062 = vmul.f32 %v947, %v1028
  %v1063 = vmul.f32 %v949, %v1028
  %v1064 = vmul.f32 %v952, %v1028
  %v1065 = vmul.f32 %v954, %v1028
  %v1066 = vmul.f32 %v957, %v1028
  %v1067 = vmul.f32 %v959, %v1028
  %v1068 = vmul.f32 %v962, %v1028
  %v1069 = vmul.f32 %v964, %v1028
  %v1070 = vmul.f32 %v967, %v1028
  %v1071 = vmul.f32 %v969, %v1028
  %v1072 = vmul.f32 %v972, %v1028
  %v1073 = vmul.f32 %v974, %v1028
  %v1074 = vmul.f32 %v977, %v1028
  %v1075 = vmul.f32 %v979, %v1028
  %v1076 = vmul.f32 %v982, %v1028
  %v1077 = vmul.f32 %v984, %v1028
  %v1078 = vmul.f32 %v987, %v1028
  %v1079 = vmul.f32 %v989, %v1028
  %v1080 = vmul.f32 %v992, %v1028
  %v1081 = vmul.f32 %v994, %v1028
  %v1082 = vmul.f32 %v997, %v1028
  %v1083 = vmul.f32 %v999, %v1028
  %v1084 = vmul.f32 %v1002, %v1028
  %v1085 = vmul.f32 %v1004, %v1028
  %v1086 = vmul.f32 %v1007, %v1028
  %v1087 = vmul.f32 %v1009, %v1028
  %v1088 = vmul.f32 %v1012, %v1028
  %v1089 = vmul.f32 %v1014, %v1028
  %v1090 = vmul.f32 %v1017, %v1028
  %v1091 = vmul.f32 %v1019, %v1028
  %v1092 = vmul.f32 %v1022, %v1028
  %v1093 = vmul.f32 %v1024, %v1028
  %v1094 = vld [vmem:[%s6] sm:$0x1]
  %v1096 = vperm.slane %v1094, 0
  %v1098 = vadd.f32 %v1030, %v1096
  %v1099 = vadd.f32 %v1031, %v1096
  %v1100 = vadd.f32 %v1032, %v1096
  %v1101 = vadd.f32 %v1033, %v1096
  %v1102 = vadd.f32 %v1034, %v1096
  %v1103 = vadd.f32 %v1035, %v1096
  %v1104 = vadd.f32 %v1036, %v1096
  %v1105 = vadd.f32 %v1037, %v1096
  %v1106 = vadd.f32 %v1038, %v1096
  %v1107 = vadd.f32 %v1039, %v1096
  %v1108 = vadd.f32 %v1040, %v1096
  %v1109 = vadd.f32 %v1041, %v1096
  %v1110 = vadd.f32 %v1042, %v1096
  %v1111 = vadd.f32 %v1043, %v1096
  %v1112 = vadd.f32 %v1044, %v1096
  %v1113 = vadd.f32 %v1045, %v1096
  %v1114 = vadd.f32 %v1046, %v1096
  %v1115 = vadd.f32 %v1047, %v1096
  %v1116 = vadd.f32 %v1048, %v1096
  %v1117 = vadd.f32 %v1049, %v1096
  %v1118 = vadd.f32 %v1050, %v1096
  %v1119 = vadd.f32 %v1051, %v1096
  %v1120 = vadd.f32 %v1052, %v1096
  %v1121 = vadd.f32 %v1053, %v1096
  %v1122 = vadd.f32 %v1054, %v1096
  %v1123 = vadd.f32 %v1055, %v1096
  %v1124 = vadd.f32 %v1056, %v1096
  %v1125 = vadd.f32 %v1057, %v1096
  %v1126 = vadd.f32 %v1058, %v1096
  %v1127 = vadd.f32 %v1059, %v1096
  %v1128 = vadd.f32 %v1060, %v1096
  %v1129 = vadd.f32 %v1061, %v1096
  %v1130 = vadd.f32 %v1062, %v1096
  %v1131 = vadd.f32 %v1063, %v1096
  %v1132 = vadd.f32 %v1064, %v1096
  %v1133 = vadd.f32 %v1065, %v1096
  %v1134 = vadd.f32 %v1066, %v1096
  %v1135 = vadd.f32 %v1067, %v1096
  %v1136 = vadd.f32 %v1068, %v1096
  %v1137 = vadd.f32 %v1069, %v1096
  %v1138 = vadd.f32 %v1070, %v1096
  %v1139 = vadd.f32 %v1071, %v1096
  %v1140 = vadd.f32 %v1072, %v1096
  %v1141 = vadd.f32 %v1073, %v1096
  %v1142 = vadd.f32 %v1074, %v1096
  %v1143 = vadd.f32 %v1075, %v1096
  %v1144 = vadd.f32 %v1076, %v1096
  %v1145 = vadd.f32 %v1077, %v1096
  %v1146 = vadd.f32 %v1078, %v1096
  %v1147 = vadd.f32 %v1079, %v1096
  %v1148 = vadd.f32 %v1080, %v1096
  %v1149 = vadd.f32 %v1081, %v1096
  %v1150 = vadd.f32 %v1082, %v1096
  %v1151 = vadd.f32 %v1083, %v1096
  %v1152 = vadd.f32 %v1084, %v1096
  %v1153 = vadd.f32 %v1085, %v1096
  %v1154 = vadd.f32 %v1086, %v1096
  %v1155 = vadd.f32 %v1087, %v1096
  %v1156 = vadd.f32 %v1088, %v1096
  %v1157 = vadd.f32 %v1089, %v1096
  %v1158 = vadd.f32 %v1090, %v1096
  %v1159 = vadd.f32 %v1091, %v1096
  %v1160 = vadd.f32 %v1092, %v1096
  %v1161 = vadd.f32 %v1093, %v1096
  %vm1162 = vcmp.gt.f32.partialorder %v1098, 0.0
  %vm1163 = vcmp.gt.f32.partialorder %v1099, 0.0
  %vm1164 = vcmp.gt.f32.partialorder %v1100, 0.0
  %vm1165 = vcmp.gt.f32.partialorder %v1101, 0.0
  %vm1166 = vcmp.gt.f32.partialorder %v1102, 0.0
  %vm1167 = vcmp.gt.f32.partialorder %v1103, 0.0
  %vm1168 = vcmp.gt.f32.partialorder %v1104, 0.0
  %vm1169 = vcmp.gt.f32.partialorder %v1105, 0.0
  %vm1170 = vcmp.gt.f32.partialorder %v1106, 0.0
  %vm1171 = vcmp.gt.f32.partialorder %v1107, 0.0
  %vm1172 = vcmp.gt.f32.partialorder %v1108, 0.0
  %vm1173 = vcmp.gt.f32.partialorder %v1109, 0.0
  %vm1174 = vcmp.gt.f32.partialorder %v1110, 0.0
  %vm1175 = vcmp.gt.f32.partialorder %v1111, 0.0
  %vm1176 = vcmp.gt.f32.partialorder %v1112, 0.0
  %vm1177 = vcmp.gt.f32.partialorder %v1113, 0.0
  %vm1178 = vcmp.gt.f32.partialorder %v1114, 0.0
  %vm1179 = vcmp.gt.f32.partialorder %v1115, 0.0
  %vm1180 = vcmp.gt.f32.partialorder %v1116, 0.0
  %vm1181 = vcmp.gt.f32.partialorder %v1117, 0.0
  %vm1182 = vcmp.gt.f32.partialorder %v1118, 0.0
  %vm1183 = vcmp.gt.f32.partialorder %v1119, 0.0
  %vm1184 = vcmp.gt.f32.partialorder %v1120, 0.0
  %vm1185 = vcmp.gt.f32.partialorder %v1121, 0.0
  %vm1186 = vcmp.gt.f32.partialorder %v1122, 0.0
  %vm1187 = vcmp.gt.f32.partialorder %v1123, 0.0
  %vm1188 = vcmp.gt.f32.partialorder %v1124, 0.0
  %vm1189 = vcmp.gt.f32.partialorder %v1125, 0.0
  %vm1190 = vcmp.gt.f32.partialorder %v1126, 0.0
  %vm1191 = vcmp.gt.f32.partialorder %v1127, 0.0
  %vm1192 = vcmp.gt.f32.partialorder %v1128, 0.0
  %vm1193 = vcmp.gt.f32.partialorder %v1129, 0.0
  %vm1194 = vcmp.gt.f32.partialorder %v1130, 0.0
  %vm1195 = vcmp.gt.f32.partialorder %v1131, 0.0
  %vm1196 = vcmp.gt.f32.partialorder %v1132, 0.0
  %vm1197 = vcmp.gt.f32.partialorder %v1133, 0.0
  %vm1198 = vcmp.gt.f32.partialorder %v1134, 0.0
  %vm1199 = vcmp.gt.f32.partialorder %v1135, 0.0
  %vm1200 = vcmp.gt.f32.partialorder %v1136, 0.0
  %vm1201 = vcmp.gt.f32.partialorder %v1137, 0.0
  %vm1202 = vcmp.gt.f32.partialorder %v1138, 0.0
  %vm1203 = vcmp.gt.f32.partialorder %v1139, 0.0
  %vm1204 = vcmp.gt.f32.partialorder %v1140, 0.0
  %vm1205 = vcmp.gt.f32.partialorder %v1141, 0.0
  %vm1206 = vcmp.gt.f32.partialorder %v1142, 0.0
  %vm1207 = vcmp.gt.f32.partialorder %v1143, 0.0
  %vm1208 = vcmp.gt.f32.partialorder %v1144, 0.0
  %vm1209 = vcmp.gt.f32.partialorder %v1145, 0.0
  %vm1210 = vcmp.gt.f32.partialorder %v1146, 0.0
  %vm1211 = vcmp.gt.f32.partialorder %v1147, 0.0
  %vm1212 = vcmp.gt.f32.partialorder %v1148, 0.0
  %vm1213 = vcmp.gt.f32.partialorder %v1149, 0.0
  %vm1214 = vcmp.gt.f32.partialorder %v1150, 0.0
  %vm1215 = vcmp.gt.f32.partialorder %v1151, 0.0
  %vm1216 = vcmp.gt.f32.partialorder %v1152, 0.0
  %vm1217 = vcmp.gt.f32.partialorder %v1153, 0.0
  %vm1218 = vcmp.gt.f32.partialorder %v1154, 0.0
  %vm1219 = vcmp.gt.f32.partialorder %v1155, 0.0
  %vm1220 = vcmp.gt.f32.partialorder %v1156, 0.0
  %vm1221 = vcmp.gt.f32.partialorder %v1157, 0.0
  %vm1222 = vcmp.gt.f32.partialorder %v1158, 0.0
  %vm1223 = vcmp.gt.f32.partialorder %v1159, 0.0
  %vm1224 = vcmp.gt.f32.partialorder %v1160, 0.0
  %vm1225 = vcmp.gt.f32.partialorder %v1161, 0.0
  %v1226 = vmul.f32 %v1098, 0.1
  %v1227 = vmul.f32 %v1099, 0.1
  %v1228 = vmul.f32 %v1100, 0.1
  %v1229 = vmul.f32 %v1101, 0.1
  %v1230 = vmul.f32 %v1102, 0.1
  %v1231 = vmul.f32 %v1103, 0.1
  %v1232 = vmul.f32 %v1104, 0.1
  %v1233 = vmul.f32 %v1105, 0.1
  %v1234 = vmul.f32 %v1106, 0.1
  %v1235 = vmul.f32 %v1107, 0.1
  %v1236 = vmul.f32 %v1108, 0.1
  %v1237 = vmul.f32 %v1109, 0.1
  %v1238 = vmul.f32 %v1110, 0.1
  %v1239 = vmul.f32 %v1111, 0.1
  %v1240 = vmul.f32 %v1112, 0.1
  %v1241 = vmul.f32 %v1113, 0.1
  %v1242 = vmul.f32 %v1114, 0.1
  %v1243 = vmul.f32 %v1115, 0.1
  %v1244 = vmul.f32 %v1116, 0.1
  %v1245 = vmul.f32 %v1117, 0.1
  %v1246 = vmul.f32 %v1118, 0.1
  %v1247 = vmul.f32 %v1119, 0.1
  %v1248 = vmul.f32 %v1120, 0.1
  %v1249 = vmul.f32 %v1121, 0.1
  %v1250 = vmul.f32 %v1122, 0.1
  %v1251 = vmul.f32 %v1123, 0.1
  %v1252 = vmul.f32 %v1124, 0.1
  %v1253 = vmul.f32 %v1125, 0.1
  %v1254 = vmul.f32 %v1126, 0.1
  %v1255 = vmul.f32 %v1127, 0.1
  %v1256 = vmul.f32 %v1128, 0.1
  %v1257 = vmul.f32 %v1129, 0.1
  %v1258 = vmul.f32 %v1130, 0.1
  %v1259 = vmul.f32 %v1131, 0.1
  %v1260 = vmul.f32 %v1132, 0.1
  %v1261 = vmul.f32 %v1133, 0.1
  %v1262 = vmul.f32 %v1134, 0.1
  %v1263 = vmul.f32 %v1135, 0.1
  %v1264 = vmul.f32 %v1136, 0.1
  %v1265 = vmul.f32 %v1137, 0.1
  %v1266 = vmul.f32 %v1138, 0.1
  %v1267 = vmul.f32 %v1139, 0.1
  %v1268 = vmul.f32 %v1140, 0.1
  %v1269 = vmul.f32 %v1141, 0.1
  %v1270 = vmul.f32 %v1142, 0.1
  %v1271 = vmul.f32 %v1143, 0.1
  %v1272 = vmul.f32 %v1144, 0.1
  %v1273 = vmul.f32 %v1145, 0.1
  %v1274 = vmul.f32 %v1146, 0.1
  %v1275 = vmul.f32 %v1147, 0.1
  %v1276 = vmul.f32 %v1148, 0.1
  %v1277 = vmul.f32 %v1149, 0.1
  %v1278 = vmul.f32 %v1150, 0.1
  %v1279 = vmul.f32 %v1151, 0.1
  %v1280 = vmul.f32 %v1152, 0.1
  %v1281 = vmul.f32 %v1153, 0.1
  %v1282 = vmul.f32 %v1154, 0.1
  %v1283 = vmul.f32 %v1155, 0.1
  %v1284 = vmul.f32 %v1156, 0.1
  %v1285 = vmul.f32 %v1157, 0.1
  %v1286 = vmul.f32 %v1158, 0.1
  %v1287 = vmul.f32 %v1159, 0.1
  %v1288 = vmul.f32 %v1160, 0.1
  %v1289 = vmul.f32 %v1161, 0.1
  %v1290 = vsel %vm1162, %v1098, %v1226
  %v1291 = vsel %vm1163, %v1099, %v1227
  %v1292 = vsel %vm1164, %v1100, %v1228
  %v1293 = vsel %vm1165, %v1101, %v1229
  %v1294 = vsel %vm1166, %v1102, %v1230
  %v1295 = vsel %vm1167, %v1103, %v1231
  %v1296 = vsel %vm1168, %v1104, %v1232
  %v1297 = vsel %vm1169, %v1105, %v1233
  %v1298 = vsel %vm1170, %v1106, %v1234
  %v1299 = vsel %vm1171, %v1107, %v1235
  %v1300 = vsel %vm1172, %v1108, %v1236
  %v1301 = vsel %vm1173, %v1109, %v1237
  %v1302 = vsel %vm1174, %v1110, %v1238
  %v1303 = vsel %vm1175, %v1111, %v1239
  %v1304 = vsel %vm1176, %v1112, %v1240
  %v1305 = vsel %vm1177, %v1113, %v1241
  %v1306 = vsel %vm1178, %v1114, %v1242
  %v1307 = vsel %vm1179, %v1115, %v1243
  %v1308 = vsel %vm1180, %v1116, %v1244
  %v1309 = vsel %vm1181, %v1117, %v1245
  %v1310 = vsel %vm1182, %v1118, %v1246
  %v1311 = vsel %vm1183, %v1119, %v1247
  %v1312 = vsel %vm1184, %v1120, %v1248
  %v1313 = vsel %vm1185, %v1121, %v1249
  %v1314 = vsel %vm1186, %v1122, %v1250
  %v1315 = vsel %vm1187, %v1123, %v1251
  %v1316 = vsel %vm1188, %v1124, %v1252
  %v1317 = vsel %vm1189, %v1125, %v1253
  %v1318 = vsel %vm1190, %v1126, %v1254
  %v1319 = vsel %vm1191, %v1127, %v1255
  %v1320 = vsel %vm1192, %v1128, %v1256
  %v1321 = vsel %vm1193, %v1129, %v1257
  %v1322 = vsel %vm1194, %v1130, %v1258
  %v1323 = vsel %vm1195, %v1131, %v1259
  %v1324 = vsel %vm1196, %v1132, %v1260
  %v1325 = vsel %vm1197, %v1133, %v1261
  %v1326 = vsel %vm1198, %v1134, %v1262
  %v1327 = vsel %vm1199, %v1135, %v1263
  %v1328 = vsel %vm1200, %v1136, %v1264
  %v1329 = vsel %vm1201, %v1137, %v1265
  %v1330 = vsel %vm1202, %v1138, %v1266
  %v1331 = vsel %vm1203, %v1139, %v1267
  %v1332 = vsel %vm1204, %v1140, %v1268
  %v1333 = vsel %vm1205, %v1141, %v1269
  %v1334 = vsel %vm1206, %v1142, %v1270
  %v1335 = vsel %vm1207, %v1143, %v1271
  %v1336 = vsel %vm1208, %v1144, %v1272
  %v1337 = vsel %vm1209, %v1145, %v1273
  %v1338 = vsel %vm1210, %v1146, %v1274
  %v1339 = vsel %vm1211, %v1147, %v1275
  %v1340 = vsel %vm1212, %v1148, %v1276
  %v1341 = vsel %vm1213, %v1149, %v1277
  %v1342 = vsel %vm1214, %v1150, %v1278
  %v1343 = vsel %vm1215, %v1151, %v1279
  %v1344 = vsel %vm1216, %v1152, %v1280
  %v1345 = vsel %vm1217, %v1153, %v1281
  %v1346 = vsel %vm1218, %v1154, %v1282
  %v1347 = vsel %vm1219, %v1155, %v1283
  %v1348 = vsel %vm1220, %v1156, %v1284
  %v1349 = vsel %vm1221, %v1157, %v1285
  %v1350 = vsel %vm1222, %v1158, %v1286
  %v1351 = vsel %vm1223, %v1159, %v1287
  %v1352 = vsel %vm1224, %v1160, %v1288
  %v1353 = vsel %vm1225, %v1161, %v1289
  %v1354 = vpack.c.bf16 %v1290, %v1290
  %v1355 = vpack.c.bf16 %v1291, %v1291
  %v1356 = vpack.c.bf16 %v1292, %v1292
  %v1357 = vpack.c.bf16 %v1293, %v1293
  %v1358 = vpack.c.bf16 %v1294, %v1294
  %v1359 = vpack.c.bf16 %v1295, %v1295
  %v1360 = vpack.c.bf16 %v1296, %v1296
  %v1361 = vpack.c.bf16 %v1297, %v1297
  %v1362 = vpack.c.bf16 %v1298, %v1298
  %v1363 = vpack.c.bf16 %v1299, %v1299
  %v1364 = vpack.c.bf16 %v1300, %v1300
  %v1365 = vpack.c.bf16 %v1301, %v1301
  %v1366 = vpack.c.bf16 %v1302, %v1302
  %v1367 = vpack.c.bf16 %v1303, %v1303
  %v1368 = vpack.c.bf16 %v1304, %v1304
  %v1369 = vpack.c.bf16 %v1305, %v1305
  %v1370 = vpack.c.bf16 %v1306, %v1306
  %v1371 = vpack.c.bf16 %v1307, %v1307
  %v1372 = vpack.c.bf16 %v1308, %v1308
  %v1373 = vpack.c.bf16 %v1309, %v1309
  %v1374 = vpack.c.bf16 %v1310, %v1310
  %v1375 = vpack.c.bf16 %v1311, %v1311
  %v1376 = vpack.c.bf16 %v1312, %v1312
  %v1377 = vpack.c.bf16 %v1313, %v1313
  %v1378 = vpack.c.bf16 %v1314, %v1314
  %v1379 = vpack.c.bf16 %v1315, %v1315
  %v1380 = vpack.c.bf16 %v1316, %v1316
  %v1381 = vpack.c.bf16 %v1317, %v1317
  %v1382 = vpack.c.bf16 %v1318, %v1318
  %v1383 = vpack.c.bf16 %v1319, %v1319
  %v1384 = vpack.c.bf16 %v1320, %v1320
  %v1385 = vpack.c.bf16 %v1321, %v1321
  %v1386 = vpack.c.bf16 %v1322, %v1322
  %v1387 = vpack.c.bf16 %v1323, %v1323
  %v1388 = vpack.c.bf16 %v1324, %v1324
  %v1389 = vpack.c.bf16 %v1325, %v1325
  %v1390 = vpack.c.bf16 %v1326, %v1326
  %v1391 = vpack.c.bf16 %v1327, %v1327
  %v1392 = vpack.c.bf16 %v1328, %v1328
  %v1393 = vpack.c.bf16 %v1329, %v1329
  %v1394 = vpack.c.bf16 %v1330, %v1330
  %v1395 = vpack.c.bf16 %v1331, %v1331
  %v1396 = vpack.c.bf16 %v1332, %v1332
  %v1397 = vpack.c.bf16 %v1333, %v1333
  %v1398 = vpack.c.bf16 %v1334, %v1334
  %v1399 = vpack.c.bf16 %v1335, %v1335
  %v1400 = vpack.c.bf16 %v1336, %v1336
  %v1401 = vpack.c.bf16 %v1337, %v1337
  %v1402 = vpack.c.bf16 %v1338, %v1338
  %v1403 = vpack.c.bf16 %v1339, %v1339
  %v1404 = vpack.c.bf16 %v1340, %v1340
  %v1405 = vpack.c.bf16 %v1341, %v1341
  %v1406 = vpack.c.bf16 %v1342, %v1342
  %v1407 = vpack.c.bf16 %v1343, %v1343
  %v1408 = vpack.c.bf16 %v1344, %v1344
  %v1409 = vpack.c.bf16 %v1345, %v1345
  %v1410 = vpack.c.bf16 %v1346, %v1346
  %v1411 = vpack.c.bf16 %v1347, %v1347
  %v1412 = vpack.c.bf16 %v1348, %v1348
  %v1413 = vpack.c.bf16 %v1349, %v1349
  %v1414 = vpack.c.bf16 %v1350, %v1350
  %v1415 = vpack.c.bf16 %v1351, %v1351
  %v1416 = vpack.c.bf16 %v1352, %v1352
  %v1417 = vpack.c.bf16 %v1353, %v1353
  %1418 = vst.msk [vmem:[%s8] sm:$0xf] %vm788, %v1354
  %1419 = vst.msk [vmem:[%s8 + $0x4] sm:$0xf] %vm788, %v1355
  %1420 = vst.msk [vmem:[%s8 + $0x8] sm:$0xf] %vm788, %v1356
  %1421 = vst.msk [vmem:[%s8 + $0xc] sm:$0xf] %vm788, %v1357
  %1422 = vst.msk [vmem:[%s8 + $0x10] sm:$0xf] %vm788, %v1358
  %1423 = vst.msk [vmem:[%s8 + $0x14] sm:$0xf] %vm788, %v1359
  %1424 = vst.msk [vmem:[%s8 + $0x18] sm:$0xf] %vm788, %v1360
  %1425 = vst.msk [vmem:[%s8 + $0x1c] sm:$0xf] %vm788, %v1361
  %1426 = vst.msk [vmem:[%s8 + $0x20] sm:$0xf] %vm788, %v1362
  %1427 = vst.msk [vmem:[%s8 + $0x24] sm:$0xf] %vm788, %v1363
  %1428 = vst.msk [vmem:[%s8 + $0x28] sm:$0xf] %vm788, %v1364
  %1429 = vst.msk [vmem:[%s8 + $0x2c] sm:$0xf] %vm788, %v1365
  %1430 = vst.msk [vmem:[%s8 + $0x30] sm:$0xf] %vm788, %v1366
  %1431 = vst.msk [vmem:[%s8 + $0x34] sm:$0xf] %vm788, %v1367
  %1432 = vst.msk [vmem:[%s8 + $0x38] sm:$0xf] %vm788, %v1368
  %1433 = vst.msk [vmem:[%s8 + $0x3c] sm:$0xf] %vm788, %v1369
  %1434 = vst.msk [vmem:[%s8 + $0x40] sm:$0xf] %vm788, %v1370
  %1435 = vst.msk [vmem:[%s8 + $0x44] sm:$0xf] %vm788, %v1371
  %1436 = vst.msk [vmem:[%s8 + $0x48] sm:$0xf] %vm788, %v1372
  %1437 = vst.msk [vmem:[%s8 + $0x4c] sm:$0xf] %vm788, %v1373
  %1438 = vst.msk [vmem:[%s8 + $0x50] sm:$0xf] %vm788, %v1374
  %1439 = vst.msk [vmem:[%s8 + $0x54] sm:$0xf] %vm788, %v1375
  %1440 = vst.msk [vmem:[%s8 + $0x58] sm:$0xf] %vm788, %v1376
  %1441 = vst.msk [vmem:[%s8 + $0x5c] sm:$0xf] %vm788, %v1377
  %1442 = vst.msk [vmem:[%s8 + $0x60] sm:$0xf] %vm788, %v1378
  %1443 = vst.msk [vmem:[%s8 + $0x64] sm:$0xf] %vm788, %v1379
  %1444 = vst.msk [vmem:[%s8 + $0x68] sm:$0xf] %vm788, %v1380
  %1445 = vst.msk [vmem:[%s8 + $0x6c] sm:$0xf] %vm788, %v1381
  %1446 = vst.msk [vmem:[%s8 + $0x70] sm:$0xf] %vm788, %v1382
  %1447 = vst.msk [vmem:[%s8 + $0x74] sm:$0xf] %vm788, %v1383
  %1448 = vst.msk [vmem:[%s8 + $0x78] sm:$0xf] %vm788, %v1384
  %1449 = vst.msk [vmem:[%s8 + $0x7c] sm:$0xf] %vm788, %v1385
  %1450 = vst.msk [vmem:[%s8 + $0x80] sm:$0xf] %vm788, %v1386
  %1451 = vst.msk [vmem:[%s8 + $0x84] sm:$0xf] %vm788, %v1387
  %1452 = vst.msk [vmem:[%s8 + $0x88] sm:$0xf] %vm788, %v1388
  %1453 = vst.msk [vmem:[%s8 + $0x8c] sm:$0xf] %vm788, %v1389
  %1454 = vst.msk [vmem:[%s8 + $0x90] sm:$0xf] %vm788, %v1390
  %1455 = vst.msk [vmem:[%s8 + $0x94] sm:$0xf] %vm788, %v1391
  %1456 = vst.msk [vmem:[%s8 + $0x98] sm:$0xf] %vm788, %v1392
  %1457 = vst.msk [vmem:[%s8 + $0x9c] sm:$0xf] %vm788, %v1393
  %1458 = vst.msk [vmem:[%s8 + $0xa0] sm:$0xf] %vm788, %v1394
  %1459 = vst.msk [vmem:[%s8 + $0xa4] sm:$0xf] %vm788, %v1395
  %1460 = vst.msk [vmem:[%s8 + $0xa8] sm:$0xf] %vm788, %v1396
  %1461 = vst.msk [vmem:[%s8 + $0xac] sm:$0xf] %vm788, %v1397
  %1462 = vst.msk [vmem:[%s8 + $0xb0] sm:$0xf] %vm788, %v1398
  %1463 = vst.msk [vmem:[%s8 + $0xb4] sm:$0xf] %vm788, %v1399
  %1464 = vst.msk [vmem:[%s8 + $0xb8] sm:$0xf] %vm788, %v1400
  %1465 = vst.msk [vmem:[%s8 + $0xbc] sm:$0xf] %vm788, %v1401
  %1466 = vst.msk [vmem:[%s8 + $0xc0] sm:$0xf] %vm788, %v1402
  %1467 = vst.msk [vmem:[%s8 + $0xc4] sm:$0xf] %vm788, %v1403
  %1468 = vst.msk [vmem:[%s8 + $0xc8] sm:$0xf] %vm788, %v1404
  %1469 = vst.msk [vmem:[%s8 + $0xcc] sm:$0xf] %vm788, %v1405
  %1470 = vst.msk [vmem:[%s8 + $0xd0] sm:$0xf] %vm788, %v1406
  %1471 = vst.msk [vmem:[%s8 + $0xd4] sm:$0xf] %vm788, %v1407
  %1472 = vst.msk [vmem:[%s8 + $0xd8] sm:$0xf] %vm788, %v1408
  %1473 = vst.msk [vmem:[%s8 + $0xdc] sm:$0xf] %vm788, %v1409
  %1474 = vst.msk [vmem:[%s8 + $0xe0] sm:$0xf] %vm788, %v1410
  %1475 = vst.msk [vmem:[%s8 + $0xe4] sm:$0xf] %vm788, %v1411
  %1476 = vst.msk [vmem:[%s8 + $0xe8] sm:$0xf] %vm788, %v1412
  %1477 = vst.msk [vmem:[%s8 + $0xec] sm:$0xf] %vm788, %v1413
  %1478 = vst.msk [vmem:[%s8 + $0xf0] sm:$0xf] %vm788, %v1414
  %1479 = vst.msk [vmem:[%s8 + $0xf4] sm:$0xf] %vm788, %v1415
  %1480 = vst.msk [vmem:[%s8 + $0xf8] sm:$0xf] %vm788, %v1416
  %1481 = vst.msk [vmem:[%s8 + $0xfc] sm:$0xf] %vm788, %v1417
  // Predicated region
  $region30: #{csp_stage_pallas.4} parent=0 // pred_check
    _
  $region31: #{csp_stage_pallas.4} parent=0 // pred_check_branch
    %1483 = sbr.rel (0) target = $region33
  $region32: #{csp_stage_pallas.4} parent=0 // pred_region
    _
  $region33: #{csp_stage_pallas.4} parent=0 // pred_fallthru
    _
  // Predicated region
  $region34: #{csp_stage_pallas.4} parent=0 // pred_check
    _
  $region35: #{csp_stage_pallas.4} parent=0 // pred_check_branch
    %1485 = sbr.rel (0) target = $region37
  $region36: #{csp_stage_pallas.4} parent=0 // pred_region
    _
  $region37: #{csp_stage_pallas.4} parent=0 // pred_fallthru
    _
  // Predicated region
  $region38: #{csp_stage_pallas.4} parent=0 // pred_check
    _
  $region39: #{csp_stage_pallas.4} parent=0 // pred_check_branch
    %1487 = sbr.rel (0) target = $region41
  $region40: #{csp_stage_pallas.4} parent=0 // pred_region
    _
  $region41: #{csp_stage_pallas.4} parent=0 // pred_fallthru
    _
  // Predicated region
  $region42: #{csp_stage_pallas.4} parent=0 // pred_check
    _
  $region43: #{csp_stage_pallas.4} parent=0 // pred_check_branch
    %1489 = sbr.rel (0) target = $region45
  $region44: #{csp_stage_pallas.4} parent=0 // pred_region
    _
  $region45: #{csp_stage_pallas.4} parent=0 // pred_fallthru
    _

// kernel: csp_stage_pallas.7
$region0: #{csp_stage_pallas.7}
  #allocation0 [shape = 'u32[]', space=smem, size = 0x4, offset = 0x4, fixed_abs, tag = 'smem constant byte address 0x4 - core index']
  #allocation1 [shape = 'u32[72,128]{1,0:T(1,128)}', space=vmem, size = 0x9000, scoped, tag = 'internal scratch']
  %s0 = inlined_call_operand.vmem [shape: bf16[512,4], index: 0, kind: input, shape index: {}]
  %s1 = inlined_call_operand.vmem [shape: bf16[512,4], index: 1, kind: input, shape index: {}]
  %s2 = inlined_call_operand.vmem [shape: bf16[4,8], index: 2, kind: input, shape index: {}]
  %s3 = inlined_call_operand.vmem [shape: bf16[4,8], index: 3, kind: input, shape index: {}]
  %s4 = inlined_call_operand.vmem [shape: f32[1,8], index: 4, kind: input, shape index: {}]
  %s5 = inlined_call_operand.vmem [shape: f32[1,8], index: 5, kind: input, shape index: {}]
  %s6 = inlined_call_operand.vmem [shape: f32[512,8], index: 6, kind: output, shape index: {}]
  %s7 = sld [smem:[#allocation0]]
  $region34: #{csp_stage_pallas.7} parent=0
    _
  %s9 = ssub.s32 1, %s7
  %s10 = scalar_select 0, %s9, %s7
  // Predicated region
  $region2: #{csp_stage_pallas.7} parent=0 // pred_check
    _
  $region3: #{csp_stage_pallas.7} parent=0 // pred_check_branch
    %12 = sbr.rel (0) target = $region5
  $region4: #{csp_stage_pallas.7} parent=0 // pred_region
    _
  $region5: #{csp_stage_pallas.7} parent=0 // pred_fallthru
    _
  // Predicated region
  $region6: #{csp_stage_pallas.7} parent=0 // pred_check
    _
  $region7: #{csp_stage_pallas.7} parent=0 // pred_check_branch
    %14 = sbr.rel (0) target = $region9
  $region8: #{csp_stage_pallas.7} parent=0 // pred_region
    _
  $region9: #{csp_stage_pallas.7} parent=0 // pred_fallthru
    _
  // Predicated region
  $region10: #{csp_stage_pallas.7} parent=0 // pred_check
    _
  $region11: #{csp_stage_pallas.7} parent=0 // pred_check_branch
    %16 = sbr.rel (0) target = $region13
  $region12: #{csp_stage_pallas.7} parent=0 // pred_region
    _
  $region13: #{csp_stage_pallas.7} parent=0 // pred_fallthru
    _
  // Predicated region
  $region14: #{csp_stage_pallas.7} parent=0 // pred_check
    _
  $region15: #{csp_stage_pallas.7} parent=0 // pred_check_branch
    %18 = sbr.rel (0) target = $region17
  $region16: #{csp_stage_pallas.7} parent=0 // pred_region
    _
  $region17: #{csp_stage_pallas.7} parent=0 // pred_fallthru
    _
  // Predicated region
  $region18: #{csp_stage_pallas.7} parent=0 // pred_check
    _
  $region19: #{csp_stage_pallas.7} parent=0 // pred_check_branch
    %20 = sbr.rel (0) target = $region21
  $region20: #{csp_stage_pallas.7} parent=0 // pred_region
    _
  $region21: #{csp_stage_pallas.7} parent=0 // pred_fallthru
    _
  // Predicated region
  $region22: #{csp_stage_pallas.7} parent=0 // pred_check
    _
  $region23: #{csp_stage_pallas.7} parent=0 // pred_check_branch
    %22 = sbr.rel (0) target = $region25
  $region24: #{csp_stage_pallas.7} parent=0 // pred_region
    _
  $region25: #{csp_stage_pallas.7} parent=0 // pred_fallthru
    _
  %v24 = vld [vmem:[%s0] sm:$0xf]
  %v25 = vld [vmem:[%s0 + $0x4] sm:$0xf]
  %v26 = vld [vmem:[%s0 + $0x8] sm:$0xf]
  %v27 = vld [vmem:[%s0 + $0xc] sm:$0xf]
  %v28 = vld [vmem:[%s0 + $0x10] sm:$0xf]
  %v29 = vld [vmem:[%s0 + $0x14] sm:$0xf]
  %v30 = vld [vmem:[%s0 + $0x18] sm:$0xf]
  %v31 = vld [vmem:[%s0 + $0x1c] sm:$0xf]
  %v32 = vld [vmem:[%s0 + $0x20] sm:$0xf]
  %v33 = vld [vmem:[%s0 + $0x24] sm:$0xf]
  %v34 = vld [vmem:[%s0 + $0x28] sm:$0xf]
  %v35 = vld [vmem:[%s0 + $0x2c] sm:$0xf]
  %v36 = vld [vmem:[%s0 + $0x30] sm:$0xf]
  %v37 = vld [vmem:[%s0 + $0x34] sm:$0xf]
  %v38 = vld [vmem:[%s0 + $0x38] sm:$0xf]
  %v39 = vld [vmem:[%s0 + $0x3c] sm:$0xf]
  %v40 = vld [vmem:[%s0 + $0x40] sm:$0xf]
  %v41 = vld [vmem:[%s0 + $0x44] sm:$0xf]
  %v42 = vld [vmem:[%s0 + $0x48] sm:$0xf]
  %v43 = vld [vmem:[%s0 + $0x4c] sm:$0xf]
  %v44 = vld [vmem:[%s0 + $0x50] sm:$0xf]
  %v45 = vld [vmem:[%s0 + $0x54] sm:$0xf]
  %v46 = vld [vmem:[%s0 + $0x58] sm:$0xf]
  %v47 = vld [vmem:[%s0 + $0x5c] sm:$0xf]
  %v48 = vld [vmem:[%s0 + $0x60] sm:$0xf]
  %v49 = vld [vmem:[%s0 + $0x64] sm:$0xf]
  %v50 = vld [vmem:[%s0 + $0x68] sm:$0xf]
  %v51 = vld [vmem:[%s0 + $0x6c] sm:$0xf]
  %v52 = vld [vmem:[%s0 + $0x70] sm:$0xf]
  %v53 = vld [vmem:[%s0 + $0x74] sm:$0xf]
  %v54 = vld [vmem:[%s0 + $0x78] sm:$0xf]
  %v55 = vld [vmem:[%s0 + $0x7c] sm:$0xf]
  %v56 = vld [vmem:[%s0 + $0x80] sm:$0xf]
  %v57 = vld [vmem:[%s0 + $0x84] sm:$0xf]
  %v58 = vld [vmem:[%s0 + $0x88] sm:$0xf]
  %v59 = vld [vmem:[%s0 + $0x8c] sm:$0xf]
  %v60 = vld [vmem:[%s0 + $0x90] sm:$0xf]
  %v61 = vld [vmem:[%s0 + $0x94] sm:$0xf]
  %v62 = vld [vmem:[%s0 + $0x98] sm:$0xf]
  %v63 = vld [vmem:[%s0 + $0x9c] sm:$0xf]
  %v64 = vld [vmem:[%s0 + $0xa0] sm:$0xf]
  %v65 = vld [vmem:[%s0 + $0xa4] sm:$0xf]
  %v66 = vld [vmem:[%s0 + $0xa8] sm:$0xf]
  %v67 = vld [vmem:[%s0 + $0xac] sm:$0xf]
  %v68 = vld [vmem:[%s0 + $0xb0] sm:$0xf]
  %v69 = vld [vmem:[%s0 + $0xb4] sm:$0xf]
  %v70 = vld [vmem:[%s0 + $0xb8] sm:$0xf]
  %v71 = vld [vmem:[%s0 + $0xbc] sm:$0xf]
  %v72 = vld [vmem:[%s0 + $0xc0] sm:$0xf]
  %v73 = vld [vmem:[%s0 + $0xc4] sm:$0xf]
  %v74 = vld [vmem:[%s0 + $0xc8] sm:$0xf]
  %v75 = vld [vmem:[%s0 + $0xcc] sm:$0xf]
  %v76 = vld [vmem:[%s0 + $0xd0] sm:$0xf]
  %v77 = vld [vmem:[%s0 + $0xd4] sm:$0xf]
  %v78 = vld [vmem:[%s0 + $0xd8] sm:$0xf]
  %v79 = vld [vmem:[%s0 + $0xdc] sm:$0xf]
  %v80 = vld [vmem:[%s0 + $0xe0] sm:$0xf]
  %v81 = vld [vmem:[%s0 + $0xe4] sm:$0xf]
  %v82 = vld [vmem:[%s0 + $0xe8] sm:$0xf]
  %v83 = vld [vmem:[%s0 + $0xec] sm:$0xf]
  %v84 = vld [vmem:[%s0 + $0xf0] sm:$0xf]
  %v85 = vld [vmem:[%s0 + $0xf4] sm:$0xf]
  %v86 = vld [vmem:[%s0 + $0xf8] sm:$0xf]
  %v87 = vld [vmem:[%s0 + $0xfc] sm:$0xf]
  %v88 = vld [vmem:[%s2] sm:$0x3]
  %v89 = vld [vmem:[%s1] sm:$0xf]
  %v90 = vld [vmem:[%s1 + $0x4] sm:$0xf]
  %v91 = vld [vmem:[%s1 + $0x8] sm:$0xf]
  %v92 = vld [vmem:[%s1 + $0xc] sm:$0xf]
  %v93 = vld [vmem:[%s1 + $0x10] sm:$0xf]
  %v94 = vld [vmem:[%s1 + $0x14] sm:$0xf]
  %v95 = vld [vmem:[%s1 + $0x18] sm:$0xf]
  %v96 = vld [vmem:[%s1 + $0x1c] sm:$0xf]
  %v97 = vld [vmem:[%s1 + $0x20] sm:$0xf]
  %v98 = vld [vmem:[%s1 + $0x24] sm:$0xf]
  %v99 = vld [vmem:[%s1 + $0x28] sm:$0xf]
  %v100 = vld [vmem:[%s1 + $0x2c] sm:$0xf]
  %v101 = vld [vmem:[%s1 + $0x30] sm:$0xf]
  %v102 = vld [vmem:[%s1 + $0x34] sm:$0xf]
  %v103 = vld [vmem:[%s1 + $0x38] sm:$0xf]
  %v104 = vld [vmem:[%s1 + $0x3c] sm:$0xf]
  %v105 = vld [vmem:[%s1 + $0x40] sm:$0xf]
  %v106 = vld [vmem:[%s1 + $0x44] sm:$0xf]
  %v107 = vld [vmem:[%s1 + $0x48] sm:$0xf]
  %v108 = vld [vmem:[%s1 + $0x4c] sm:$0xf]
  %v109 = vld [vmem:[%s1 + $0x50] sm:$0xf]
  %v110 = vld [vmem:[%s1 + $0x54] sm:$0xf]
  %v111 = vld [vmem:[%s1 + $0x58] sm:$0xf]
  %v112 = vld [vmem:[%s1 + $0x5c] sm:$0xf]
  %v113 = vld [vmem:[%s1 + $0x60] sm:$0xf]
  %v114 = vld [vmem:[%s1 + $0x64] sm:$0xf]
  %v115 = vld [vmem:[%s1 + $0x68] sm:$0xf]
  %v116 = vld [vmem:[%s1 + $0x6c] sm:$0xf]
  %v117 = vld [vmem:[%s1 + $0x70] sm:$0xf]
  %v118 = vld [vmem:[%s1 + $0x74] sm:$0xf]
  %v119 = vld [vmem:[%s1 + $0x78] sm:$0xf]
  %v120 = vld [vmem:[%s1 + $0x7c] sm:$0xf]
  %v121 = vld [vmem:[%s1 + $0x80] sm:$0xf]
  %v122 = vld [vmem:[%s1 + $0x84] sm:$0xf]
  %v123 = vld [vmem:[%s1 + $0x88] sm:$0xf]
  %v124 = vld [vmem:[%s1 + $0x8c] sm:$0xf]
  %v125 = vld [vmem:[%s1 + $0x90] sm:$0xf]
  %v126 = vld [vmem:[%s1 + $0x94] sm:$0xf]
  %v127 = vld [vmem:[%s1 + $0x98] sm:$0xf]
  %v128 = vld [vmem:[%s1 + $0x9c] sm:$0xf]
  %v129 = vld [vmem:[%s1 + $0xa0] sm:$0xf]
  %v130 = vld [vmem:[%s1 + $0xa4] sm:$0xf]
  %v131 = vld [vmem:[%s1 + $0xa8] sm:$0xf]
  %v132 = vld [vmem:[%s1 + $0xac] sm:$0xf]
  %v133 = vld [vmem:[%s1 + $0xb0] sm:$0xf]
  %v134 = vld [vmem:[%s1 + $0xb4] sm:$0xf]
  %v135 = vld [vmem:[%s1 + $0xb8] sm:$0xf]
  %v136 = vld [vmem:[%s1 + $0xbc] sm:$0xf]
  %v137 = vld [vmem:[%s1 + $0xc0] sm:$0xf]
  %v138 = vld [vmem:[%s1 + $0xc4] sm:$0xf]
  %v139 = vld [vmem:[%s1 + $0xc8] sm:$0xf]
  %v140 = vld [vmem:[%s1 + $0xcc] sm:$0xf]
  %v141 = vld [vmem:[%s1 + $0xd0] sm:$0xf]
  %v142 = vld [vmem:[%s1 + $0xd4] sm:$0xf]
  %v143 = vld [vmem:[%s1 + $0xd8] sm:$0xf]
  %v144 = vld [vmem:[%s1 + $0xdc] sm:$0xf]
  %v145 = vld [vmem:[%s1 + $0xe0] sm:$0xf]
  %v146 = vld [vmem:[%s1 + $0xe4] sm:$0xf]
  %v147 = vld [vmem:[%s1 + $0xe8] sm:$0xf]
  %v148 = vld [vmem:[%s1 + $0xec] sm:$0xf]
  %v149 = vld [vmem:[%s1 + $0xf0] sm:$0xf]
  %v150 = vld [vmem:[%s1 + $0xf4] sm:$0xf]
  %v151 = vld [vmem:[%s1 + $0xf8] sm:$0xf]
  %v152 = vld [vmem:[%s1 + $0xfc] sm:$0xf]
  %v153 = vld [vmem:[%s3] sm:$0x3]
  %v218 = vunpack.c.l.b16 %v89
  %v219 = vunpack.c.l.b16 %v90
  %v220 = vunpack.c.l.b16 %v91
  %v221 = vunpack.c.l.b16 %v92
  %v222 = vunpack.c.l.b16 %v93
  %v223 = vunpack.c.l.b16 %v94
  %v224 = vunpack.c.l.b16 %v95
  %v225 = vunpack.c.l.b16 %v96
  %v226 = vunpack.c.l.b16 %v97
  %v227 = vunpack.c.l.b16 %v98
  %v228 = vunpack.c.l.b16 %v99
  %v229 = vunpack.c.l.b16 %v100
  %v230 = vunpack.c.l.b16 %v101
  %v231 = vunpack.c.l.b16 %v102
  %v232 = vunpack.c.l.b16 %v103
  %v233 = vunpack.c.l.b16 %v104
  %v234 = vunpack.c.l.b16 %v105
  %v235 = vunpack.c.l.b16 %v106
  %v236 = vunpack.c.l.b16 %v107
  %v237 = vunpack.c.l.b16 %v108
  %v238 = vunpack.c.l.b16 %v109
  %v239 = vunpack.c.l.b16 %v110
  %v240 = vunpack.c.l.b16 %v111
  %v241 = vunpack.c.l.b16 %v112
  %v242 = vunpack.c.l.b16 %v113
  %v243 = vunpack.c.l.b16 %v114
  %v244 = vunpack.c.l.b16 %v115
  %v245 = vunpack.c.l.b16 %v116
  %v246 = vunpack.c.l.b16 %v117
  %v247 = vunpack.c.l.b16 %v118
  %v248 = vunpack.c.l.b16 %v119
  %v249 = vunpack.c.l.b16 %v120
  %v250 = vunpack.c.l.b16 %v121
  %v251 = vunpack.c.l.b16 %v122
  %v252 = vunpack.c.l.b16 %v123
  %v253 = vunpack.c.l.b16 %v124
  %v254 = vunpack.c.l.b16 %v125
  %v255 = vunpack.c.l.b16 %v126
  %v256 = vunpack.c.l.b16 %v127
  %v257 = vunpack.c.l.b16 %v128
  %v258 = vunpack.c.l.b16 %v129
  %v259 = vunpack.c.l.b16 %v130
  %v260 = vunpack.c.l.b16 %v131
  %v261 = vunpack.c.l.b16 %v132
  %v262 = vunpack.c.l.b16 %v133
  %v263 = vunpack.c.l.b16 %v134
  %v264 = vunpack.c.l.b16 %v135
  %v265 = vunpack.c.l.b16 %v136
  %v266 = vunpack.c.l.b16 %v137
  %v267 = vunpack.c.l.b16 %v138
  %v268 = vunpack.c.l.b16 %v139
  %v269 = vunpack.c.l.b16 %v140
  %v270 = vunpack.c.l.b16 %v141
  %v271 = vunpack.c.l.b16 %v142
  %v272 = vunpack.c.l.b16 %v143
  %v273 = vunpack.c.l.b16 %v144
  %v274 = vunpack.c.l.b16 %v145
  %v275 = vunpack.c.l.b16 %v146
  %v276 = vunpack.c.l.b16 %v147
  %v277 = vunpack.c.l.b16 %v148
  %v278 = vunpack.c.l.b16 %v149
  %v279 = vunpack.c.l.b16 %v150
  %v280 = vunpack.c.l.b16 %v151
  %v281 = vunpack.c.l.b16 %v152
  %v282 = vpack.c.b16 %v219, %v218
  %v283 = vpack.c.b16 %v221, %v220
  %v284 = vpack.c.b16 %v223, %v222
  %v285 = vpack.c.b16 %v225, %v224
  %v286 = vpack.c.b16 %v227, %v226
  %v287 = vpack.c.b16 %v229, %v228
  %v288 = vpack.c.b16 %v231, %v230
  %v289 = vpack.c.b16 %v233, %v232
  %v290 = vpack.c.b16 %v235, %v234
  %v291 = vpack.c.b16 %v237, %v236
  %v292 = vpack.c.b16 %v239, %v238
  %v293 = vpack.c.b16 %v241, %v240
  %v294 = vpack.c.b16 %v243, %v242
  %v295 = vpack.c.b16 %v245, %v244
  %v296 = vpack.c.b16 %v247, %v246
  %v297 = vpack.c.b16 %v249, %v248
  %v298 = vpack.c.b16 %v251, %v250
  %v299 = vpack.c.b16 %v253, %v252
  %v300 = vpack.c.b16 %v255, %v254
  %v301 = vpack.c.b16 %v257, %v256
  %v302 = vpack.c.b16 %v259, %v258
  %v303 = vpack.c.b16 %v261, %v260
  %v304 = vpack.c.b16 %v263, %v262
  %v305 = vpack.c.b16 %v265, %v264
  %v306 = vpack.c.b16 %v267, %v266
  %v307 = vpack.c.b16 %v269, %v268
  %v308 = vpack.c.b16 %v271, %v270
  %v309 = vpack.c.b16 %v273, %v272
  %v310 = vpack.c.b16 %v275, %v274
  %v311 = vpack.c.b16 %v277, %v276
  %v312 = vpack.c.b16 %v279, %v278
  %v313 = vpack.c.b16 %v281, %v280
  %vm314 = vcmask 31744
  %v316 = vsel %vm314, %v282, 0
  %v319 = vsel %vm314, %v283, 0
  %v322 = vsel %vm314, %v284, 0
  %v325 = vsel %vm314, %v285, 0
  %v328 = vsel %vm314, %v286, 0
  %v331 = vsel %vm314, %v287, 0
  %v334 = vsel %vm314, %v288, 0
  %v337 = vsel %vm314, %v289, 0
  %v340 = vsel %vm314, %v290, 0
  %v343 = vsel %vm314, %v291, 0
  %v346 = vsel %vm314, %v292, 0
  %v349 = vsel %vm314, %v293, 0
  %v352 = vsel %vm314, %v294, 0
  %v355 = vsel %vm314, %v295, 0
  %v358 = vsel %vm314, %v296, 0
  %v361 = vsel %vm314, %v297, 0
  %v364 = vsel %vm314, %v298, 0
  %v367 = vsel %vm314, %v299, 0
  %v370 = vsel %vm314, %v300, 0
  %v373 = vsel %vm314, %v301, 0
  %v376 = vsel %vm314, %v302, 0
  %v379 = vsel %vm314, %v303, 0
  %v382 = vsel %vm314, %v304, 0
  %v385 = vsel %vm314, %v305, 0
  %v388 = vsel %vm314, %v306, 0
  %v391 = vsel %vm314, %v307, 0
  %v394 = vsel %vm314, %v308, 0
  %v397 = vsel %vm314, %v309, 0
  %v400 = vsel %vm314, %v310, 0
  %v403 = vsel %vm314, %v311, 0
  %v406 = vsel %vm314, %v312, 0
  %v409 = vsel %vm314, %v313, 0
  %vm411 = vcmask 1041408
  %v413 = vsel %vm411, %v153, 0
  %415 = vmatpush.bf16.msra.mxu0 0
  %416 = vmatpush.bf16.msra.mxu0 0
  %417 = vmatpush.bf16.msra.mxu0 0
  %418 = vmatpush.bf16.msra.mxu0 0
  %419 = vmatpush.bf16.msra.mxu0 0
  %420 = vmatpush.bf16.msra.mxu0 0
  %421 = vmatpush.bf16.msra.mxu0 0
  %422 = vmatpush.bf16.msra.mxu0 %v413
  %423 = vmatmul.bf16.gmra.mxu0 %v316
  %v424 = vpop.f32.mrf.mxu0
  %v425 = vadd.f32 0.0, %v424
  %v426 = vpop.f32.mrf.mxu0
  %v427 = vadd.f32 0.0, %v426
  %428 = vmatmul.bf16.gmra.mxu0 %v319
  %v429 = vpop.f32.mrf.mxu0
  %v430 = vadd.f32 0.0, %v429
  %v431 = vpop.f32.mrf.mxu0
  %v432 = vadd.f32 0.0, %v431
  %433 = vmatmul.bf16.gmra.mxu0 %v322
  %v434 = vpop.f32.mrf.mxu0
  %v435 = vadd.f32 0.0, %v434
  %v436 = vpop.f32.mrf.mxu0
  %v437 = vadd.f32 0.0, %v436
  %438 = vmatmul.bf16.gmra.mxu0 %v325
  %v439 = vpop.f32.mrf.mxu0
  %v440 = vadd.f32 0.0, %v439
  %v441 = vpop.f32.mrf.mxu0
  %v442 = vadd.f32 0.0, %v441
  %443 = vmatmul.bf16.gmra.mxu0 %v328
  %v444 = vpop.f32.mrf.mxu0
  %v445 = vadd.f32 0.0, %v444
  %v446 = vpop.f32.mrf.mxu0
  %v447 = vadd.f32 0.0, %v446
  %448 = vmatmul.bf16.gmra.mxu0 %v331
  %v449 = vpop.f32.mrf.mxu0
  %v450 = vadd.f32 0.0, %v449
  %v451 = vpop.f32.mrf.mxu0
  %v452 = vadd.f32 0.0, %v451
  %453 = vmatmul.bf16.gmra.mxu0 %v334
  %v454 = vpop.f32.mrf.mxu0
  %v455 = vadd.f32 0.0, %v454
  %v456 = vpop.f32.mrf.mxu0
  %v457 = vadd.f32 0.0, %v456
  %458 = vmatmul.bf16.gmra.mxu0 %v337
  %v459 = vpop.f32.mrf.mxu0
  %v460 = vadd.f32 0.0, %v459
  %v461 = vpop.f32.mrf.mxu0
  %v462 = vadd.f32 0.0, %v461
  %463 = vmatmul.bf16.gmra.mxu0 %v340
  %v464 = vpop.f32.mrf.mxu0
  %v465 = vadd.f32 0.0, %v464
  %v466 = vpop.f32.mrf.mxu0
  %v467 = vadd.f32 0.0, %v466
  %468 = vmatmul.bf16.gmra.mxu0 %v343
  %v469 = vpop.f32.mrf.mxu0
  %v470 = vadd.f32 0.0, %v469
  %v471 = vpop.f32.mrf.mxu0
  %v472 = vadd.f32 0.0, %v471
  %473 = vmatmul.bf16.gmra.mxu0 %v346
  %v474 = vpop.f32.mrf.mxu0
  %v475 = vadd.f32 0.0, %v474
  %v476 = vpop.f32.mrf.mxu0
  %v477 = vadd.f32 0.0, %v476
  %478 = vmatmul.bf16.gmra.mxu0 %v349
  %v479 = vpop.f32.mrf.mxu0
  %v480 = vadd.f32 0.0, %v479
  %v481 = vpop.f32.mrf.mxu0
  %v482 = vadd.f32 0.0, %v481
  %483 = vmatmul.bf16.gmra.mxu0 %v352
  %v484 = vpop.f32.mrf.mxu0
  %v485 = vadd.f32 0.0, %v484
  %v486 = vpop.f32.mrf.mxu0
  %v487 = vadd.f32 0.0, %v486
  %488 = vmatmul.bf16.gmra.mxu0 %v355
  %v489 = vpop.f32.mrf.mxu0
  %v490 = vadd.f32 0.0, %v489
  %v491 = vpop.f32.mrf.mxu0
  %v492 = vadd.f32 0.0, %v491
  %493 = vmatmul.bf16.gmra.mxu0 %v358
  %v494 = vpop.f32.mrf.mxu0
  %v495 = vadd.f32 0.0, %v494
  %v496 = vpop.f32.mrf.mxu0
  %v497 = vadd.f32 0.0, %v496
  %498 = vmatmul.bf16.gmra.mxu0 %v361
  %v499 = vpop.f32.mrf.mxu0
  %v500 = vadd.f32 0.0, %v499
  %v501 = vpop.f32.mrf.mxu0
  %v502 = vadd.f32 0.0, %v501
  %503 = vmatmul.bf16.gmra.mxu0 %v364
  %v504 = vpop.f32.mrf.mxu0
  %v505 = vadd.f32 0.0, %v504
  %v506 = vpop.f32.mrf.mxu0
  %v507 = vadd.f32 0.0, %v506
  %508 = vmatmul.bf16.gmra.mxu0 %v367
  %v509 = vpop.f32.mrf.mxu0
  %v510 = vadd.f32 0.0, %v509
  %v511 = vpop.f32.mrf.mxu0
  %v512 = vadd.f32 0.0, %v511
  %513 = vmatmul.bf16.gmra.mxu0 %v370
  %v514 = vpop.f32.mrf.mxu0
  %v515 = vadd.f32 0.0, %v514
  %v516 = vpop.f32.mrf.mxu0
  %v517 = vadd.f32 0.0, %v516
  %518 = vmatmul.bf16.gmra.mxu0 %v373
  %v519 = vpop.f32.mrf.mxu0
  %v520 = vadd.f32 0.0, %v519
  %v521 = vpop.f32.mrf.mxu0
  %v522 = vadd.f32 0.0, %v521
  %523 = vmatmul.bf16.gmra.mxu0 %v376
  %v524 = vpop.f32.mrf.mxu0
  %v525 = vadd.f32 0.0, %v524
  %v526 = vpop.f32.mrf.mxu0
  %v527 = vadd.f32 0.0, %v526
  %528 = vmatmul.bf16.gmra.mxu0 %v379
  %v529 = vpop.f32.mrf.mxu0
  %v530 = vadd.f32 0.0, %v529
  %v531 = vpop.f32.mrf.mxu0
  %v532 = vadd.f32 0.0, %v531
  %533 = vmatmul.bf16.gmra.mxu0 %v382
  %v534 = vpop.f32.mrf.mxu0
  %v535 = vadd.f32 0.0, %v534
  %v536 = vpop.f32.mrf.mxu0
  %v537 = vadd.f32 0.0, %v536
  %538 = vmatmul.bf16.gmra.mxu0 %v385
  %v539 = vpop.f32.mrf.mxu0
  %v540 = vadd.f32 0.0, %v539
  %v541 = vpop.f32.mrf.mxu0
  %v542 = vadd.f32 0.0, %v541
  %543 = vmatmul.bf16.gmra.mxu0 %v388
  %v544 = vpop.f32.mrf.mxu0
  %v545 = vadd.f32 0.0, %v544
  %v546 = vpop.f32.mrf.mxu0
  %v547 = vadd.f32 0.0, %v546
  %548 = vmatmul.bf16.gmra.mxu0 %v391
  %v549 = vpop.f32.mrf.mxu0
  %v550 = vadd.f32 0.0, %v549
  %v551 = vpop.f32.mrf.mxu0
  %v552 = vadd.f32 0.0, %v551
  %553 = vmatmul.bf16.gmra.mxu0 %v394
  %v554 = vpop.f32.mrf.mxu0
  %v555 = vadd.f32 0.0, %v554
  %v556 = vpop.f32.mrf.mxu0
  %v557 = vadd.f32 0.0, %v556
  %558 = vmatmul.bf16.gmra.mxu0 %v397
  %v559 = vpop.f32.mrf.mxu0
  %v560 = vadd.f32 0.0, %v559
  %v561 = vpop.f32.mrf.mxu0
  %v562 = vadd.f32 0.0, %v561
  %563 = vmatmul.bf16.gmra.mxu0 %v400
  %v564 = vpop.f32.mrf.mxu0
  %v565 = vadd.f32 0.0, %v564
  %v566 = vpop.f32.mrf.mxu0
  %v567 = vadd.f32 0.0, %v566
  %568 = vmatmul.bf16.gmra.mxu0 %v403
  %v569 = vpop.f32.mrf.mxu0
  %v570 = vadd.f32 0.0, %v569
  %v571 = vpop.f32.mrf.mxu0
  %v572 = vadd.f32 0.0, %v571
  %573 = vmatmul.bf16.gmra.mxu0 %v406
  %v574 = vpop.f32.mrf.mxu0
  %v575 = vadd.f32 0.0, %v574
  %v576 = vpop.f32.mrf.mxu0
  %v577 = vadd.f32 0.0, %v576
  %578 = vmatmul.bf16.gmra.mxu0 %v409
  %v579 = vpop.f32.mrf.mxu0
  %v580 = vadd.f32 0.0, %v579
  %v581 = vpop.f32.mrf.mxu0
  %v582 = vadd.f32 0.0, %v581
  %583 = vdwg.mxu0
  %v648 = vunpack.c.l.b16 %v24
  %v649 = vunpack.c.l.b16 %v25
  %v650 = vunpack.c.l.b16 %v26
  %v651 = vunpack.c.l.b16 %v27
  %v652 = vunpack.c.l.b16 %v28
  %v653 = vunpack.c.l.b16 %v29
  %v654 = vunpack.c.l.b16 %v30
  %v655 = vunpack.c.l.b16 %v31
  %v656 = vunpack.c.l.b16 %v32
  %v657 = vunpack.c.l.b16 %v33
  %v658 = vunpack.c.l.b16 %v34
  %v659 = vunpack.c.l.b16 %v35
  %v660 = vunpack.c.l.b16 %v36
  %v661 = vunpack.c.l.b16 %v37
  %v662 = vunpack.c.l.b16 %v38
  %v663 = vunpack.c.l.b16 %v39
  %v664 = vunpack.c.l.b16 %v40
  %v665 = vunpack.c.l.b16 %v41
  %v666 = vunpack.c.l.b16 %v42
  %v667 = vunpack.c.l.b16 %v43
  %v668 = vunpack.c.l.b16 %v44
  %v669 = vunpack.c.l.b16 %v45
  %v670 = vunpack.c.l.b16 %v46
  %v671 = vunpack.c.l.b16 %v47
  %v672 = vunpack.c.l.b16 %v48
  %v673 = vunpack.c.l.b16 %v49
  %v674 = vunpack.c.l.b16 %v50
  %v675 = vunpack.c.l.b16 %v51
  %v676 = vunpack.c.l.b16 %v52
  %v677 = vunpack.c.l.b16 %v53
  %v678 = vunpack.c.l.b16 %v54
  %v679 = vunpack.c.l.b16 %v55
  %v680 = vunpack.c.l.b16 %v56
  %v681 = vunpack.c.l.b16 %v57
  %v682 = vunpack.c.l.b16 %v58
  %v683 = vunpack.c.l.b16 %v59
  %v684 = vunpack.c.l.b16 %v60
  %v685 = vunpack.c.l.b16 %v61
  %v686 = vunpack.c.l.b16 %v62
  %v687 = vunpack.c.l.b16 %v63
  %v688 = vunpack.c.l.b16 %v64
  %v689 = vunpack.c.l.b16 %v65
  %v690 = vunpack.c.l.b16 %v66
  %v691 = vunpack.c.l.b16 %v67
  %v692 = vunpack.c.l.b16 %v68
  %v693 = vunpack.c.l.b16 %v69
  %v694 = vunpack.c.l.b16 %v70
  %v695 = vunpack.c.l.b16 %v71
  %v696 = vunpack.c.l.b16 %v72
  %v697 = vunpack.c.l.b16 %v73
  %v698 = vunpack.c.l.b16 %v74
  %v699 = vunpack.c.l.b16 %v75
  %v700 = vunpack.c.l.b16 %v76
  %v701 = vunpack.c.l.b16 %v77
  %v702 = vunpack.c.l.b16 %v78
  %v703 = vunpack.c.l.b16 %v79
  %v704 = vunpack.c.l.b16 %v80
  %v705 = vunpack.c.l.b16 %v81
  %v706 = vunpack.c.l.b16 %v82
  %v707 = vunpack.c.l.b16 %v83
  %v708 = vunpack.c.l.b16 %v84
  %v709 = vunpack.c.l.b16 %v85
  %v710 = vunpack.c.l.b16 %v86
  %v711 = vunpack.c.l.b16 %v87
  %v712 = vpack.c.b16 %v649, %v648
  %v713 = vpack.c.b16 %v651, %v650
  %v714 = vpack.c.b16 %v653, %v652
  %v715 = vpack.c.b16 %v655, %v654
  %v716 = vpack.c.b16 %v657, %v656
  %v717 = vpack.c.b16 %v659, %v658
  %v718 = vpack.c.b16 %v661, %v660
  %v719 = vpack.c.b16 %v663, %v662
  %v720 = vpack.c.b16 %v665, %v664
  %v721 = vpack.c.b16 %v667, %v666
  %v722 = vpack.c.b16 %v669, %v668
  %v723 = vpack.c.b16 %v671, %v670
  %v724 = vpack.c.b16 %v673, %v672
  %v725 = vpack.c.b16 %v675, %v674
  %v726 = vpack.c.b16 %v677, %v676
  %v727 = vpack.c.b16 %v679, %v678
  %v728 = vpack.c.b16 %v681, %v680
  %v729 = vpack.c.b16 %v683, %v682
  %v730 = vpack.c.b16 %v685, %v684
  %v731 = vpack.c.b16 %v687, %v686
  %v732 = vpack.c.b16 %v689, %v688
  %v733 = vpack.c.b16 %v691, %v690
  %v734 = vpack.c.b16 %v693, %v692
  %v735 = vpack.c.b16 %v695, %v694
  %v736 = vpack.c.b16 %v697, %v696
  %v737 = vpack.c.b16 %v699, %v698
  %v738 = vpack.c.b16 %v701, %v700
  %v739 = vpack.c.b16 %v703, %v702
  %v740 = vpack.c.b16 %v705, %v704
  %v741 = vpack.c.b16 %v707, %v706
  %v742 = vpack.c.b16 %v709, %v708
  %v743 = vpack.c.b16 %v711, %v710
  %v745 = vsel %vm314, %v712, 0
  %v748 = vsel %vm314, %v713, 0
  %v751 = vsel %vm314, %v714, 0
  %v754 = vsel %vm314, %v715, 0
  %v757 = vsel %vm314, %v716, 0
  %v760 = vsel %vm314, %v717, 0
  %v763 = vsel %vm314, %v718, 0
  %v766 = vsel %vm314, %v719, 0
  %v769 = vsel %vm314, %v720, 0
  %v772 = vsel %vm314, %v721, 0
  %v775 = vsel %vm314, %v722, 0
  %v778 = vsel %vm314, %v723, 0
  %v781 = vsel %vm314, %v724, 0
  %v784 = vsel %vm314, %v725, 0
  %v787 = vsel %vm314, %v726, 0
  %v790 = vsel %vm314, %v727, 0
  %v793 = vsel %vm314, %v728, 0
  %v796 = vsel %vm314, %v729, 0
  %v799 = vsel %vm314, %v730, 0
  %v802 = vsel %vm314, %v731, 0
  %v805 = vsel %vm314, %v732, 0
  %v808 = vsel %vm314, %v733, 0
  %v811 = vsel %vm314, %v734, 0
  %v814 = vsel %vm314, %v735, 0
  %v817 = vsel %vm314, %v736, 0
  %v820 = vsel %vm314, %v737, 0
  %v823 = vsel %vm314, %v738, 0
  %v826 = vsel %vm314, %v739, 0
  %v829 = vsel %vm314, %v740, 0
  %v832 = vsel %vm314, %v741, 0
  %v835 = vsel %vm314, %v742, 0
  %v838 = vsel %vm314, %v743, 0
  %v841 = vsel %vm411, %v88, 0
  %843 = vmatpush.bf16.msra.mxu0 0
  %844 = vmatpush.bf16.msra.mxu0 0
  %845 = vmatpush.bf16.msra.mxu0 0
  %846 = vmatpush.bf16.msra.mxu0 0
  %847 = vmatpush.bf16.msra.mxu0 0
  %848 = vmatpush.bf16.msra.mxu0 0
  %849 = vmatpush.bf16.msra.mxu0 0
  %850 = vmatpush.bf16.msra.mxu0 %v841
  %851 = vmatmul.bf16.gmra.mxu0 %v745
  %v852 = vpop.f32.mrf.mxu0
  %v853 = vadd.f32 %v425, %v852
  %v854 = vpop.f32.mrf.mxu0
  %v855 = vadd.f32 %v427, %v854
  %856 = vmatmul.bf16.gmra.mxu0 %v748
  %v857 = vpop.f32.mrf.mxu0
  %v858 = vadd.f32 %v430, %v857
  %v859 = vpop.f32.mrf.mxu0
  %v860 = vadd.f32 %v432, %v859
  %861 = vmatmul.bf16.gmra.mxu0 %v751
  %v862 = vpop.f32.mrf.mxu0
  %v863 = vadd.f32 %v435, %v862
  %v864 = vpop.f32.mrf.mxu0
  %v865 = vadd.f32 %v437, %v864
  %866 = vmatmul.bf16.gmra.mxu0 %v754
  %v867 = vpop.f32.mrf.mxu0
  %v868 = vadd.f32 %v440, %v867
  %v869 = vpop.f32.mrf.mxu0
  %v870 = vadd.f32 %v442, %v869
  %871 = vmatmul.bf16.gmra.mxu0 %v757
  %v872 = vpop.f32.mrf.mxu0
  %v873 = vadd.f32 %v445, %v872
  %v874 = vpop.f32.mrf.mxu0
  %v875 = vadd.f32 %v447, %v874
  %876 = vmatmul.bf16.gmra.mxu0 %v760
  %v877 = vpop.f32.mrf.mxu0
  %v878 = vadd.f32 %v450, %v877
  %v879 = vpop.f32.mrf.mxu0
  %v880 = vadd.f32 %v452, %v879
  %881 = vmatmul.bf16.gmra.mxu0 %v763
  %v882 = vpop.f32.mrf.mxu0
  %v883 = vadd.f32 %v455, %v882
  %v884 = vpop.f32.mrf.mxu0
  %v885 = vadd.f32 %v457, %v884
  %886 = vmatmul.bf16.gmra.mxu0 %v766
  %v887 = vpop.f32.mrf.mxu0
  %v888 = vadd.f32 %v460, %v887
  %v889 = vpop.f32.mrf.mxu0
  %v890 = vadd.f32 %v462, %v889
  %891 = vmatmul.bf16.gmra.mxu0 %v769
  %v892 = vpop.f32.mrf.mxu0
  %v893 = vadd.f32 %v465, %v892
  %v894 = vpop.f32.mrf.mxu0
  %v895 = vadd.f32 %v467, %v894
  %896 = vmatmul.bf16.gmra.mxu0 %v772
  %v897 = vpop.f32.mrf.mxu0
  %v898 = vadd.f32 %v470, %v897
  %v899 = vpop.f32.mrf.mxu0
  %v900 = vadd.f32 %v472, %v899
  %901 = vmatmul.bf16.gmra.mxu0 %v775
  %v902 = vpop.f32.mrf.mxu0
  %v903 = vadd.f32 %v475, %v902
  %v904 = vpop.f32.mrf.mxu0
  %v905 = vadd.f32 %v477, %v904
  %906 = vmatmul.bf16.gmra.mxu0 %v778
  %v907 = vpop.f32.mrf.mxu0
  %v908 = vadd.f32 %v480, %v907
  %v909 = vpop.f32.mrf.mxu0
  %v910 = vadd.f32 %v482, %v909
  %911 = vmatmul.bf16.gmra.mxu0 %v781
  %v912 = vpop.f32.mrf.mxu0
  %v913 = vadd.f32 %v485, %v912
  %v914 = vpop.f32.mrf.mxu0
  %v915 = vadd.f32 %v487, %v914
  %916 = vmatmul.bf16.gmra.mxu0 %v784
  %v917 = vpop.f32.mrf.mxu0
  %v918 = vadd.f32 %v490, %v917
  %v919 = vpop.f32.mrf.mxu0
  %v920 = vadd.f32 %v492, %v919
  %921 = vmatmul.bf16.gmra.mxu0 %v787
  %v922 = vpop.f32.mrf.mxu0
  %v923 = vadd.f32 %v495, %v922
  %v924 = vpop.f32.mrf.mxu0
  %v925 = vadd.f32 %v497, %v924
  %926 = vmatmul.bf16.gmra.mxu0 %v790
  %v927 = vpop.f32.mrf.mxu0
  %v928 = vadd.f32 %v500, %v927
  %v929 = vpop.f32.mrf.mxu0
  %v930 = vadd.f32 %v502, %v929
  %931 = vmatmul.bf16.gmra.mxu0 %v793
  %v932 = vpop.f32.mrf.mxu0
  %v933 = vadd.f32 %v505, %v932
  %v934 = vpop.f32.mrf.mxu0
  %v935 = vadd.f32 %v507, %v934
  %936 = vmatmul.bf16.gmra.mxu0 %v796
  %v937 = vpop.f32.mrf.mxu0
  %v938 = vadd.f32 %v510, %v937
  %v939 = vpop.f32.mrf.mxu0
  %v940 = vadd.f32 %v512, %v939
  %941 = vmatmul.bf16.gmra.mxu0 %v799
  %v942 = vpop.f32.mrf.mxu0
  %v943 = vadd.f32 %v515, %v942
  %v944 = vpop.f32.mrf.mxu0
  %v945 = vadd.f32 %v517, %v944
  %946 = vmatmul.bf16.gmra.mxu0 %v802
  %v947 = vpop.f32.mrf.mxu0
  %v948 = vadd.f32 %v520, %v947
  %v949 = vpop.f32.mrf.mxu0
  %v950 = vadd.f32 %v522, %v949
  %951 = vmatmul.bf16.gmra.mxu0 %v805
  %v952 = vpop.f32.mrf.mxu0
  %v953 = vadd.f32 %v525, %v952
  %v954 = vpop.f32.mrf.mxu0
  %v955 = vadd.f32 %v527, %v954
  %956 = vmatmul.bf16.gmra.mxu0 %v808
  %v957 = vpop.f32.mrf.mxu0
  %v958 = vadd.f32 %v530, %v957
  %v959 = vpop.f32.mrf.mxu0
  %v960 = vadd.f32 %v532, %v959
  %961 = vmatmul.bf16.gmra.mxu0 %v811
  %v962 = vpop.f32.mrf.mxu0
  %v963 = vadd.f32 %v535, %v962
  %v964 = vpop.f32.mrf.mxu0
  %v965 = vadd.f32 %v537, %v964
  %966 = vmatmul.bf16.gmra.mxu0 %v814
  %v967 = vpop.f32.mrf.mxu0
  %v968 = vadd.f32 %v540, %v967
  %v969 = vpop.f32.mrf.mxu0
  %v970 = vadd.f32 %v542, %v969
  %971 = vmatmul.bf16.gmra.mxu0 %v817
  %v972 = vpop.f32.mrf.mxu0
  %v973 = vadd.f32 %v545, %v972
  %v974 = vpop.f32.mrf.mxu0
  %v975 = vadd.f32 %v547, %v974
  %976 = vmatmul.bf16.gmra.mxu0 %v820
  %v977 = vpop.f32.mrf.mxu0
  %v978 = vadd.f32 %v550, %v977
  %v979 = vpop.f32.mrf.mxu0
  %v980 = vadd.f32 %v552, %v979
  %981 = vmatmul.bf16.gmra.mxu0 %v823
  %v982 = vpop.f32.mrf.mxu0
  %v983 = vadd.f32 %v555, %v982
  %v984 = vpop.f32.mrf.mxu0
  %v985 = vadd.f32 %v557, %v984
  %986 = vmatmul.bf16.gmra.mxu0 %v826
  %v987 = vpop.f32.mrf.mxu0
  %v988 = vadd.f32 %v560, %v987
  %v989 = vpop.f32.mrf.mxu0
  %v990 = vadd.f32 %v562, %v989
  %991 = vmatmul.bf16.gmra.mxu0 %v829
  %v992 = vpop.f32.mrf.mxu0
  %v993 = vadd.f32 %v565, %v992
  %v994 = vpop.f32.mrf.mxu0
  %v995 = vadd.f32 %v567, %v994
  %996 = vmatmul.bf16.gmra.mxu0 %v832
  %v997 = vpop.f32.mrf.mxu0
  %v998 = vadd.f32 %v570, %v997
  %v999 = vpop.f32.mrf.mxu0
  %v1000 = vadd.f32 %v572, %v999
  %1001 = vmatmul.bf16.gmra.mxu0 %v835
  %v1002 = vpop.f32.mrf.mxu0
  %v1003 = vadd.f32 %v575, %v1002
  %v1004 = vpop.f32.mrf.mxu0
  %v1005 = vadd.f32 %v577, %v1004
  %1006 = vmatmul.bf16.gmra.mxu0 %v838
  %v1007 = vpop.f32.mrf.mxu0
  %v1008 = vadd.f32 %v580, %v1007
  %v1009 = vpop.f32.mrf.mxu0
  %v1010 = vadd.f32 %v582, %v1009
  %1011 = vdwg.mxu0
  %v1012 = vld [vmem:[%s4] sm:$0x1]
  %v1014 = vperm.slane %v1012, 0
  %v1016 = vmul.f32 %v853, %v1014
  %v1017 = vmul.f32 %v855, %v1014
  %v1018 = vmul.f32 %v858, %v1014
  %v1019 = vmul.f32 %v860, %v1014
  %v1020 = vmul.f32 %v863, %v1014
  %v1021 = vmul.f32 %v865, %v1014
  %v1022 = vmul.f32 %v868, %v1014
  %v1023 = vmul.f32 %v870, %v1014
  %v1024 = vmul.f32 %v873, %v1014
  %v1025 = vmul.f32 %v875, %v1014
  %v1026 = vmul.f32 %v878, %v1014
  %v1027 = vmul.f32 %v880, %v1014
  %v1028 = vmul.f32 %v883, %v1014
  %v1029 = vmul.f32 %v885, %v1014
  %v1030 = vmul.f32 %v888, %v1014
  %v1031 = vmul.f32 %v890, %v1014
  %v1032 = vmul.f32 %v893, %v1014
  %v1033 = vmul.f32 %v895, %v1014
  %v1034 = vmul.f32 %v898, %v1014
  %v1035 = vmul.f32 %v900, %v1014
  %v1036 = vmul.f32 %v903, %v1014
  %v1037 = vmul.f32 %v905, %v1014
  %v1038 = vmul.f32 %v908, %v1014
  %v1039 = vmul.f32 %v910, %v1014
  %v1040 = vmul.f32 %v913, %v1014
  %v1041 = vmul.f32 %v915, %v1014
  %v1042 = vmul.f32 %v918, %v1014
  %v1043 = vmul.f32 %v920, %v1014
  %v1044 = vmul.f32 %v923, %v1014
  %v1045 = vmul.f32 %v925, %v1014
  %v1046 = vmul.f32 %v928, %v1014
  %v1047 = vmul.f32 %v930, %v1014
  %v1048 = vmul.f32 %v933, %v1014
  %v1049 = vmul.f32 %v935, %v1014
  %v1050 = vmul.f32 %v938, %v1014
  %v1051 = vmul.f32 %v940, %v1014
  %v1052 = vmul.f32 %v943, %v1014
  %v1053 = vmul.f32 %v945, %v1014
  %v1054 = vmul.f32 %v948, %v1014
  %v1055 = vmul.f32 %v950, %v1014
  %v1056 = vmul.f32 %v953, %v1014
  %v1057 = vmul.f32 %v955, %v1014
  %v1058 = vmul.f32 %v958, %v1014
  %v1059 = vmul.f32 %v960, %v1014
  %v1060 = vmul.f32 %v963, %v1014
  %v1061 = vmul.f32 %v965, %v1014
  %v1062 = vmul.f32 %v968, %v1014
  %v1063 = vmul.f32 %v970, %v1014
  %v1064 = vmul.f32 %v973, %v1014
  %v1065 = vmul.f32 %v975, %v1014
  %v1066 = vmul.f32 %v978, %v1014
  %v1067 = vmul.f32 %v980, %v1014
  %v1068 = vmul.f32 %v983, %v1014
  %v1069 = vmul.f32 %v985, %v1014
  %v1070 = vmul.f32 %v988, %v1014
  %v1071 = vmul.f32 %v990, %v1014
  %v1072 = vmul.f32 %v993, %v1014
  %v1073 = vmul.f32 %v995, %v1014
  %v1074 = vmul.f32 %v998, %v1014
  %v1075 = vmul.f32 %v1000, %v1014
  %v1076 = vmul.f32 %v1003, %v1014
  %v1077 = vmul.f32 %v1005, %v1014
  %v1078 = vmul.f32 %v1008, %v1014
  %v1079 = vmul.f32 %v1010, %v1014
  %v1080 = vld [vmem:[%s5] sm:$0x1]
  %v1082 = vperm.slane %v1080, 0
  %v1084 = vadd.f32 %v1016, %v1082
  %v1085 = vadd.f32 %v1017, %v1082
  %v1086 = vadd.f32 %v1018, %v1082
  %v1087 = vadd.f32 %v1019, %v1082
  %v1088 = vadd.f32 %v1020, %v1082
  %v1089 = vadd.f32 %v1021, %v1082
  %v1090 = vadd.f32 %v1022, %v1082
  %v1091 = vadd.f32 %v1023, %v1082
  %v1092 = vadd.f32 %v1024, %v1082
  %v1093 = vadd.f32 %v1025, %v1082
  %v1094 = vadd.f32 %v1026, %v1082
  %v1095 = vadd.f32 %v1027, %v1082
  %v1096 = vadd.f32 %v1028, %v1082
  %v1097 = vadd.f32 %v1029, %v1082
  %v1098 = vadd.f32 %v1030, %v1082
  %v1099 = vadd.f32 %v1031, %v1082
  %v1100 = vadd.f32 %v1032, %v1082
  %v1101 = vadd.f32 %v1033, %v1082
  %v1102 = vadd.f32 %v1034, %v1082
  %v1103 = vadd.f32 %v1035, %v1082
  %v1104 = vadd.f32 %v1036, %v1082
  %v1105 = vadd.f32 %v1037, %v1082
  %v1106 = vadd.f32 %v1038, %v1082
  %v1107 = vadd.f32 %v1039, %v1082
  %v1108 = vadd.f32 %v1040, %v1082
  %v1109 = vadd.f32 %v1041, %v1082
  %v1110 = vadd.f32 %v1042, %v1082
  %v1111 = vadd.f32 %v1043, %v1082
  %v1112 = vadd.f32 %v1044, %v1082
  %v1113 = vadd.f32 %v1045, %v1082
  %v1114 = vadd.f32 %v1046, %v1082
  %v1115 = vadd.f32 %v1047, %v1082
  %v1116 = vadd.f32 %v1048, %v1082
  %v1117 = vadd.f32 %v1049, %v1082
  %v1118 = vadd.f32 %v1050, %v1082
  %v1119 = vadd.f32 %v1051, %v1082
  %v1120 = vadd.f32 %v1052, %v1082
  %v1121 = vadd.f32 %v1053, %v1082
  %v1122 = vadd.f32 %v1054, %v1082
  %v1123 = vadd.f32 %v1055, %v1082
  %v1124 = vadd.f32 %v1056, %v1082
  %v1125 = vadd.f32 %v1057, %v1082
  %v1126 = vadd.f32 %v1058, %v1082
  %v1127 = vadd.f32 %v1059, %v1082
  %v1128 = vadd.f32 %v1060, %v1082
  %v1129 = vadd.f32 %v1061, %v1082
  %v1130 = vadd.f32 %v1062, %v1082
  %v1131 = vadd.f32 %v1063, %v1082
  %v1132 = vadd.f32 %v1064, %v1082
  %v1133 = vadd.f32 %v1065, %v1082
  %v1134 = vadd.f32 %v1066, %v1082
  %v1135 = vadd.f32 %v1067, %v1082
  %v1136 = vadd.f32 %v1068, %v1082
  %v1137 = vadd.f32 %v1069, %v1082
  %v1138 = vadd.f32 %v1070, %v1082
  %v1139 = vadd.f32 %v1071, %v1082
  %v1140 = vadd.f32 %v1072, %v1082
  %v1141 = vadd.f32 %v1073, %v1082
  %v1142 = vadd.f32 %v1074, %v1082
  %v1143 = vadd.f32 %v1075, %v1082
  %v1144 = vadd.f32 %v1076, %v1082
  %v1145 = vadd.f32 %v1077, %v1082
  %v1146 = vadd.f32 %v1078, %v1082
  %v1147 = vadd.f32 %v1079, %v1082
  %vm1148 = vcmp.gt.f32.partialorder %v1084, 0.0
  %vm1149 = vcmp.gt.f32.partialorder %v1085, 0.0
  %vm1150 = vcmp.gt.f32.partialorder %v1086, 0.0
  %vm1151 = vcmp.gt.f32.partialorder %v1087, 0.0
  %vm1152 = vcmp.gt.f32.partialorder %v1088, 0.0
  %vm1153 = vcmp.gt.f32.partialorder %v1089, 0.0
  %vm1154 = vcmp.gt.f32.partialorder %v1090, 0.0
  %vm1155 = vcmp.gt.f32.partialorder %v1091, 0.0
  %vm1156 = vcmp.gt.f32.partialorder %v1092, 0.0
  %vm1157 = vcmp.gt.f32.partialorder %v1093, 0.0
  %vm1158 = vcmp.gt.f32.partialorder %v1094, 0.0
  %vm1159 = vcmp.gt.f32.partialorder %v1095, 0.0
  %vm1160 = vcmp.gt.f32.partialorder %v1096, 0.0
  %vm1161 = vcmp.gt.f32.partialorder %v1097, 0.0
  %vm1162 = vcmp.gt.f32.partialorder %v1098, 0.0
  %vm1163 = vcmp.gt.f32.partialorder %v1099, 0.0
  %vm1164 = vcmp.gt.f32.partialorder %v1100, 0.0
  %vm1165 = vcmp.gt.f32.partialorder %v1101, 0.0
  %vm1166 = vcmp.gt.f32.partialorder %v1102, 0.0
  %vm1167 = vcmp.gt.f32.partialorder %v1103, 0.0
  %vm1168 = vcmp.gt.f32.partialorder %v1104, 0.0
  %vm1169 = vcmp.gt.f32.partialorder %v1105, 0.0
  %vm1170 = vcmp.gt.f32.partialorder %v1106, 0.0
  %vm1171 = vcmp.gt.f32.partialorder %v1107, 0.0
  %vm1172 = vcmp.gt.f32.partialorder %v1108, 0.0
  %vm1173 = vcmp.gt.f32.partialorder %v1109, 0.0
  %vm1174 = vcmp.gt.f32.partialorder %v1110, 0.0
  %vm1175 = vcmp.gt.f32.partialorder %v1111, 0.0
  %vm1176 = vcmp.gt.f32.partialorder %v1112, 0.0
  %vm1177 = vcmp.gt.f32.partialorder %v1113, 0.0
  %vm1178 = vcmp.gt.f32.partialorder %v1114, 0.0
  %vm1179 = vcmp.gt.f32.partialorder %v1115, 0.0
  %vm1180 = vcmp.gt.f32.partialorder %v1116, 0.0
  %vm1181 = vcmp.gt.f32.partialorder %v1117, 0.0
  %vm1182 = vcmp.gt.f32.partialorder %v1118, 0.0
  %vm1183 = vcmp.gt.f32.partialorder %v1119, 0.0
  %vm1184 = vcmp.gt.f32.partialorder %v1120, 0.0
  %vm1185 = vcmp.gt.f32.partialorder %v1121, 0.0
  %vm1186 = vcmp.gt.f32.partialorder %v1122, 0.0
  %vm1187 = vcmp.gt.f32.partialorder %v1123, 0.0
  %vm1188 = vcmp.gt.f32.partialorder %v1124, 0.0
  %vm1189 = vcmp.gt.f32.partialorder %v1125, 0.0
  %vm1190 = vcmp.gt.f32.partialorder %v1126, 0.0
  %vm1191 = vcmp.gt.f32.partialorder %v1127, 0.0
  %vm1192 = vcmp.gt.f32.partialorder %v1128, 0.0
  %vm1193 = vcmp.gt.f32.partialorder %v1129, 0.0
  %vm1194 = vcmp.gt.f32.partialorder %v1130, 0.0
  %vm1195 = vcmp.gt.f32.partialorder %v1131, 0.0
  %vm1196 = vcmp.gt.f32.partialorder %v1132, 0.0
  %vm1197 = vcmp.gt.f32.partialorder %v1133, 0.0
  %vm1198 = vcmp.gt.f32.partialorder %v1134, 0.0
  %vm1199 = vcmp.gt.f32.partialorder %v1135, 0.0
  %vm1200 = vcmp.gt.f32.partialorder %v1136, 0.0
  %vm1201 = vcmp.gt.f32.partialorder %v1137, 0.0
  %vm1202 = vcmp.gt.f32.partialorder %v1138, 0.0
  %vm1203 = vcmp.gt.f32.partialorder %v1139, 0.0
  %vm1204 = vcmp.gt.f32.partialorder %v1140, 0.0
  %vm1205 = vcmp.gt.f32.partialorder %v1141, 0.0
  %vm1206 = vcmp.gt.f32.partialorder %v1142, 0.0
  %vm1207 = vcmp.gt.f32.partialorder %v1143, 0.0
  %vm1208 = vcmp.gt.f32.partialorder %v1144, 0.0
  %vm1209 = vcmp.gt.f32.partialorder %v1145, 0.0
  %vm1210 = vcmp.gt.f32.partialorder %v1146, 0.0
  %vm1211 = vcmp.gt.f32.partialorder %v1147, 0.0
  %v1212 = vmul.f32 %v1084, 0.1
  %v1213 = vmul.f32 %v1085, 0.1
  %v1214 = vmul.f32 %v1086, 0.1
  %v1215 = vmul.f32 %v1087, 0.1
  %v1216 = vmul.f32 %v1088, 0.1
  %v1217 = vmul.f32 %v1089, 0.1
  %v1218 = vmul.f32 %v1090, 0.1
  %v1219 = vmul.f32 %v1091, 0.1
  %v1220 = vmul.f32 %v1092, 0.1
  %v1221 = vmul.f32 %v1093, 0.1
  %v1222 = vmul.f32 %v1094, 0.1
  %v1223 = vmul.f32 %v1095, 0.1
  %v1224 = vmul.f32 %v1096, 0.1
  %v1225 = vmul.f32 %v1097, 0.1
  %v1226 = vmul.f32 %v1098, 0.1
  %v1227 = vmul.f32 %v1099, 0.1
  %v1228 = vmul.f32 %v1100, 0.1
  %v1229 = vmul.f32 %v1101, 0.1
  %v1230 = vmul.f32 %v1102, 0.1
  %v1231 = vmul.f32 %v1103, 0.1
  %v1232 = vmul.f32 %v1104, 0.1
  %v1233 = vmul.f32 %v1105, 0.1
  %v1234 = vmul.f32 %v1106, 0.1
  %v1235 = vmul.f32 %v1107, 0.1
  %v1236 = vmul.f32 %v1108, 0.1
  %v1237 = vmul.f32 %v1109, 0.1
  %v1238 = vmul.f32 %v1110, 0.1
  %v1239 = vmul.f32 %v1111, 0.1
  %v1240 = vmul.f32 %v1112, 0.1
  %v1241 = vmul.f32 %v1113, 0.1
  %v1242 = vmul.f32 %v1114, 0.1
  %v1243 = vmul.f32 %v1115, 0.1
  %v1244 = vmul.f32 %v1116, 0.1
  %v1245 = vmul.f32 %v1117, 0.1
  %v1246 = vmul.f32 %v1118, 0.1
  %v1247 = vmul.f32 %v1119, 0.1
  %v1248 = vmul.f32 %v1120, 0.1
  %v1249 = vmul.f32 %v1121, 0.1
  %v1250 = vmul.f32 %v1122, 0.1
  %v1251 = vmul.f32 %v1123, 0.1
  %v1252 = vmul.f32 %v1124, 0.1
  %v1253 = vmul.f32 %v1125, 0.1
  %v1254 = vmul.f32 %v1126, 0.1
  %v1255 = vmul.f32 %v1127, 0.1
  %v1256 = vmul.f32 %v1128, 0.1
  %v1257 = vmul.f32 %v1129, 0.1
  %v1258 = vmul.f32 %v1130, 0.1
  %v1259 = vmul.f32 %v1131, 0.1
  %v1260 = vmul.f32 %v1132, 0.1
  %v1261 = vmul.f32 %v1133, 0.1
  %v1262 = vmul.f32 %v1134, 0.1
  %v1263 = vmul.f32 %v1135, 0.1
  %v1264 = vmul.f32 %v1136, 0.1
  %v1265 = vmul.f32 %v1137, 0.1
  %v1266 = vmul.f32 %v1138, 0.1
  %v1267 = vmul.f32 %v1139, 0.1
  %v1268 = vmul.f32 %v1140, 0.1
  %v1269 = vmul.f32 %v1141, 0.1
  %v1270 = vmul.f32 %v1142, 0.1
  %v1271 = vmul.f32 %v1143, 0.1
  %v1272 = vmul.f32 %v1144, 0.1
  %v1273 = vmul.f32 %v1145, 0.1
  %v1274 = vmul.f32 %v1146, 0.1
  %v1275 = vmul.f32 %v1147, 0.1
  %v1276 = vsel %vm1148, %v1084, %v1212
  %v1277 = vsel %vm1149, %v1085, %v1213
  %v1278 = vsel %vm1150, %v1086, %v1214
  %v1279 = vsel %vm1151, %v1087, %v1215
  %v1280 = vsel %vm1152, %v1088, %v1216
  %v1281 = vsel %vm1153, %v1089, %v1217
  %v1282 = vsel %vm1154, %v1090, %v1218
  %v1283 = vsel %vm1155, %v1091, %v1219
  %v1284 = vsel %vm1156, %v1092, %v1220
  %v1285 = vsel %vm1157, %v1093, %v1221
  %v1286 = vsel %vm1158, %v1094, %v1222
  %v1287 = vsel %vm1159, %v1095, %v1223
  %v1288 = vsel %vm1160, %v1096, %v1224
  %v1289 = vsel %vm1161, %v1097, %v1225
  %v1290 = vsel %vm1162, %v1098, %v1226
  %v1291 = vsel %vm1163, %v1099, %v1227
  %v1292 = vsel %vm1164, %v1100, %v1228
  %v1293 = vsel %vm1165, %v1101, %v1229
  %v1294 = vsel %vm1166, %v1102, %v1230
  %v1295 = vsel %vm1167, %v1103, %v1231
  %v1296 = vsel %vm1168, %v1104, %v1232
  %v1297 = vsel %vm1169, %v1105, %v1233
  %v1298 = vsel %vm1170, %v1106, %v1234
  %v1299 = vsel %vm1171, %v1107, %v1235
  %v1300 = vsel %vm1172, %v1108, %v1236
  %v1301 = vsel %vm1173, %v1109, %v1237
  %v1302 = vsel %vm1174, %v1110, %v1238
  %v1303 = vsel %vm1175, %v1111, %v1239
  %v1304 = vsel %vm1176, %v1112, %v1240
  %v1305 = vsel %vm1177, %v1113, %v1241
  %v1306 = vsel %vm1178, %v1114, %v1242
  %v1307 = vsel %vm1179, %v1115, %v1243
  %v1308 = vsel %vm1180, %v1116, %v1244
  %v1309 = vsel %vm1181, %v1117, %v1245
  %v1310 = vsel %vm1182, %v1118, %v1246
  %v1311 = vsel %vm1183, %v1119, %v1247
  %v1312 = vsel %vm1184, %v1120, %v1248
  %v1313 = vsel %vm1185, %v1121, %v1249
  %v1314 = vsel %vm1186, %v1122, %v1250
  %v1315 = vsel %vm1187, %v1123, %v1251
  %v1316 = vsel %vm1188, %v1124, %v1252
  %v1317 = vsel %vm1189, %v1125, %v1253
  %v1318 = vsel %vm1190, %v1126, %v1254
  %v1319 = vsel %vm1191, %v1127, %v1255
  %v1320 = vsel %vm1192, %v1128, %v1256
  %v1321 = vsel %vm1193, %v1129, %v1257
  %v1322 = vsel %vm1194, %v1130, %v1258
  %v1323 = vsel %vm1195, %v1131, %v1259
  %v1324 = vsel %vm1196, %v1132, %v1260
  %v1325 = vsel %vm1197, %v1133, %v1261
  %v1326 = vsel %vm1198, %v1134, %v1262
  %v1327 = vsel %vm1199, %v1135, %v1263
  %v1328 = vsel %vm1200, %v1136, %v1264
  %v1329 = vsel %vm1201, %v1137, %v1265
  %v1330 = vsel %vm1202, %v1138, %v1266
  %v1331 = vsel %vm1203, %v1139, %v1267
  %v1332 = vsel %vm1204, %v1140, %v1268
  %v1333 = vsel %vm1205, %v1141, %v1269
  %v1334 = vsel %vm1206, %v1142, %v1270
  %v1335 = vsel %vm1207, %v1143, %v1271
  %v1336 = vsel %vm1208, %v1144, %v1272
  %v1337 = vsel %vm1209, %v1145, %v1273
  %v1338 = vsel %vm1210, %v1146, %v1274
  %v1339 = vsel %vm1211, %v1147, %v1275
  %vm1340 = vcmask 64512
  %1341 = vst.msk [vmem:[%s6] sm:$0xff] %vm1340, %v1276
  %1342 = vst.msk [vmem:[%s6 + $0x8] sm:$0xff] %vm1340, %v1277
  %1343 = vst.msk [vmem:[%s6 + $0x10] sm:$0xff] %vm1340, %v1278
  %1344 = vst.msk [vmem:[%s6 + $0x18] sm:$0xff] %vm1340, %v1279
  %1345 = vst.msk [vmem:[%s6 + $0x20] sm:$0xff] %vm1340, %v1280
  %1346 = vst.msk [vmem:[%s6 + $0x28] sm:$0xff] %vm1340, %v1281
  %1347 = vst.msk [vmem:[%s6 + $0x30] sm:$0xff] %vm1340, %v1282
  %1348 = vst.msk [vmem:[%s6 + $0x38] sm:$0xff] %vm1340, %v1283
  %1349 = vst.msk [vmem:[%s6 + $0x40] sm:$0xff] %vm1340, %v1284
  %1350 = vst.msk [vmem:[%s6 + $0x48] sm:$0xff] %vm1340, %v1285
  %1351 = vst.msk [vmem:[%s6 + $0x50] sm:$0xff] %vm1340, %v1286
  %1352 = vst.msk [vmem:[%s6 + $0x58] sm:$0xff] %vm1340, %v1287
  %1353 = vst.msk [vmem:[%s6 + $0x60] sm:$0xff] %vm1340, %v1288
  %1354 = vst.msk [vmem:[%s6 + $0x68] sm:$0xff] %vm1340, %v1289
  %1355 = vst.msk [vmem:[%s6 + $0x70] sm:$0xff] %vm1340, %v1290
  %1356 = vst.msk [vmem:[%s6 + $0x78] sm:$0xff] %vm1340, %v1291
  %1357 = vst.msk [vmem:[%s6 + $0x80] sm:$0xff] %vm1340, %v1292
  %1358 = vst.msk [vmem:[%s6 + $0x88] sm:$0xff] %vm1340, %v1293
  %1359 = vst.msk [vmem:[%s6 + $0x90] sm:$0xff] %vm1340, %v1294
  %1360 = vst.msk [vmem:[%s6 + $0x98] sm:$0xff] %vm1340, %v1295
  %1361 = vst.msk [vmem:[%s6 + $0xa0] sm:$0xff] %vm1340, %v1296
  %1362 = vst.msk [vmem:[%s6 + $0xa8] sm:$0xff] %vm1340, %v1297
  %1363 = vst.msk [vmem:[%s6 + $0xb0] sm:$0xff] %vm1340, %v1298
  %1364 = vst.msk [vmem:[%s6 + $0xb8] sm:$0xff] %vm1340, %v1299
  %1365 = vst.msk [vmem:[%s6 + $0xc0] sm:$0xff] %vm1340, %v1300
  %1366 = vst.msk [vmem:[%s6 + $0xc8] sm:$0xff] %vm1340, %v1301
  %1367 = vst.msk [vmem:[%s6 + $0xd0] sm:$0xff] %vm1340, %v1302
  %1368 = vst.msk [vmem:[%s6 + $0xd8] sm:$0xff] %vm1340, %v1303
  %1369 = vst.msk [vmem:[%s6 + $0xe0] sm:$0xff] %vm1340, %v1304
  %1370 = vst.msk [vmem:[%s6 + $0xe8] sm:$0xff] %vm1340, %v1305
  %1371 = vst.msk [vmem:[%s6 + $0xf0] sm:$0xff] %vm1340, %v1306
  %1372 = vst.msk [vmem:[%s6 + $0xf8] sm:$0xff] %vm1340, %v1307
  %1373 = vst.msk [vmem:[%s6 + $0x100] sm:$0xff] %vm1340, %v1308
  %1374 = vst.msk [vmem:[%s6 + $0x108] sm:$0xff] %vm1340, %v1309
  %1375 = vst.msk [vmem:[%s6 + $0x110] sm:$0xff] %vm1340, %v1310
  %1376 = vst.msk [vmem:[%s6 + $0x118] sm:$0xff] %vm1340, %v1311
  %1377 = vst.msk [vmem:[%s6 + $0x120] sm:$0xff] %vm1340, %v1312
  %1378 = vst.msk [vmem:[%s6 + $0x128] sm:$0xff] %vm1340, %v1313
  %1379 = vst.msk [vmem:[%s6 + $0x130] sm:$0xff] %vm1340, %v1314
  %1380 = vst.msk [vmem:[%s6 + $0x138] sm:$0xff] %vm1340, %v1315
  %1381 = vst.msk [vmem:[%s6 + $0x140] sm:$0xff] %vm1340, %v1316
  %1382 = vst.msk [vmem:[%s6 + $0x148] sm:$0xff] %vm1340, %v1317
  %1383 = vst.msk [vmem:[%s6 + $0x150] sm:$0xff] %vm1340, %v1318
  %1384 = vst.msk [vmem:[%s6 + $0x158] sm:$0xff] %vm1340, %v1319
  %1385 = vst.msk [vmem:[%s6 + $0x160] sm:$0xff] %vm1340, %v1320
  %1386 = vst.msk [vmem:[%s6 + $0x168] sm:$0xff] %vm1340, %v1321
  %1387 = vst.msk [vmem:[%s6 + $0x170] sm:$0xff] %vm1340, %v1322
  %1388 = vst.msk [vmem:[%s6 + $0x178] sm:$0xff] %vm1340, %v1323
  %1389 = vst.msk [vmem:[%s6 + $0x180] sm:$0xff] %vm1340, %v1324
  %1390 = vst.msk [vmem:[%s6 + $0x188] sm:$0xff] %vm1340, %v1325
  %1391 = vst.msk [vmem:[%s6 + $0x190] sm:$0xff] %vm1340, %v1326
  %1392 = vst.msk [vmem:[%s6 + $0x198] sm:$0xff] %vm1340, %v1327
  %1393 = vst.msk [vmem:[%s6 + $0x1a0] sm:$0xff] %vm1340, %v1328
  %1394 = vst.msk [vmem:[%s6 + $0x1a8] sm:$0xff] %vm1340, %v1329
  %1395 = vst.msk [vmem:[%s6 + $0x1b0] sm:$0xff] %vm1340, %v1330
  %1396 = vst.msk [vmem:[%s6 + $0x1b8] sm:$0xff] %vm1340, %v1331
  %1397 = vst.msk [vmem:[%s6 + $0x1c0] sm:$0xff] %vm1340, %v1332
  %1398 = vst.msk [vmem:[%s6 + $0x1c8] sm:$0xff] %vm1340, %v1333
  %1399 = vst.msk [vmem:[%s6 + $0x1d0] sm:$0xff] %vm1340, %v1334
  %1400 = vst.msk [vmem:[%s6 + $0x1d8] sm:$0xff] %vm1340, %v1335
  %1401 = vst.msk [vmem:[%s6 + $0x1e0] sm:$0xff] %vm1340, %v1336
  %1402 = vst.msk [vmem:[%s6 + $0x1e8] sm:$0xff] %vm1340, %v1337
  %1403 = vst.msk [vmem:[%s6 + $0x1f0] sm:$0xff] %vm1340, %v1338
  %1404 = vst.msk [vmem:[%s6 + $0x1f8] sm:$0xff] %vm1340, %v1339
  // Predicated region
  $region26: #{csp_stage_pallas.7} parent=0 // pred_check
    _
  $region27: #{csp_stage_pallas.7} parent=0 // pred_check_branch
    %1406 = sbr.rel (0) target = $region29
  $region28: #{csp_stage_pallas.7} parent=0 // pred_region
    _
  $region29: #{csp_stage_pallas.7} parent=0 // pred_fallthru
    _
  // Predicated region
  $region30: #{csp_stage_pallas.7} parent=0 // pred_check
    _
  $region31: #{csp_stage_pallas.7} parent=0 // pred_check_branch
    %1408 = sbr.rel (0) target = $region33
  $region32: #{csp_stage_pallas.7} parent=0 // pred_region
    _
  $region33: #{csp_stage_pallas.7} parent=0 // pred_fallthru
    _

</llo_original>
